<compile_context>
chip_gen: v7x
topology: tpu7x:2x2x1
jax: 0.10.0
libtpu: 0.0.40
codegen_flags: <defaults>
</compile_context>

<pallas_src>
import jax
import jax.numpy as jnp
from jax.experimental import pallas as pl
from jax.experimental.pallas import tpu as pltpu

IN_FEATURES = 3 * 32 * 32   # 3072
HIDDEN = 512
NUM_CLASSES = 10
OUT_PAD = 128               # lane-dense padded output width


def _round_up(v, m):
    return (v + m - 1) // m * m


def _choose_tm(batch):
    """Batch-tile size: >=2 tiles when possible (v7x has 2 TCs), cap at 256."""
    if batch <= 16:
        return _round_up(batch, 16)
    half = (batch + 1) // 2
    return min(256, _round_up(half, 16))


def _mlp_kernel(x_ref, w1_ref, b1_ref, w2_ref, b2_ref, o_ref):
    # Cast the f32 input tile to bf16 in-kernel (rides in spare VALU slots).
    x = x_ref[...].astype(jnp.bfloat16)

    # fc1: (TM, 3072) @ (3072, 512) on the MXU, f32 accumulation, bias, ReLU.
    h = jnp.dot(x, w1_ref[...], preferred_element_type=jnp.float32)
    h = jnp.maximum(h + b1_ref[...], 0.0)

    # fc2 (padded to 128 output lanes): (TM, 512) @ (512, 128), bias, store.
    out = jnp.dot(h.astype(jnp.bfloat16), w2_ref[...],
                  preferred_element_type=jnp.float32)
    o_ref[...] = (out + b2_ref[...]).astype(o_ref.dtype)


def prepare_params(w1, b1, w2, b2):
    """One-time weight preprocessing (do NOT repeat per forward call).

    Weights are stored (in, out) so the kernel computes x @ W directly; fc2 is
    padded to 128 output columns for lane-dense stores.
    """
    w1_b = w1.astype(jnp.bfloat16)                                  # (3072, 512)
    b1_2d = b1.reshape(1, HIDDEN).astype(jnp.float32)               # (1, 512)
    w2_pad = jnp.zeros((HIDDEN, OUT_PAD), jnp.bfloat16).at[:, :NUM_CLASSES].set(
        w2.astype(jnp.bfloat16))                                    # (512, 128)
    b2_pad = jnp.zeros((1, OUT_PAD), jnp.float32).at[:, :NUM_CLASSES].set(
        b2.reshape(1, NUM_CLASSES).astype(jnp.float32))             # (1, 128)
    return w1_b, b1_2d, w2_pad, b2_pad


def cnn_c_forward(x, w1_b, b1_2d, w2_pad, b2_pad):
    """x: (B, 3, 32, 32) float32. Prepared params from prepare_params().

    Returns logits (B, 10) float32.
    """
    B = x.shape[0]

    # Flatten exactly like torch .view(-1, 3*32*32); keep f32 (cast in-kernel).
    x_flat = x.reshape(B, IN_FEATURES)

    TM = _choose_tm(B)
    B_pad = _round_up(B, TM)
    if B_pad != B:
        x_flat = jnp.pad(x_flat, ((0, B_pad - B), (0, 0)))

    grid = (B_pad // TM,)

    grid_spec = pltpu.PrefetchScalarGridSpec(
        num_scalar_prefetch=0,
        grid=grid,
        in_specs=[
            pl.BlockSpec((TM, IN_FEATURES), lambda m: (m, 0)),       # x tile (f32)
            # Constant-index blocks: W1 stays resident in VMEM across the grid.
            # (Single-buffering these via pipeline_mode=pl.Buffered(1) would save
            #  a little more VMEM on v5e but is not needed to fit.)
            pl.BlockSpec((IN_FEATURES, HIDDEN), lambda m: (0, 0)),   # w1 (bf16)
            pl.BlockSpec((1, HIDDEN), lambda m: (0, 0)),             # b1
            pl.BlockSpec((HIDDEN, OUT_PAD), lambda m: (0, 0)),       # w2 (padded)
            pl.BlockSpec((1, OUT_PAD), lambda m: (0, 0)),            # b2 (padded)
        ],
        out_specs=pl.BlockSpec((TM, OUT_PAD), lambda m: (m, 0)),
    )

    out_pad = pl.pallas_call(
        _mlp_kernel,
        out_shape=jax.ShapeDtypeStruct((B_pad, OUT_PAD), jnp.float32),
        grid_spec=grid_spec,
        compiler_params=pltpu.CompilerParams(
            # Batch tiles are independent -> shard across TensorCores on v7x.
            dimension_semantics=("parallel",),
        ),
    )(x_flat, w1_b, b1_2d, w2_pad, b2_pad)

    # Slice away batch padding and the lane padding of the 10 logits.
    return out_pad[:B, :NUM_CLASSES]


def init_params(key):
    """Deterministic parameter init matching the nn.Linear shapes.

    PyTorch stores Linear weight as (out, in); we store the transpose (in, out)
    so the kernel can do x @ W directly.
    """
    k1, k2, k3, k4 = jax.random.split(key, 4)
    lim1 = 1.0 / jnp.sqrt(jnp.float32(IN_FEATURES))
    lim2 = 1.0 / jnp.sqrt(jnp.float32(HIDDEN))
    w1 = jax.random.uniform(k1, (IN_FEATURES, HIDDEN), jnp.float32, -lim1, lim1)
    b1 = jax.random.uniform(k2, (HIDDEN,), jnp.float32, -lim1, lim1)
    w2 = jax.random.uniform(k3, (HIDDEN, NUM_CLASSES), jnp.float32, -lim2, lim2)
    b2 = jax.random.uniform(k4, (NUM_CLASSES,), jnp.float32, -lim2, lim2)
    # TODO(synk): self.fc (32*8*8 -> num_classes) is defined in __init__ but never
    # used in forward(), so it is intentionally not instantiated here.
    return w1, b1, w2, b2


def reference_forward(x, w1, b1, w2, b2):
    """Pure-JAX reference in the same mixed precision (bf16 matmul, f32 accum)."""
    x_flat = x.reshape(x.shape[0], IN_FEATURES).astype(jnp.bfloat16)
    h = jnp.dot(x_flat, w1.astype(jnp.bfloat16),
                preferred_element_type=jnp.float32) + b1
    h = jnp.maximum(h, 0.0)
    out = jnp.dot(h.astype(jnp.bfloat16), w2.astype(jnp.bfloat16),
                  preferred_element_type=jnp.float32) + b2
    return out


if __name__ == "__main__":
    key = jax.random.PRNGKey(0)
    kx, kp = jax.random.split(key)

    B = 2
    x = jax.random.normal(kx, (B, 3, 32, 32), jnp.float32)   # NCHW, like torch
    w1, b1, w2, b2 = init_params(kp)

    # One-time weight preprocessing (hoisted out of the forward pass).
    prepared = prepare_params(w1, b1, w2, b2)

    out = cnn_c_forward(x, *prepared)
    out = jax.block_until_ready(out)

    ref = reference_forward(x, w1, b1, w2, b2)
    assert out.shape == (B, NUM_CLASSES)
    assert jnp.allclose(out, ref, atol=3e-3, rtol=3e-3), "mismatch vs reference"

    # Looser sanity check against a full-f32 reference (bf16 weight quantization).
    x_f = x.reshape(B, IN_FEATURES)
    ref_f32 = jnp.maximum(x_f @ w1 + b1, 0.0) @ w2 + b2
    assert jnp.allclose(out, ref_f32, atol=5e-2, rtol=5e-2), "mismatch vs f32 reference"

    print("KERNEL_OK")
</pallas_src>

<mosaic_0001>
module attributes {stable_mosaic.version = 11 : i64} {
  func.func @_mlp_kernel(%arg0: i32, %arg1: memref<16x3072xf32, #tpu.memory_space<vmem>>, %arg2: memref<3072x512xbf16, #tpu.memory_space<vmem>>, %arg3: memref<1x512xf32, #tpu.memory_space<vmem>>, %arg4: memref<512x128xbf16, #tpu.memory_space<vmem>>, %arg5: memref<1x128xf32, #tpu.memory_space<vmem>>, %arg6: memref<16x128xf32, #tpu.memory_space<vmem>>) attributes {dimension_semantics = [#tpu.dimension_semantics<parallel>], iteration_bounds = array<i64: 1>, scalar_prefetch = 0 : i64, scratch_operands = 0 : i64, tpu.core_type = #tpu.core_type<tc>, window_params = [{transform_indices = @transform_0, window_bounds = array<i64: 16, 3072>}, {pipeline_mode = #tpu.pipeline_mode<synchronous>, transform_indices = @transform_1, window_bounds = array<i64: 3072, 512>}, {pipeline_mode = #tpu.pipeline_mode<synchronous>, transform_indices = @transform_2, window_bounds = array<i64: 1, 512>}, {pipeline_mode = #tpu.pipeline_mode<synchronous>, transform_indices = @transform_3, window_bounds = array<i64: 512, 128>}, {pipeline_mode = #tpu.pipeline_mode<synchronous>, transform_indices = @transform_4, window_bounds = array<i64: 1, 128>}, {transform_indices = @transform_5, window_bounds = array<i64: 16, 128>}]} {
    %c0 = arith.constant 0 : index
    %c0_0 = arith.constant 0 : index
    %0 = vector.load %arg1[%c0, %c0_0] : memref<16x3072xf32, #tpu.memory_space<vmem>>, vector<16x3072xf32>
    %1 = arith.truncf %0 : vector<16x3072xf32> to vector<16x3072xbf16>
    %c0_1 = arith.constant 0 : index
    %c0_2 = arith.constant 0 : index
    %2 = vector.load %arg2[%c0_1, %c0_2] : memref<3072x512xbf16, #tpu.memory_space<vmem>>, vector<3072x512xbf16>
    %cst = arith.constant dense<0.000000e+00> : vector<16x512xf32>
    %3 = tpu.matmul %1, %2, %cst {dimension_numbers = #tpu.dot_dimension_numbers<[1], [0], [0], [1], [0, 0, 1, 1], [], []>} : vector<16x3072xbf16>, vector<3072x512xbf16>, vector<16x512xf32> -> vector<16x512xf32>
    %c0_3 = arith.constant 0 : index
    %c0_4 = arith.constant 0 : index
    %4 = vector.load %arg3[%c0_3, %c0_4] : memref<1x512xf32, #tpu.memory_space<vmem>>, vector<1x512xf32>
    %5 = vector.broadcast %4 : vector<1x512xf32> to vector<16x512xf32>
    %6 = arith.addf %3, %5 : vector<16x512xf32>
    %cst_5 = arith.constant 0.000000e+00 : f32
    %7 = vector.broadcast %cst_5 : f32 to vector<16x512xf32>
    %8 = arith.maximumf %6, %7 : vector<16x512xf32>
    %9 = arith.truncf %8 : vector<16x512xf32> to vector<16x512xbf16>
    %c0_6 = arith.constant 0 : index
    %c0_7 = arith.constant 0 : index
    %10 = vector.load %arg4[%c0_6, %c0_7] : memref<512x128xbf16, #tpu.memory_space<vmem>>, vector<512x128xbf16>
    %cst_8 = arith.constant dense<0.000000e+00> : vector<16x128xf32>
    %11 = tpu.matmul %9, %10, %cst_8 {dimension_numbers = #tpu.dot_dimension_numbers<[1], [0], [0], [1], [0, 0, 1, 1], [], []>} : vector<16x512xbf16>, vector<512x128xbf16>, vector<16x128xf32> -> vector<16x128xf32>
    %c0_9 = arith.constant 0 : index
    %c0_10 = arith.constant 0 : index
    %12 = vector.load %arg5[%c0_9, %c0_10] : memref<1x128xf32, #tpu.memory_space<vmem>>, vector<1x128xf32>
    %13 = vector.broadcast %12 : vector<1x128xf32> to vector<16x128xf32>
    %14 = arith.addf %11, %13 : vector<16x128xf32>
    %c0_11 = arith.constant 0 : index
    %c0_12 = arith.constant 0 : index
    %15 = vector.load %arg6[%c0_11, %c0_12] : memref<16x128xf32, #tpu.memory_space<vmem>>, vector<16x128xf32>
    tpu.vector_store %arg6[%c0_11, %c0_12], %14 {strides = array<i32>} : memref<16x128xf32, #tpu.memory_space<vmem>>, vector<16x128xf32>,
    return
  }
  func.func @transform_0(%arg0: i32) -> (i32, i32) {
    %c0_i32 = arith.constant 0 : i32
    %c0_i32_0 = arith.constant 0 : i32
    return %arg0, %c0_i32 : i32, i32
  }
  func.func @transform_1(%arg0: i32) -> (i32, i32) {
    %c0_i32 = arith.constant 0 : i32
    %c0_i32_0 = arith.constant 0 : i32
    %c0_i32_1 = arith.constant 0 : i32
    return %c0_i32, %c0_i32_0 : i32, i32
  }
  func.func @transform_2(%arg0: i32) -> (i32, i32) {
    %c0_i32 = arith.constant 0 : i32
    %c0_i32_0 = arith.constant 0 : i32
    %c0_i32_1 = arith.constant 0 : i32
    return %c0_i32, %c0_i32_0 : i32, i32
  }
  func.func @transform_3(%arg0: i32) -> (i32, i32) {
    %c0_i32 = arith.constant 0 : i32
    %c0_i32_0 = arith.constant 0 : i32
    %c0_i32_1 = arith.constant 0 : i32
    return %c0_i32, %c0_i32_0 : i32, i32
  }
  func.func @transform_4(%arg0: i32) -> (i32, i32) {
    %c0_i32 = arith.constant 0 : i32
    %c0_i32_0 = arith.constant 0 : i32
    %c0_i32_1 = arith.constant 0 : i32
    return %c0_i32, %c0_i32_0 : i32, i32
  }
  func.func @transform_5(%arg0: i32) -> (i32, i32) {
    %c0_i32 = arith.constant 0 : i32
    %c0_i32_0 = arith.constant 0 : i32
    return %arg0, %c0_i32 : i32, i32
  }
}

</mosaic_0001>

<llo_original>
// kernel: tpu_custom_call.1
$region0: #{tpu_custom_call.1}
  #allocation0 [shape = 'u32[]', space=smem, size = 0x4, offset = 0x4, fixed_abs, tag = 'smem constant byte address 0x4 - core index']
  #allocation1 [shape = 'u32[144,128]{1,0:T(1,128)}', space=vmem, size = 0x12000, scoped, tag = 'internal scratch']
  %s0 = inlined_call_operand.hbm [shape: f32[16,3072], index: 0, kind: input, shape index: {}]
  %s1 = inlined_call_operand.hbm [shape: bf16[3072,512], index: 1, kind: input, shape index: {}]
  %s2 = inlined_call_operand.hbm [shape: f32[1,512], index: 2, kind: input, shape index: {}]
  %s3 = inlined_call_operand.hbm [shape: bf16[512,128], index: 3, kind: input, shape index: {}]
  %s4 = inlined_call_operand.hbm [shape: f32[1,128], index: 4, kind: input, shape index: {}]
  %s5 = inlined_call_operand.hbm [shape: f32[16,128], index: 5, kind: output, shape index: {}]
  %s6 = sld [smem:[#allocation0]]
  $region50: #{tpu_custom_call.1} parent=0
    _
  %s8 = ssub.s32 1, %s6
  %s9 = scalar_select 0, %s8, %s6
  $region1: #{tpu_custom_call.1} parent=0
    #allocation2 [shape = 'u8[196608]{0}', space=vmem, size = 0x30000, scoped, tag = 'input window, operand 0, single buffered']
    #allocation3 [shape = 's32[1]{0}', space=sflag, size = 0x4, scoped, tag = 'scoped memory for tpu_custom_call.1']
    #allocation4 [shape = 's32[1]{0}', space=sflag, size = 0x4, scoped, tag = 'scoped memory for tpu_custom_call.1']
    #allocation5 [shape = 'u8[3145728]{0}', space=vmem, size = 0x300000, scoped, tag = 'input window, operand 1, single buffered']
    #allocation6 [shape = 's32[1]{0}', space=sflag, size = 0x4, scoped, tag = 'scoped memory for tpu_custom_call.1']
    #allocation7 [shape = 'u8[2048]{0}', space=vmem, size = 0x800, scoped, tag = 'input window, operand 2, single buffered']
    #allocation8 [shape = 'u8[131072]{0}', space=vmem, size = 0x20000, scoped, tag = 'input window, operand 3, single buffered']
    #allocation9 [shape = 's32[1]{0}', space=sflag, size = 0x4, scoped, tag = 'scoped memory for tpu_custom_call.1']
    #allocation10 [shape = 'u8[512]{0}', space=vmem, size = 0x400, scoped, tag = 'input window, operand 4, single buffered']
    #allocation11 [shape = 'u8[8192]{0}', space=vmem, size = 0x2000, scoped, tag = 'output window, operand 0, single buffered']
    %10 = vsyncpa [#allocation3], 0
    %11 = vsyncpa [#allocation6], 0
    %12 = vsyncpa [#allocation9], 0
    %13 = vsyncpa [#allocation4], 0
    // Predicated region
    $region2: #{tpu_custom_call.1} parent=1 // pred_check
      _
    $region3: #{tpu_custom_call.1} parent=1 // pred_check_branch
      %15 = sbr.rel (0) target = $region5
    $region4: #{tpu_custom_call.1} parent=1 // pred_region
      %s17 = ssub.s32 6144, 6144
      %18 = vsyncadd [#allocation3], %s17
      %s19 = sshll.u32 [#allocation2], 4
      %s20 = int_to_ptr.vmem [resolvable:$true] %s19
      %25 = dma.hbm_to_vmem [thread:$0]  %s0, 6144, %s20, [#allocation3], 3072, 3072, 192
    $region5: #{tpu_custom_call.1} parent=1 // pred_fallthru
      _
    // Predicated region
    $region6: #{tpu_custom_call.1} parent=1 // pred_check
      _
    $region7: #{tpu_custom_call.1} parent=1 // pred_check_branch
      %27 = sbr.rel (0) target = $region9
    $region8: #{tpu_custom_call.1} parent=1 // pred_region
      %s29 = ssub.s32 98304, 98304
      %30 = vsyncadd [#allocation6], %s29
      %s31 = sshll.u32 [#allocation5], 4
      %s32 = int_to_ptr.vmem [resolvable:$true] %s31
      %37 = dma.hbm_to_vmem [thread:$0]  %s1, 98304, %s32, [#allocation6], 256, 256, 16
    $region9: #{tpu_custom_call.1} parent=1 // pred_fallthru
      _
    // Predicated region
    $region10: #{tpu_custom_call.1} parent=1 // pred_check
      _
    $region11: #{tpu_custom_call.1} parent=1 // pred_check_branch
      %39 = sbr.rel (0) target = $region13
    $region12: #{tpu_custom_call.1} parent=1 // pred_region
      %s41 = ssub.s32 64, 64
      %42 = vsyncadd [#allocation6], %s41
      %s44 = sshll.u32 [#allocation7], 4
      %s45 = int_to_ptr.vmem [resolvable:$true] %s44
      %47 = dma.hbm_to_vmem [thread:$0]  %s2, 64, %s45, [#allocation6]
    $region13: #{tpu_custom_call.1} parent=1 // pred_fallthru
      _
    // Predicated region
    $region14: #{tpu_custom_call.1} parent=1 // pred_check
      _
    $region15: #{tpu_custom_call.1} parent=1 // pred_check_branch
      %49 = sbr.rel (0) target = $region17
    $region16: #{tpu_custom_call.1} parent=1 // pred_region
      %s51 = ssub.s32 4096, 4096
      %52 = vsyncadd [#allocation9], %s51
      %s53 = sshll.u32 [#allocation8], 4
      %s54 = int_to_ptr.vmem [resolvable:$true] %s53
      %59 = dma.hbm_to_vmem [thread:$0]  %s3, 4096, %s54, [#allocation9], 64, 64, 4
    $region17: #{tpu_custom_call.1} parent=1 // pred_fallthru
      _
    // Predicated region
    $region18: #{tpu_custom_call.1} parent=1 // pred_check
      _
    $region19: #{tpu_custom_call.1} parent=1 // pred_check_branch
      %61 = sbr.rel (0) target = $region21
    $region20: #{tpu_custom_call.1} parent=1 // pred_region
      %s63 = ssub.s32 16, 16
      %64 = vsyncadd [#allocation9], %s63
      %s66 = sshll.u32 [#allocation10], 4
      %s67 = int_to_ptr.vmem [resolvable:$true] %s66
      %69 = dma.hbm_to_vmem [thread:$0]  %s4, 16, %s67, [#allocation9]
    $region21: #{tpu_custom_call.1} parent=1 // pred_fallthru
      _
    // Predicated region
    $region22: #{tpu_custom_call.1} parent=1 // pred_check
      _
    $region23: #{tpu_custom_call.1} parent=1 // pred_check_branch
      %71 = sbr.rel (0) target = $region25
    $region24: #{tpu_custom_call.1} parent=1 // pred_region
      %72 = dma.done [#allocation3], 6144
    $region25: #{tpu_custom_call.1} parent=1 // pred_fallthru
      _
    // Predicated region
    $region26: #{tpu_custom_call.1} parent=1 // pred_check
      _
    $region27: #{tpu_custom_call.1} parent=1 // pred_check_branch
      %74 = sbr.rel (0) target = $region29
    $region28: #{tpu_custom_call.1} parent=1 // pred_region
      %75 = dma.done [#allocation6], 98304
    $region29: #{tpu_custom_call.1} parent=1 // pred_fallthru
      _
    // Predicated region
    $region30: #{tpu_custom_call.1} parent=1 // pred_check
      _
    $region31: #{tpu_custom_call.1} parent=1 // pred_check_branch
      %77 = sbr.rel (0) target = $region33
    $region32: #{tpu_custom_call.1} parent=1 // pred_region
      %78 = dma.done [#allocation6], 64
    $region33: #{tpu_custom_call.1} parent=1 // pred_fallthru
      _
    // Predicated region
    $region34: #{tpu_custom_call.1} parent=1 // pred_check
      _
    $region35: #{tpu_custom_call.1} parent=1 // pred_check_branch
      %80 = sbr.rel (0) target = $region37
    $region36: #{tpu_custom_call.1} parent=1 // pred_region
      %81 = dma.done [#allocation9], 4096
    $region37: #{tpu_custom_call.1} parent=1 // pred_fallthru
      _
    // Predicated region
    $region38: #{tpu_custom_call.1} parent=1 // pred_check
      _
    $region39: #{tpu_custom_call.1} parent=1 // pred_check_branch
      %83 = sbr.rel (0) target = $region41
    $region40: #{tpu_custom_call.1} parent=1 // pred_region
      %84 = dma.done [#allocation9], 16
    $region41: #{tpu_custom_call.1} parent=1 // pred_fallthru
      _
    %v86 = vld [vmem:[#allocation2] sm:$0xff]
    %v87 = vld [vmem:[#allocation2 + $0x8] sm:$0xff]
    %v88 = vld [vmem:[#allocation2 + $0x10] sm:$0xff]
    %v89 = vld [vmem:[#allocation2 + $0x18] sm:$0xff]
    %v90 = vld [vmem:[#allocation2 + $0x20] sm:$0xff]
    %v91 = vld [vmem:[#allocation2 + $0x28] sm:$0xff]
    %v92 = vld [vmem:[#allocation2 + $0x30] sm:$0xff]
    %v93 = vld [vmem:[#allocation2 + $0x38] sm:$0xff]
    %v94 = vld [vmem:[#allocation2 + $0x40] sm:$0xff]
    %v95 = vld [vmem:[#allocation2 + $0x48] sm:$0xff]
    %v96 = vld [vmem:[#allocation2 + $0x50] sm:$0xff]
    %v97 = vld [vmem:[#allocation2 + $0x58] sm:$0xff]
    %v98 = vld [vmem:[#allocation2 + $0x60] sm:$0xff]
    %v99 = vld [vmem:[#allocation2 + $0x68] sm:$0xff]
    %v100 = vld [vmem:[#allocation2 + $0x70] sm:$0xff]
    %v101 = vld [vmem:[#allocation2 + $0x78] sm:$0xff]
    %v102 = vld [vmem:[#allocation2 + $0x80] sm:$0xff]
    %v103 = vld [vmem:[#allocation2 + $0x88] sm:$0xff]
    %v104 = vld [vmem:[#allocation2 + $0x90] sm:$0xff]
    %v105 = vld [vmem:[#allocation2 + $0x98] sm:$0xff]
    %v106 = vld [vmem:[#allocation2 + $0xa0] sm:$0xff]
    %v107 = vld [vmem:[#allocation2 + $0xa8] sm:$0xff]
    %v108 = vld [vmem:[#allocation2 + $0xb0] sm:$0xff]
    %v109 = vld [vmem:[#allocation2 + $0xb8] sm:$0xff]
    %v110 = vld [vmem:[#allocation2 + $0xc0] sm:$0xff]
    %v111 = vld [vmem:[#allocation2 + $0xc8] sm:$0xff]
    %v112 = vld [vmem:[#allocation2 + $0xd0] sm:$0xff]
    %v113 = vld [vmem:[#allocation2 + $0xd8] sm:$0xff]
    %v114 = vld [vmem:[#allocation2 + $0xe0] sm:$0xff]
    %v115 = vld [vmem:[#allocation2 + $0xe8] sm:$0xff]
    %v116 = vld [vmem:[#allocation2 + $0xf0] sm:$0xff]
    %v117 = vld [vmem:[#allocation2 + $0xf8] sm:$0xff]
    %v118 = vld [vmem:[#allocation2 + $0x100] sm:$0xff]
    %v119 = vld [vmem:[#allocation2 + $0x108] sm:$0xff]
    %v120 = vld [vmem:[#allocation2 + $0x110] sm:$0xff]
    %v121 = vld [vmem:[#allocation2 + $0x118] sm:$0xff]
    %v122 = vld [vmem:[#allocation2 + $0x120] sm:$0xff]
    %v123 = vld [vmem:[#allocation2 + $0x128] sm:$0xff]
    %v124 = vld [vmem:[#allocation2 + $0x130] sm:$0xff]
    %v125 = vld [vmem:[#allocation2 + $0x138] sm:$0xff]
    %v126 = vld [vmem:[#allocation2 + $0x140] sm:$0xff]
    %v127 = vld [vmem:[#allocation2 + $0x148] sm:$0xff]
    %v128 = vld [vmem:[#allocation2 + $0x150] sm:$0xff]
    %v129 = vld [vmem:[#allocation2 + $0x158] sm:$0xff]
    %v130 = vld [vmem:[#allocation2 + $0x160] sm:$0xff]
    %v131 = vld [vmem:[#allocation2 + $0x168] sm:$0xff]
    %v132 = vld [vmem:[#allocation2 + $0x170] sm:$0xff]
    %v133 = vld [vmem:[#allocation2 + $0x178] sm:$0xff]
    %v134 = vpack.c.bf16 %v110, %v86
    %v135 = vpack.c.bf16 %v111, %v87
    %v136 = vpack.c.bf16 %v112, %v88
    %v137 = vpack.c.bf16 %v113, %v89
    %v138 = vpack.c.bf16 %v114, %v90
    %v139 = vpack.c.bf16 %v115, %v91
    %v140 = vpack.c.bf16 %v116, %v92
    %v141 = vpack.c.bf16 %v117, %v93
    %v142 = vpack.c.bf16 %v118, %v94
    %v143 = vpack.c.bf16 %v119, %v95
    %v144 = vpack.c.bf16 %v120, %v96
    %v145 = vpack.c.bf16 %v121, %v97
    %v146 = vpack.c.bf16 %v122, %v98
    %v147 = vpack.c.bf16 %v123, %v99
    %v148 = vpack.c.bf16 %v124, %v100
    %v149 = vpack.c.bf16 %v125, %v101
    %v150 = vpack.c.bf16 %v126, %v102
    %v151 = vpack.c.bf16 %v127, %v103
    %v152 = vpack.c.bf16 %v128, %v104
    %v153 = vpack.c.bf16 %v129, %v105
    %v154 = vpack.c.bf16 %v130, %v106
    %v155 = vpack.c.bf16 %v131, %v107
    %v156 = vpack.c.bf16 %v132, %v108
    %v157 = vpack.c.bf16 %v133, %v109
    %v158 = vld [vmem:[#allocation5] sm:$0xff]
    %v159 = vld [vmem:[#allocation5 + $0x8] sm:$0xff]
    %v160 = vld [vmem:[#allocation5 + $0x10] sm:$0xff]
    %v161 = vld [vmem:[#allocation5 + $0x18] sm:$0xff]
    %v162 = vld [vmem:[#allocation5 + $0x20] sm:$0xff]
    %v163 = vld [vmem:[#allocation5 + $0x28] sm:$0xff]
    %v164 = vld [vmem:[#allocation5 + $0x30] sm:$0xff]
    %v165 = vld [vmem:[#allocation5 + $0x38] sm:$0xff]
    %v166 = vld [vmem:[#allocation5 + $0x40] sm:$0xff]
    %v167 = vld [vmem:[#allocation5 + $0x48] sm:$0xff]
    %v168 = vld [vmem:[#allocation5 + $0x50] sm:$0xff]
    %v169 = vld [vmem:[#allocation5 + $0x58] sm:$0xff]
    %v170 = vld [vmem:[#allocation5 + $0x60] sm:$0xff]
    %v171 = vld [vmem:[#allocation5 + $0x68] sm:$0xff]
    %v172 = vld [vmem:[#allocation5 + $0x70] sm:$0xff]
    %v173 = vld [vmem:[#allocation5 + $0x78] sm:$0xff]
    %v174 = vld [vmem:[#allocation5 + $0x80] sm:$0xff]
    %v175 = vld [vmem:[#allocation5 + $0x88] sm:$0xff]
    %v176 = vld [vmem:[#allocation5 + $0x90] sm:$0xff]
    %v177 = vld [vmem:[#allocation5 + $0x98] sm:$0xff]
    %v178 = vld [vmem:[#allocation5 + $0xa0] sm:$0xff]
    %v179 = vld [vmem:[#allocation5 + $0xa8] sm:$0xff]
    %v180 = vld [vmem:[#allocation5 + $0xb0] sm:$0xff]
    %v181 = vld [vmem:[#allocation5 + $0xb8] sm:$0xff]
    %v182 = vld [vmem:[#allocation5 + $0xc0] sm:$0xff]
    %v183 = vld [vmem:[#allocation5 + $0xc8] sm:$0xff]
    %v184 = vld [vmem:[#allocation5 + $0xd0] sm:$0xff]
    %v185 = vld [vmem:[#allocation5 + $0xd8] sm:$0xff]
    %v186 = vld [vmem:[#allocation5 + $0xe0] sm:$0xff]
    %v187 = vld [vmem:[#allocation5 + $0xe8] sm:$0xff]
    %v188 = vld [vmem:[#allocation5 + $0xf0] sm:$0xff]
    %v189 = vld [vmem:[#allocation5 + $0xf8] sm:$0xff]
    %v190 = vld [vmem:[#allocation5 + $0x100] sm:$0xff]
    %v191 = vld [vmem:[#allocation5 + $0x108] sm:$0xff]
    %v192 = vld [vmem:[#allocation5 + $0x110] sm:$0xff]
    %v193 = vld [vmem:[#allocation5 + $0x118] sm:$0xff]
    %v194 = vld [vmem:[#allocation5 + $0x120] sm:$0xff]
    %v195 = vld [vmem:[#allocation5 + $0x128] sm:$0xff]
    %v196 = vld [vmem:[#allocation5 + $0x130] sm:$0xff]
    %v197 = vld [vmem:[#allocation5 + $0x138] sm:$0xff]
    %v198 = vld [vmem:[#allocation5 + $0x140] sm:$0xff]
    %v199 = vld [vmem:[#allocation5 + $0x148] sm:$0xff]
    %v200 = vld [vmem:[#allocation5 + $0x150] sm:$0xff]
    %v201 = vld [vmem:[#allocation5 + $0x158] sm:$0xff]
    %v202 = vld [vmem:[#allocation5 + $0x160] sm:$0xff]
    %v203 = vld [vmem:[#allocation5 + $0x168] sm:$0xff]
    %v204 = vld [vmem:[#allocation5 + $0x170] sm:$0xff]
    %v205 = vld [vmem:[#allocation5 + $0x178] sm:$0xff]
    %v206 = vld [vmem:[#allocation5 + $0x180] sm:$0xff]
    %v207 = vld [vmem:[#allocation5 + $0x188] sm:$0xff]
    %v208 = vld [vmem:[#allocation5 + $0x190] sm:$0xff]
    %v209 = vld [vmem:[#allocation5 + $0x198] sm:$0xff]
    %v210 = vld [vmem:[#allocation5 + $0x1a0] sm:$0xff]
    %v211 = vld [vmem:[#allocation5 + $0x1a8] sm:$0xff]
    %v212 = vld [vmem:[#allocation5 + $0x1b0] sm:$0xff]
    %v213 = vld [vmem:[#allocation5 + $0x1b8] sm:$0xff]
    %v214 = vld [vmem:[#allocation5 + $0x1c0] sm:$0xff]
    %v215 = vld [vmem:[#allocation5 + $0x1c8] sm:$0xff]
    %v216 = vld [vmem:[#allocation5 + $0x1d0] sm:$0xff]
    %v217 = vld [vmem:[#allocation5 + $0x1d8] sm:$0xff]
    %v218 = vld [vmem:[#allocation5 + $0x1e0] sm:$0xff]
    %v219 = vld [vmem:[#allocation5 + $0x1e8] sm:$0xff]
    %v220 = vld [vmem:[#allocation5 + $0x1f0] sm:$0xff]
    %v221 = vld [vmem:[#allocation5 + $0x1f8] sm:$0xff]
    %v222 = vld [vmem:[#allocation5 + $0x200] sm:$0xff]
    %v223 = vld [vmem:[#allocation5 + $0x208] sm:$0xff]
    %v224 = vld [vmem:[#allocation5 + $0x210] sm:$0xff]
    %v225 = vld [vmem:[#allocation5 + $0x218] sm:$0xff]
    %v226 = vld [vmem:[#allocation5 + $0x220] sm:$0xff]
    %v227 = vld [vmem:[#allocation5 + $0x228] sm:$0xff]
    %v228 = vld [vmem:[#allocation5 + $0x230] sm:$0xff]
    %v229 = vld [vmem:[#allocation5 + $0x238] sm:$0xff]
    %v230 = vld [vmem:[#allocation5 + $0x240] sm:$0xff]
    %v231 = vld [vmem:[#allocation5 + $0x248] sm:$0xff]
    %v232 = vld [vmem:[#allocation5 + $0x250] sm:$0xff]
    %v233 = vld [vmem:[#allocation5 + $0x258] sm:$0xff]
    %v234 = vld [vmem:[#allocation5 + $0x260] sm:$0xff]
    %v235 = vld [vmem:[#allocation5 + $0x268] sm:$0xff]
    %v236 = vld [vmem:[#allocation5 + $0x270] sm:$0xff]
    %v237 = vld [vmem:[#allocation5 + $0x278] sm:$0xff]
    %v238 = vld [vmem:[#allocation5 + $0x280] sm:$0xff]
    %v239 = vld [vmem:[#allocation5 + $0x288] sm:$0xff]
    %v240 = vld [vmem:[#allocation5 + $0x290] sm:$0xff]
    %v241 = vld [vmem:[#allocation5 + $0x298] sm:$0xff]
    %v242 = vld [vmem:[#allocation5 + $0x2a0] sm:$0xff]
    %v243 = vld [vmem:[#allocation5 + $0x2a8] sm:$0xff]
    %v244 = vld [vmem:[#allocation5 + $0x2b0] sm:$0xff]
    %v245 = vld [vmem:[#allocation5 + $0x2b8] sm:$0xff]
    %v246 = vld [vmem:[#allocation5 + $0x2c0] sm:$0xff]
    %v247 = vld [vmem:[#allocation5 + $0x2c8] sm:$0xff]
    %v248 = vld [vmem:[#allocation5 + $0x2d0] sm:$0xff]
    %v249 = vld [vmem:[#allocation5 + $0x2d8] sm:$0xff]
    %v250 = vld [vmem:[#allocation5 + $0x2e0] sm:$0xff]
    %v251 = vld [vmem:[#allocation5 + $0x2e8] sm:$0xff]
    %v252 = vld [vmem:[#allocation5 + $0x2f0] sm:$0xff]
    %v253 = vld [vmem:[#allocation5 + $0x2f8] sm:$0xff]
    %v254 = vld [vmem:[#allocation5 + $0x300] sm:$0xff]
    %v255 = vld [vmem:[#allocation5 + $0x308] sm:$0xff]
    %v256 = vld [vmem:[#allocation5 + $0x310] sm:$0xff]
    %v257 = vld [vmem:[#allocation5 + $0x318] sm:$0xff]
    %v258 = vld [vmem:[#allocation5 + $0x320] sm:$0xff]
    %v259 = vld [vmem:[#allocation5 + $0x328] sm:$0xff]
    %v260 = vld [vmem:[#allocation5 + $0x330] sm:$0xff]
    %v261 = vld [vmem:[#allocation5 + $0x338] sm:$0xff]
    %v262 = vld [vmem:[#allocation5 + $0x340] sm:$0xff]
    %v263 = vld [vmem:[#allocation5 + $0x348] sm:$0xff]
    %v264 = vld [vmem:[#allocation5 + $0x350] sm:$0xff]
    %v265 = vld [vmem:[#allocation5 + $0x358] sm:$0xff]
    %v266 = vld [vmem:[#allocation5 + $0x360] sm:$0xff]
    %v267 = vld [vmem:[#allocation5 + $0x368] sm:$0xff]
    %v268 = vld [vmem:[#allocation5 + $0x370] sm:$0xff]
    %v269 = vld [vmem:[#allocation5 + $0x378] sm:$0xff]
    %v270 = vld [vmem:[#allocation5 + $0x380] sm:$0xff]
    %v271 = vld [vmem:[#allocation5 + $0x388] sm:$0xff]
    %v272 = vld [vmem:[#allocation5 + $0x390] sm:$0xff]
    %v273 = vld [vmem:[#allocation5 + $0x398] sm:$0xff]
    %v274 = vld [vmem:[#allocation5 + $0x3a0] sm:$0xff]
    %v275 = vld [vmem:[#allocation5 + $0x3a8] sm:$0xff]
    %v276 = vld [vmem:[#allocation5 + $0x3b0] sm:$0xff]
    %v277 = vld [vmem:[#allocation5 + $0x3b8] sm:$0xff]
    %v278 = vld [vmem:[#allocation5 + $0x3c0] sm:$0xff]
    %v279 = vld [vmem:[#allocation5 + $0x3c8] sm:$0xff]
    %v280 = vld [vmem:[#allocation5 + $0x3d0] sm:$0xff]
    %v281 = vld [vmem:[#allocation5 + $0x3d8] sm:$0xff]
    %v282 = vld [vmem:[#allocation5 + $0x3e0] sm:$0xff]
    %v283 = vld [vmem:[#allocation5 + $0x3e8] sm:$0xff]
    %v284 = vld [vmem:[#allocation5 + $0x3f0] sm:$0xff]
    %v285 = vld [vmem:[#allocation5 + $0x3f8] sm:$0xff]
    %v286 = vld [vmem:[#allocation5 + $0x400] sm:$0xff]
    %v287 = vld [vmem:[#allocation5 + $0x408] sm:$0xff]
    %v288 = vld [vmem:[#allocation5 + $0x410] sm:$0xff]
    %v289 = vld [vmem:[#allocation5 + $0x418] sm:$0xff]
    %v290 = vld [vmem:[#allocation5 + $0x420] sm:$0xff]
    %v291 = vld [vmem:[#allocation5 + $0x428] sm:$0xff]
    %v292 = vld [vmem:[#allocation5 + $0x430] sm:$0xff]
    %v293 = vld [vmem:[#allocation5 + $0x438] sm:$0xff]
    %v294 = vld [vmem:[#allocation5 + $0x440] sm:$0xff]
    %v295 = vld [vmem:[#allocation5 + $0x448] sm:$0xff]
    %v296 = vld [vmem:[#allocation5 + $0x450] sm:$0xff]
    %v297 = vld [vmem:[#allocation5 + $0x458] sm:$0xff]
    %v298 = vld [vmem:[#allocation5 + $0x460] sm:$0xff]
    %v299 = vld [vmem:[#allocation5 + $0x468] sm:$0xff]
    %v300 = vld [vmem:[#allocation5 + $0x470] sm:$0xff]
    %v301 = vld [vmem:[#allocation5 + $0x478] sm:$0xff]
    %v302 = vld [vmem:[#allocation5 + $0x480] sm:$0xff]
    %v303 = vld [vmem:[#allocation5 + $0x488] sm:$0xff]
    %v304 = vld [vmem:[#allocation5 + $0x490] sm:$0xff]
    %v305 = vld [vmem:[#allocation5 + $0x498] sm:$0xff]
    %v306 = vld [vmem:[#allocation5 + $0x4a0] sm:$0xff]
    %v307 = vld [vmem:[#allocation5 + $0x4a8] sm:$0xff]
    %v308 = vld [vmem:[#allocation5 + $0x4b0] sm:$0xff]
    %v309 = vld [vmem:[#allocation5 + $0x4b8] sm:$0xff]
    %v310 = vld [vmem:[#allocation5 + $0x4c0] sm:$0xff]
    %v311 = vld [vmem:[#allocation5 + $0x4c8] sm:$0xff]
    %v312 = vld [vmem:[#allocation5 + $0x4d0] sm:$0xff]
    %v313 = vld [vmem:[#allocation5 + $0x4d8] sm:$0xff]
    %v314 = vld [vmem:[#allocation5 + $0x4e0] sm:$0xff]
    %v315 = vld [vmem:[#allocation5 + $0x4e8] sm:$0xff]
    %v316 = vld [vmem:[#allocation5 + $0x4f0] sm:$0xff]
    %v317 = vld [vmem:[#allocation5 + $0x4f8] sm:$0xff]
    %v318 = vld [vmem:[#allocation5 + $0x500] sm:$0xff]
    %v319 = vld [vmem:[#allocation5 + $0x508] sm:$0xff]
    %v320 = vld [vmem:[#allocation5 + $0x510] sm:$0xff]
    %v321 = vld [vmem:[#allocation5 + $0x518] sm:$0xff]
    %v322 = vld [vmem:[#allocation5 + $0x520] sm:$0xff]
    %v323 = vld [vmem:[#allocation5 + $0x528] sm:$0xff]
    %v324 = vld [vmem:[#allocation5 + $0x530] sm:$0xff]
    %v325 = vld [vmem:[#allocation5 + $0x538] sm:$0xff]
    %v326 = vld [vmem:[#allocation5 + $0x540] sm:$0xff]
    %v327 = vld [vmem:[#allocation5 + $0x548] sm:$0xff]
    %v328 = vld [vmem:[#allocation5 + $0x550] sm:$0xff]
    %v329 = vld [vmem:[#allocation5 + $0x558] sm:$0xff]
    %v330 = vld [vmem:[#allocation5 + $0x560] sm:$0xff]
    %v331 = vld [vmem:[#allocation5 + $0x568] sm:$0xff]
    %v332 = vld [vmem:[#allocation5 + $0x570] sm:$0xff]
    %v333 = vld [vmem:[#allocation5 + $0x578] sm:$0xff]
    %v334 = vld [vmem:[#allocation5 + $0x580] sm:$0xff]
    %v335 = vld [vmem:[#allocation5 + $0x588] sm:$0xff]
    %v336 = vld [vmem:[#allocation5 + $0x590] sm:$0xff]
    %v337 = vld [vmem:[#allocation5 + $0x598] sm:$0xff]
    %v338 = vld [vmem:[#allocation5 + $0x5a0] sm:$0xff]
    %v339 = vld [vmem:[#allocation5 + $0x5a8] sm:$0xff]
    %v340 = vld [vmem:[#allocation5 + $0x5b0] sm:$0xff]
    %v341 = vld [vmem:[#allocation5 + $0x5b8] sm:$0xff]
    %v342 = vld [vmem:[#allocation5 + $0x5c0] sm:$0xff]
    %v343 = vld [vmem:[#allocation5 + $0x5c8] sm:$0xff]
    %v344 = vld [vmem:[#allocation5 + $0x5d0] sm:$0xff]
    %v345 = vld [vmem:[#allocation5 + $0x5d8] sm:$0xff]
    %v346 = vld [vmem:[#allocation5 + $0x5e0] sm:$0xff]
    %v347 = vld [vmem:[#allocation5 + $0x5e8] sm:$0xff]
    %v348 = vld [vmem:[#allocation5 + $0x5f0] sm:$0xff]
    %v349 = vld [vmem:[#allocation5 + $0x5f8] sm:$0xff]
    %v350 = vld [vmem:[#allocation5 + $0x600] sm:$0xff]
    %v351 = vld [vmem:[#allocation5 + $0x608] sm:$0xff]
    %v352 = vld [vmem:[#allocation5 + $0x610] sm:$0xff]
    %v353 = vld [vmem:[#allocation5 + $0x618] sm:$0xff]
    %v354 = vld [vmem:[#allocation5 + $0x620] sm:$0xff]
    %v355 = vld [vmem:[#allocation5 + $0x628] sm:$0xff]
    %v356 = vld [vmem:[#allocation5 + $0x630] sm:$0xff]
    %v357 = vld [vmem:[#allocation5 + $0x638] sm:$0xff]
    %v358 = vld [vmem:[#allocation5 + $0x640] sm:$0xff]
    %v359 = vld [vmem:[#allocation5 + $0x648] sm:$0xff]
    %v360 = vld [vmem:[#allocation5 + $0x650] sm:$0xff]
    %v361 = vld [vmem:[#allocation5 + $0x658] sm:$0xff]
    %v362 = vld [vmem:[#allocation5 + $0x660] sm:$0xff]
    %v363 = vld [vmem:[#allocation5 + $0x668] sm:$0xff]
    %v364 = vld [vmem:[#allocation5 + $0x670] sm:$0xff]
    %v365 = vld [vmem:[#allocation5 + $0x678] sm:$0xff]
    %v366 = vld [vmem:[#allocation5 + $0x680] sm:$0xff]
    %v367 = vld [vmem:[#allocation5 + $0x688] sm:$0xff]
    %v368 = vld [vmem:[#allocation5 + $0x690] sm:$0xff]
    %v369 = vld [vmem:[#allocation5 + $0x698] sm:$0xff]
    %v370 = vld [vmem:[#allocation5 + $0x6a0] sm:$0xff]
    %v371 = vld [vmem:[#allocation5 + $0x6a8] sm:$0xff]
    %v372 = vld [vmem:[#allocation5 + $0x6b0] sm:$0xff]
    %v373 = vld [vmem:[#allocation5 + $0x6b8] sm:$0xff]
    %v374 = vld [vmem:[#allocation5 + $0x6c0] sm:$0xff]
    %v375 = vld [vmem:[#allocation5 + $0x6c8] sm:$0xff]
    %v376 = vld [vmem:[#allocation5 + $0x6d0] sm:$0xff]
    %v377 = vld [vmem:[#allocation5 + $0x6d8] sm:$0xff]
    %v378 = vld [vmem:[#allocation5 + $0x6e0] sm:$0xff]
    %v379 = vld [vmem:[#allocation5 + $0x6e8] sm:$0xff]
    %v380 = vld [vmem:[#allocation5 + $0x6f0] sm:$0xff]
    %v381 = vld [vmem:[#allocation5 + $0x6f8] sm:$0xff]
    %v382 = vld [vmem:[#allocation5 + $0x700] sm:$0xff]
    %v383 = vld [vmem:[#allocation5 + $0x708] sm:$0xff]
    %v384 = vld [vmem:[#allocation5 + $0x710] sm:$0xff]
    %v385 = vld [vmem:[#allocation5 + $0x718] sm:$0xff]
    %v386 = vld [vmem:[#allocation5 + $0x720] sm:$0xff]
    %v387 = vld [vmem:[#allocation5 + $0x728] sm:$0xff]
    %v388 = vld [vmem:[#allocation5 + $0x730] sm:$0xff]
    %v389 = vld [vmem:[#allocation5 + $0x738] sm:$0xff]
    %v390 = vld [vmem:[#allocation5 + $0x740] sm:$0xff]
    %v391 = vld [vmem:[#allocation5 + $0x748] sm:$0xff]
    %v392 = vld [vmem:[#allocation5 + $0x750] sm:$0xff]
    %v393 = vld [vmem:[#allocation5 + $0x758] sm:$0xff]
    %v394 = vld [vmem:[#allocation5 + $0x760] sm:$0xff]
    %v395 = vld [vmem:[#allocation5 + $0x768] sm:$0xff]
    %v396 = vld [vmem:[#allocation5 + $0x770] sm:$0xff]
    %v397 = vld [vmem:[#allocation5 + $0x778] sm:$0xff]
    %v398 = vld [vmem:[#allocation5 + $0x780] sm:$0xff]
    %v399 = vld [vmem:[#allocation5 + $0x788] sm:$0xff]
    %v400 = vld [vmem:[#allocation5 + $0x790] sm:$0xff]
    %v401 = vld [vmem:[#allocation5 + $0x798] sm:$0xff]
    %v402 = vld [vmem:[#allocation5 + $0x7a0] sm:$0xff]
    %v403 = vld [vmem:[#allocation5 + $0x7a8] sm:$0xff]
    %v404 = vld [vmem:[#allocation5 + $0x7b0] sm:$0xff]
    %v405 = vld [vmem:[#allocation5 + $0x7b8] sm:$0xff]
    %v406 = vld [vmem:[#allocation5 + $0x7c0] sm:$0xff]
    %v407 = vld [vmem:[#allocation5 + $0x7c8] sm:$0xff]
    %v408 = vld [vmem:[#allocation5 + $0x7d0] sm:$0xff]
    %v409 = vld [vmem:[#allocation5 + $0x7d8] sm:$0xff]
    %v410 = vld [vmem:[#allocation5 + $0x7e0] sm:$0xff]
    %v411 = vld [vmem:[#allocation5 + $0x7e8] sm:$0xff]
    %v412 = vld [vmem:[#allocation5 + $0x7f0] sm:$0xff]
    %v413 = vld [vmem:[#allocation5 + $0x7f8] sm:$0xff]
    %v414 = vld [vmem:[#allocation5 + $0x800] sm:$0xff]
    %v415 = vld [vmem:[#allocation5 + $0x808] sm:$0xff]
    %v416 = vld [vmem:[#allocation5 + $0x810] sm:$0xff]
    %v417 = vld [vmem:[#allocation5 + $0x818] sm:$0xff]
    %v418 = vld [vmem:[#allocation5 + $0x820] sm:$0xff]
    %v419 = vld [vmem:[#allocation5 + $0x828] sm:$0xff]
    %v420 = vld [vmem:[#allocation5 + $0x830] sm:$0xff]
    %v421 = vld [vmem:[#allocation5 + $0x838] sm:$0xff]
    %v422 = vld [vmem:[#allocation5 + $0x840] sm:$0xff]
    %v423 = vld [vmem:[#allocation5 + $0x848] sm:$0xff]
    %v424 = vld [vmem:[#allocation5 + $0x850] sm:$0xff]
    %v425 = vld [vmem:[#allocation5 + $0x858] sm:$0xff]
    %v426 = vld [vmem:[#allocation5 + $0x860] sm:$0xff]
    %v427 = vld [vmem:[#allocation5 + $0x868] sm:$0xff]
    %v428 = vld [vmem:[#allocation5 + $0x870] sm:$0xff]
    %v429 = vld [vmem:[#allocation5 + $0x878] sm:$0xff]
    %v430 = vld [vmem:[#allocation5 + $0x880] sm:$0xff]
    %v431 = vld [vmem:[#allocation5 + $0x888] sm:$0xff]
    %v432 = vld [vmem:[#allocation5 + $0x890] sm:$0xff]
    %v433 = vld [vmem:[#allocation5 + $0x898] sm:$0xff]
    %v434 = vld [vmem:[#allocation5 + $0x8a0] sm:$0xff]
    %v435 = vld [vmem:[#allocation5 + $0x8a8] sm:$0xff]
    %v436 = vld [vmem:[#allocation5 + $0x8b0] sm:$0xff]
    %v437 = vld [vmem:[#allocation5 + $0x8b8] sm:$0xff]
    %v438 = vld [vmem:[#allocation5 + $0x8c0] sm:$0xff]
    %v439 = vld [vmem:[#allocation5 + $0x8c8] sm:$0xff]
    %v440 = vld [vmem:[#allocation5 + $0x8d0] sm:$0xff]
    %v441 = vld [vmem:[#allocation5 + $0x8d8] sm:$0xff]
    %v442 = vld [vmem:[#allocation5 + $0x8e0] sm:$0xff]
    %v443 = vld [vmem:[#allocation5 + $0x8e8] sm:$0xff]
    %v444 = vld [vmem:[#allocation5 + $0x8f0] sm:$0xff]
    %v445 = vld [vmem:[#allocation5 + $0x8f8] sm:$0xff]
    %v446 = vld [vmem:[#allocation5 + $0x900] sm:$0xff]
    %v447 = vld [vmem:[#allocation5 + $0x908] sm:$0xff]
    %v448 = vld [vmem:[#allocation5 + $0x910] sm:$0xff]
    %v449 = vld [vmem:[#allocation5 + $0x918] sm:$0xff]
    %v450 = vld [vmem:[#allocation5 + $0x920] sm:$0xff]
    %v451 = vld [vmem:[#allocation5 + $0x928] sm:$0xff]
    %v452 = vld [vmem:[#allocation5 + $0x930] sm:$0xff]
    %v453 = vld [vmem:[#allocation5 + $0x938] sm:$0xff]
    %v454 = vld [vmem:[#allocation5 + $0x940] sm:$0xff]
    %v455 = vld [vmem:[#allocation5 + $0x948] sm:$0xff]
    %v456 = vld [vmem:[#allocation5 + $0x950] sm:$0xff]
    %v457 = vld [vmem:[#allocation5 + $0x958] sm:$0xff]
    %v458 = vld [vmem:[#allocation5 + $0x960] sm:$0xff]
    %v459 = vld [vmem:[#allocation5 + $0x968] sm:$0xff]
    %v460 = vld [vmem:[#allocation5 + $0x970] sm:$0xff]
    %v461 = vld [vmem:[#allocation5 + $0x978] sm:$0xff]
    %v462 = vld [vmem:[#allocation5 + $0x980] sm:$0xff]
    %v463 = vld [vmem:[#allocation5 + $0x988] sm:$0xff]
    %v464 = vld [vmem:[#allocation5 + $0x990] sm:$0xff]
    %v465 = vld [vmem:[#allocation5 + $0x998] sm:$0xff]
    %v466 = vld [vmem:[#allocation5 + $0x9a0] sm:$0xff]
    %v467 = vld [vmem:[#allocation5 + $0x9a8] sm:$0xff]
    %v468 = vld [vmem:[#allocation5 + $0x9b0] sm:$0xff]
    %v469 = vld [vmem:[#allocation5 + $0x9b8] sm:$0xff]
    %v470 = vld [vmem:[#allocation5 + $0x9c0] sm:$0xff]
    %v471 = vld [vmem:[#allocation5 + $0x9c8] sm:$0xff]
    %v472 = vld [vmem:[#allocation5 + $0x9d0] sm:$0xff]
    %v473 = vld [vmem:[#allocation5 + $0x9d8] sm:$0xff]
    %v474 = vld [vmem:[#allocation5 + $0x9e0] sm:$0xff]
    %v475 = vld [vmem:[#allocation5 + $0x9e8] sm:$0xff]
    %v476 = vld [vmem:[#allocation5 + $0x9f0] sm:$0xff]
    %v477 = vld [vmem:[#allocation5 + $0x9f8] sm:$0xff]
    %v478 = vld [vmem:[#allocation5 + $0xa00] sm:$0xff]
    %v479 = vld [vmem:[#allocation5 + $0xa08] sm:$0xff]
    %v480 = vld [vmem:[#allocation5 + $0xa10] sm:$0xff]
    %v481 = vld [vmem:[#allocation5 + $0xa18] sm:$0xff]
    %v482 = vld [vmem:[#allocation5 + $0xa20] sm:$0xff]
    %v483 = vld [vmem:[#allocation5 + $0xa28] sm:$0xff]
    %v484 = vld [vmem:[#allocation5 + $0xa30] sm:$0xff]
    %v485 = vld [vmem:[#allocation5 + $0xa38] sm:$0xff]
    %v486 = vld [vmem:[#allocation5 + $0xa40] sm:$0xff]
    %v487 = vld [vmem:[#allocation5 + $0xa48] sm:$0xff]
    %v488 = vld [vmem:[#allocation5 + $0xa50] sm:$0xff]
    %v489 = vld [vmem:[#allocation5 + $0xa58] sm:$0xff]
    %v490 = vld [vmem:[#allocation5 + $0xa60] sm:$0xff]
    %v491 = vld [vmem:[#allocation5 + $0xa68] sm:$0xff]
    %v492 = vld [vmem:[#allocation5 + $0xa70] sm:$0xff]
    %v493 = vld [vmem:[#allocation5 + $0xa78] sm:$0xff]
    %v494 = vld [vmem:[#allocation5 + $0xa80] sm:$0xff]
    %v495 = vld [vmem:[#allocation5 + $0xa88] sm:$0xff]
    %v496 = vld [vmem:[#allocation5 + $0xa90] sm:$0xff]
    %v497 = vld [vmem:[#allocation5 + $0xa98] sm:$0xff]
    %v498 = vld [vmem:[#allocation5 + $0xaa0] sm:$0xff]
    %v499 = vld [vmem:[#allocation5 + $0xaa8] sm:$0xff]
    %v500 = vld [vmem:[#allocation5 + $0xab0] sm:$0xff]
    %v501 = vld [vmem:[#allocation5 + $0xab8] sm:$0xff]
    %v502 = vld [vmem:[#allocation5 + $0xac0] sm:$0xff]
    %v503 = vld [vmem:[#allocation5 + $0xac8] sm:$0xff]
    %v504 = vld [vmem:[#allocation5 + $0xad0] sm:$0xff]
    %v505 = vld [vmem:[#allocation5 + $0xad8] sm:$0xff]
    %v506 = vld [vmem:[#allocation5 + $0xae0] sm:$0xff]
    %v507 = vld [vmem:[#allocation5 + $0xae8] sm:$0xff]
    %v508 = vld [vmem:[#allocation5 + $0xaf0] sm:$0xff]
    %v509 = vld [vmem:[#allocation5 + $0xaf8] sm:$0xff]
    %v510 = vld [vmem:[#allocation5 + $0xb00] sm:$0xff]
    %v511 = vld [vmem:[#allocation5 + $0xb08] sm:$0xff]
    %v512 = vld [vmem:[#allocation5 + $0xb10] sm:$0xff]
    %v513 = vld [vmem:[#allocation5 + $0xb18] sm:$0xff]
    %v514 = vld [vmem:[#allocation5 + $0xb20] sm:$0xff]
    %v515 = vld [vmem:[#allocation5 + $0xb28] sm:$0xff]
    %v516 = vld [vmem:[#allocation5 + $0xb30] sm:$0xff]
    %v517 = vld [vmem:[#allocation5 + $0xb38] sm:$0xff]
    %v518 = vld [vmem:[#allocation5 + $0xb40] sm:$0xff]
    %v519 = vld [vmem:[#allocation5 + $0xb48] sm:$0xff]
    %v520 = vld [vmem:[#allocation5 + $0xb50] sm:$0xff]
    %v521 = vld [vmem:[#allocation5 + $0xb58] sm:$0xff]
    %v522 = vld [vmem:[#allocation5 + $0xb60] sm:$0xff]
    %v523 = vld [vmem:[#allocation5 + $0xb68] sm:$0xff]
    %v524 = vld [vmem:[#allocation5 + $0xb70] sm:$0xff]
    %v525 = vld [vmem:[#allocation5 + $0xb78] sm:$0xff]
    %v526 = vld [vmem:[#allocation5 + $0xb80] sm:$0xff]
    %v527 = vld [vmem:[#allocation5 + $0xb88] sm:$0xff]
    %v528 = vld [vmem:[#allocation5 + $0xb90] sm:$0xff]
    %v529 = vld [vmem:[#allocation5 + $0xb98] sm:$0xff]
    %v530 = vld [vmem:[#allocation5 + $0xba0] sm:$0xff]
    %v531 = vld [vmem:[#allocation5 + $0xba8] sm:$0xff]
    %v532 = vld [vmem:[#allocation5 + $0xbb0] sm:$0xff]
    %v533 = vld [vmem:[#allocation5 + $0xbb8] sm:$0xff]
    %v534 = vld [vmem:[#allocation5 + $0xbc0] sm:$0xff]
    %v535 = vld [vmem:[#allocation5 + $0xbc8] sm:$0xff]
    %v536 = vld [vmem:[#allocation5 + $0xbd0] sm:$0xff]
    %v537 = vld [vmem:[#allocation5 + $0xbd8] sm:$0xff]
    %v538 = vld [vmem:[#allocation5 + $0xbe0] sm:$0xff]
    %v539 = vld [vmem:[#allocation5 + $0xbe8] sm:$0xff]
    %v540 = vld [vmem:[#allocation5 + $0xbf0] sm:$0xff]
    %v541 = vld [vmem:[#allocation5 + $0xbf8] sm:$0xff]
    %v542 = vld [vmem:[#allocation5 + $0xc00] sm:$0xff]
    %v543 = vld [vmem:[#allocation5 + $0xc08] sm:$0xff]
    %v544 = vld [vmem:[#allocation5 + $0xc10] sm:$0xff]
    %v545 = vld [vmem:[#allocation5 + $0xc18] sm:$0xff]
    %v546 = vld [vmem:[#allocation5 + $0xc20] sm:$0xff]
    %v547 = vld [vmem:[#allocation5 + $0xc28] sm:$0xff]
    %v548 = vld [vmem:[#allocation5 + $0xc30] sm:$0xff]
    %v549 = vld [vmem:[#allocation5 + $0xc38] sm:$0xff]
    %v550 = vld [vmem:[#allocation5 + $0xc40] sm:$0xff]
    %v551 = vld [vmem:[#allocation5 + $0xc48] sm:$0xff]
    %v552 = vld [vmem:[#allocation5 + $0xc50] sm:$0xff]
    %v553 = vld [vmem:[#allocation5 + $0xc58] sm:$0xff]
    %v554 = vld [vmem:[#allocation5 + $0xc60] sm:$0xff]
    %v555 = vld [vmem:[#allocation5 + $0xc68] sm:$0xff]
    %v556 = vld [vmem:[#allocation5 + $0xc70] sm:$0xff]
    %v557 = vld [vmem:[#allocation5 + $0xc78] sm:$0xff]
    %v558 = vld [vmem:[#allocation5 + $0xc80] sm:$0xff]
    %v559 = vld [vmem:[#allocation5 + $0xc88] sm:$0xff]
    %v560 = vld [vmem:[#allocation5 + $0xc90] sm:$0xff]
    %v561 = vld [vmem:[#allocation5 + $0xc98] sm:$0xff]
    %v562 = vld [vmem:[#allocation5 + $0xca0] sm:$0xff]
    %v563 = vld [vmem:[#allocation5 + $0xca8] sm:$0xff]
    %v564 = vld [vmem:[#allocation5 + $0xcb0] sm:$0xff]
    %v565 = vld [vmem:[#allocation5 + $0xcb8] sm:$0xff]
    %v566 = vld [vmem:[#allocation5 + $0xcc0] sm:$0xff]
    %v567 = vld [vmem:[#allocation5 + $0xcc8] sm:$0xff]
    %v568 = vld [vmem:[#allocation5 + $0xcd0] sm:$0xff]
    %v569 = vld [vmem:[#allocation5 + $0xcd8] sm:$0xff]
    %v570 = vld [vmem:[#allocation5 + $0xce0] sm:$0xff]
    %v571 = vld [vmem:[#allocation5 + $0xce8] sm:$0xff]
    %v572 = vld [vmem:[#allocation5 + $0xcf0] sm:$0xff]
    %v573 = vld [vmem:[#allocation5 + $0xcf8] sm:$0xff]
    %v574 = vld [vmem:[#allocation5 + $0xd00] sm:$0xff]
    %v575 = vld [vmem:[#allocation5 + $0xd08] sm:$0xff]
    %v576 = vld [vmem:[#allocation5 + $0xd10] sm:$0xff]
    %v577 = vld [vmem:[#allocation5 + $0xd18] sm:$0xff]
    %v578 = vld [vmem:[#allocation5 + $0xd20] sm:$0xff]
    %v579 = vld [vmem:[#allocation5 + $0xd28] sm:$0xff]
    %v580 = vld [vmem:[#allocation5 + $0xd30] sm:$0xff]
    %v581 = vld [vmem:[#allocation5 + $0xd38] sm:$0xff]
    %v582 = vld [vmem:[#allocation5 + $0xd40] sm:$0xff]
    %v583 = vld [vmem:[#allocation5 + $0xd48] sm:$0xff]
    %v584 = vld [vmem:[#allocation5 + $0xd50] sm:$0xff]
    %v585 = vld [vmem:[#allocation5 + $0xd58] sm:$0xff]
    %v586 = vld [vmem:[#allocation5 + $0xd60] sm:$0xff]
    %v587 = vld [vmem:[#allocation5 + $0xd68] sm:$0xff]
    %v588 = vld [vmem:[#allocation5 + $0xd70] sm:$0xff]
    %v589 = vld [vmem:[#allocation5 + $0xd78] sm:$0xff]
    %v590 = vld [vmem:[#allocation5 + $0xd80] sm:$0xff]
    %v591 = vld [vmem:[#allocation5 + $0xd88] sm:$0xff]
    %v592 = vld [vmem:[#allocation5 + $0xd90] sm:$0xff]
    %v593 = vld [vmem:[#allocation5 + $0xd98] sm:$0xff]
    %v594 = vld [vmem:[#allocation5 + $0xda0] sm:$0xff]
    %v595 = vld [vmem:[#allocation5 + $0xda8] sm:$0xff]
    %v596 = vld [vmem:[#allocation5 + $0xdb0] sm:$0xff]
    %v597 = vld [vmem:[#allocation5 + $0xdb8] sm:$0xff]
    %v598 = vld [vmem:[#allocation5 + $0xdc0] sm:$0xff]
    %v599 = vld [vmem:[#allocation5 + $0xdc8] sm:$0xff]
    %v600 = vld [vmem:[#allocation5 + $0xdd0] sm:$0xff]
    %v601 = vld [vmem:[#allocation5 + $0xdd8] sm:$0xff]
    %v602 = vld [vmem:[#allocation5 + $0xde0] sm:$0xff]
    %v603 = vld [vmem:[#allocation5 + $0xde8] sm:$0xff]
    %v604 = vld [vmem:[#allocation5 + $0xdf0] sm:$0xff]
    %v605 = vld [vmem:[#allocation5 + $0xdf8] sm:$0xff]
    %v606 = vld [vmem:[#allocation5 + $0xe00] sm:$0xff]
    %v607 = vld [vmem:[#allocation5 + $0xe08] sm:$0xff]
    %v608 = vld [vmem:[#allocation5 + $0xe10] sm:$0xff]
    %v609 = vld [vmem:[#allocation5 + $0xe18] sm:$0xff]
    %v610 = vld [vmem:[#allocation5 + $0xe20] sm:$0xff]
    %v611 = vld [vmem:[#allocation5 + $0xe28] sm:$0xff]
    %v612 = vld [vmem:[#allocation5 + $0xe30] sm:$0xff]
    %v613 = vld [vmem:[#allocation5 + $0xe38] sm:$0xff]
    %v614 = vld [vmem:[#allocation5 + $0xe40] sm:$0xff]
    %v615 = vld [vmem:[#allocation5 + $0xe48] sm:$0xff]
    %v616 = vld [vmem:[#allocation5 + $0xe50] sm:$0xff]
    %v617 = vld [vmem:[#allocation5 + $0xe58] sm:$0xff]
    %v618 = vld [vmem:[#allocation5 + $0xe60] sm:$0xff]
    %v619 = vld [vmem:[#allocation5 + $0xe68] sm:$0xff]
    %v620 = vld [vmem:[#allocation5 + $0xe70] sm:$0xff]
    %v621 = vld [vmem:[#allocation5 + $0xe78] sm:$0xff]
    %v622 = vld [vmem:[#allocation5 + $0xe80] sm:$0xff]
    %v623 = vld [vmem:[#allocation5 + $0xe88] sm:$0xff]
    %v624 = vld [vmem:[#allocation5 + $0xe90] sm:$0xff]
    %v625 = vld [vmem:[#allocation5 + $0xe98] sm:$0xff]
    %v626 = vld [vmem:[#allocation5 + $0xea0] sm:$0xff]
    %v627 = vld [vmem:[#allocation5 + $0xea8] sm:$0xff]
    %v628 = vld [vmem:[#allocation5 + $0xeb0] sm:$0xff]
    %v629 = vld [vmem:[#allocation5 + $0xeb8] sm:$0xff]
    %v630 = vld [vmem:[#allocation5 + $0xec0] sm:$0xff]
    %v631 = vld [vmem:[#allocation5 + $0xec8] sm:$0xff]
    %v632 = vld [vmem:[#allocation5 + $0xed0] sm:$0xff]
    %v633 = vld [vmem:[#allocation5 + $0xed8] sm:$0xff]
    %v634 = vld [vmem:[#allocation5 + $0xee0] sm:$0xff]
    %v635 = vld [vmem:[#allocation5 + $0xee8] sm:$0xff]
    %v636 = vld [vmem:[#allocation5 + $0xef0] sm:$0xff]
    %v637 = vld [vmem:[#allocation5 + $0xef8] sm:$0xff]
    %v638 = vld [vmem:[#allocation5 + $0xf00] sm:$0xff]
    %v639 = vld [vmem:[#allocation5 + $0xf08] sm:$0xff]
    %v640 = vld [vmem:[#allocation5 + $0xf10] sm:$0xff]
    %v641 = vld [vmem:[#allocation5 + $0xf18] sm:$0xff]
    %v642 = vld [vmem:[#allocation5 + $0xf20] sm:$0xff]
    %v643 = vld [vmem:[#allocation5 + $0xf28] sm:$0xff]
    %v644 = vld [vmem:[#allocation5 + $0xf30] sm:$0xff]
    %v645 = vld [vmem:[#allocation5 + $0xf38] sm:$0xff]
    %v646 = vld [vmem:[#allocation5 + $0xf40] sm:$0xff]
    %v647 = vld [vmem:[#allocation5 + $0xf48] sm:$0xff]
    %v648 = vld [vmem:[#allocation5 + $0xf50] sm:$0xff]
    %v649 = vld [vmem:[#allocation5 + $0xf58] sm:$0xff]
    %v650 = vld [vmem:[#allocation5 + $0xf60] sm:$0xff]
    %v651 = vld [vmem:[#allocation5 + $0xf68] sm:$0xff]
    %v652 = vld [vmem:[#allocation5 + $0xf70] sm:$0xff]
    %v653 = vld [vmem:[#allocation5 + $0xf78] sm:$0xff]
    %v654 = vld [vmem:[#allocation5 + $0xf80] sm:$0xff]
    %v655 = vld [vmem:[#allocation5 + $0xf88] sm:$0xff]
    %v656 = vld [vmem:[#allocation5 + $0xf90] sm:$0xff]
    %v657 = vld [vmem:[#allocation5 + $0xf98] sm:$0xff]
    %v658 = vld [vmem:[#allocation5 + $0xfa0] sm:$0xff]
    %v659 = vld [vmem:[#allocation5 + $0xfa8] sm:$0xff]
    %v660 = vld [vmem:[#allocation5 + $0xfb0] sm:$0xff]
    %v661 = vld [vmem:[#allocation5 + $0xfb8] sm:$0xff]
    %v662 = vld [vmem:[#allocation5 + $0xfc0] sm:$0xff]
    %v663 = vld [vmem:[#allocation5 + $0xfc8] sm:$0xff]
    %v664 = vld [vmem:[#allocation5 + $0xfd0] sm:$0xff]
    %v665 = vld [vmem:[#allocation5 + $0xfd8] sm:$0xff]
    %v666 = vld [vmem:[#allocation5 + $0xfe0] sm:$0xff]
    %v667 = vld [vmem:[#allocation5 + $0xfe8] sm:$0xff]
    %v668 = vld [vmem:[#allocation5 + $0xff0] sm:$0xff]
    %v669 = vld [vmem:[#allocation5 + $0xff8] sm:$0xff]
    %v670 = vld [vmem:[#allocation5 + $0x1000] sm:$0xff]
    %v671 = vld [vmem:[#allocation5 + $0x1008] sm:$0xff]
    %v672 = vld [vmem:[#allocation5 + $0x1010] sm:$0xff]
    %v673 = vld [vmem:[#allocation5 + $0x1018] sm:$0xff]
    %v674 = vld [vmem:[#allocation5 + $0x1020] sm:$0xff]
    %v675 = vld [vmem:[#allocation5 + $0x1028] sm:$0xff]
    %v676 = vld [vmem:[#allocation5 + $0x1030] sm:$0xff]
    %v677 = vld [vmem:[#allocation5 + $0x1038] sm:$0xff]
    %v678 = vld [vmem:[#allocation5 + $0x1040] sm:$0xff]
    %v679 = vld [vmem:[#allocation5 + $0x1048] sm:$0xff]
    %v680 = vld [vmem:[#allocation5 + $0x1050] sm:$0xff]
    %v681 = vld [vmem:[#allocation5 + $0x1058] sm:$0xff]
    %v682 = vld [vmem:[#allocation5 + $0x1060] sm:$0xff]
    %v683 = vld [vmem:[#allocation5 + $0x1068] sm:$0xff]
    %v684 = vld [vmem:[#allocation5 + $0x1070] sm:$0xff]
    %v685 = vld [vmem:[#allocation5 + $0x1078] sm:$0xff]
    %v686 = vld [vmem:[#allocation5 + $0x1080] sm:$0xff]
    %v687 = vld [vmem:[#allocation5 + $0x1088] sm:$0xff]
    %v688 = vld [vmem:[#allocation5 + $0x1090] sm:$0xff]
    %v689 = vld [vmem:[#allocation5 + $0x1098] sm:$0xff]
    %v690 = vld [vmem:[#allocation5 + $0x10a0] sm:$0xff]
    %v691 = vld [vmem:[#allocation5 + $0x10a8] sm:$0xff]
    %v692 = vld [vmem:[#allocation5 + $0x10b0] sm:$0xff]
    %v693 = vld [vmem:[#allocation5 + $0x10b8] sm:$0xff]
    %v694 = vld [vmem:[#allocation5 + $0x10c0] sm:$0xff]
    %v695 = vld [vmem:[#allocation5 + $0x10c8] sm:$0xff]
    %v696 = vld [vmem:[#allocation5 + $0x10d0] sm:$0xff]
    %v697 = vld [vmem:[#allocation5 + $0x10d8] sm:$0xff]
    %v698 = vld [vmem:[#allocation5 + $0x10e0] sm:$0xff]
    %v699 = vld [vmem:[#allocation5 + $0x10e8] sm:$0xff]
    %v700 = vld [vmem:[#allocation5 + $0x10f0] sm:$0xff]
    %v701 = vld [vmem:[#allocation5 + $0x10f8] sm:$0xff]
    %v702 = vld [vmem:[#allocation5 + $0x1100] sm:$0xff]
    %v703 = vld [vmem:[#allocation5 + $0x1108] sm:$0xff]
    %v704 = vld [vmem:[#allocation5 + $0x1110] sm:$0xff]
    %v705 = vld [vmem:[#allocation5 + $0x1118] sm:$0xff]
    %v706 = vld [vmem:[#allocation5 + $0x1120] sm:$0xff]
    %v707 = vld [vmem:[#allocation5 + $0x1128] sm:$0xff]
    %v708 = vld [vmem:[#allocation5 + $0x1130] sm:$0xff]
    %v709 = vld [vmem:[#allocation5 + $0x1138] sm:$0xff]
    %v710 = vld [vmem:[#allocation5 + $0x1140] sm:$0xff]
    %v711 = vld [vmem:[#allocation5 + $0x1148] sm:$0xff]
    %v712 = vld [vmem:[#allocation5 + $0x1150] sm:$0xff]
    %v713 = vld [vmem:[#allocation5 + $0x1158] sm:$0xff]
    %v714 = vld [vmem:[#allocation5 + $0x1160] sm:$0xff]
    %v715 = vld [vmem:[#allocation5 + $0x1168] sm:$0xff]
    %v716 = vld [vmem:[#allocation5 + $0x1170] sm:$0xff]
    %v717 = vld [vmem:[#allocation5 + $0x1178] sm:$0xff]
    %v718 = vld [vmem:[#allocation5 + $0x1180] sm:$0xff]
    %v719 = vld [vmem:[#allocation5 + $0x1188] sm:$0xff]
    %v720 = vld [vmem:[#allocation5 + $0x1190] sm:$0xff]
    %v721 = vld [vmem:[#allocation5 + $0x1198] sm:$0xff]
    %v722 = vld [vmem:[#allocation5 + $0x11a0] sm:$0xff]
    %v723 = vld [vmem:[#allocation5 + $0x11a8] sm:$0xff]
    %v724 = vld [vmem:[#allocation5 + $0x11b0] sm:$0xff]
    %v725 = vld [vmem:[#allocation5 + $0x11b8] sm:$0xff]
    %v726 = vld [vmem:[#allocation5 + $0x11c0] sm:$0xff]
    %v727 = vld [vmem:[#allocation5 + $0x11c8] sm:$0xff]
    %v728 = vld [vmem:[#allocation5 + $0x11d0] sm:$0xff]
    %v729 = vld [vmem:[#allocation5 + $0x11d8] sm:$0xff]
    %v730 = vld [vmem:[#allocation5 + $0x11e0] sm:$0xff]
    %v731 = vld [vmem:[#allocation5 + $0x11e8] sm:$0xff]
    %v732 = vld [vmem:[#allocation5 + $0x11f0] sm:$0xff]
    %v733 = vld [vmem:[#allocation5 + $0x11f8] sm:$0xff]
    %v734 = vld [vmem:[#allocation5 + $0x1200] sm:$0xff]
    %v735 = vld [vmem:[#allocation5 + $0x1208] sm:$0xff]
    %v736 = vld [vmem:[#allocation5 + $0x1210] sm:$0xff]
    %v737 = vld [vmem:[#allocation5 + $0x1218] sm:$0xff]
    %v738 = vld [vmem:[#allocation5 + $0x1220] sm:$0xff]
    %v739 = vld [vmem:[#allocation5 + $0x1228] sm:$0xff]
    %v740 = vld [vmem:[#allocation5 + $0x1230] sm:$0xff]
    %v741 = vld [vmem:[#allocation5 + $0x1238] sm:$0xff]
    %v742 = vld [vmem:[#allocation5 + $0x1240] sm:$0xff]
    %v743 = vld [vmem:[#allocation5 + $0x1248] sm:$0xff]
    %v744 = vld [vmem:[#allocation5 + $0x1250] sm:$0xff]
    %v745 = vld [vmem:[#allocation5 + $0x1258] sm:$0xff]
    %v746 = vld [vmem:[#allocation5 + $0x1260] sm:$0xff]
    %v747 = vld [vmem:[#allocation5 + $0x1268] sm:$0xff]
    %v748 = vld [vmem:[#allocation5 + $0x1270] sm:$0xff]
    %v749 = vld [vmem:[#allocation5 + $0x1278] sm:$0xff]
    %v750 = vld [vmem:[#allocation5 + $0x1280] sm:$0xff]
    %v751 = vld [vmem:[#allocation5 + $0x1288] sm:$0xff]
    %v752 = vld [vmem:[#allocation5 + $0x1290] sm:$0xff]
    %v753 = vld [vmem:[#allocation5 + $0x1298] sm:$0xff]
    %v754 = vld [vmem:[#allocation5 + $0x12a0] sm:$0xff]
    %v755 = vld [vmem:[#allocation5 + $0x12a8] sm:$0xff]
    %v756 = vld [vmem:[#allocation5 + $0x12b0] sm:$0xff]
    %v757 = vld [vmem:[#allocation5 + $0x12b8] sm:$0xff]
    %v758 = vld [vmem:[#allocation5 + $0x12c0] sm:$0xff]
    %v759 = vld [vmem:[#allocation5 + $0x12c8] sm:$0xff]
    %v760 = vld [vmem:[#allocation5 + $0x12d0] sm:$0xff]
    %v761 = vld [vmem:[#allocation5 + $0x12d8] sm:$0xff]
    %v762 = vld [vmem:[#allocation5 + $0x12e0] sm:$0xff]
    %v763 = vld [vmem:[#allocation5 + $0x12e8] sm:$0xff]
    %v764 = vld [vmem:[#allocation5 + $0x12f0] sm:$0xff]
    %v765 = vld [vmem:[#allocation5 + $0x12f8] sm:$0xff]
    %v766 = vld [vmem:[#allocation5 + $0x1300] sm:$0xff]
    %v767 = vld [vmem:[#allocation5 + $0x1308] sm:$0xff]
    %v768 = vld [vmem:[#allocation5 + $0x1310] sm:$0xff]
    %v769 = vld [vmem:[#allocation5 + $0x1318] sm:$0xff]
    %v770 = vld [vmem:[#allocation5 + $0x1320] sm:$0xff]
    %v771 = vld [vmem:[#allocation5 + $0x1328] sm:$0xff]
    %v772 = vld [vmem:[#allocation5 + $0x1330] sm:$0xff]
    %v773 = vld [vmem:[#allocation5 + $0x1338] sm:$0xff]
    %v774 = vld [vmem:[#allocation5 + $0x1340] sm:$0xff]
    %v775 = vld [vmem:[#allocation5 + $0x1348] sm:$0xff]
    %v776 = vld [vmem:[#allocation5 + $0x1350] sm:$0xff]
    %v777 = vld [vmem:[#allocation5 + $0x1358] sm:$0xff]
    %v778 = vld [vmem:[#allocation5 + $0x1360] sm:$0xff]
    %v779 = vld [vmem:[#allocation5 + $0x1368] sm:$0xff]
    %v780 = vld [vmem:[#allocation5 + $0x1370] sm:$0xff]
    %v781 = vld [vmem:[#allocation5 + $0x1378] sm:$0xff]
    %v782 = vld [vmem:[#allocation5 + $0x1380] sm:$0xff]
    %v783 = vld [vmem:[#allocation5 + $0x1388] sm:$0xff]
    %v784 = vld [vmem:[#allocation5 + $0x1390] sm:$0xff]
    %v785 = vld [vmem:[#allocation5 + $0x1398] sm:$0xff]
    %v786 = vld [vmem:[#allocation5 + $0x13a0] sm:$0xff]
    %v787 = vld [vmem:[#allocation5 + $0x13a8] sm:$0xff]
    %v788 = vld [vmem:[#allocation5 + $0x13b0] sm:$0xff]
    %v789 = vld [vmem:[#allocation5 + $0x13b8] sm:$0xff]
    %v790 = vld [vmem:[#allocation5 + $0x13c0] sm:$0xff]
    %v791 = vld [vmem:[#allocation5 + $0x13c8] sm:$0xff]
    %v792 = vld [vmem:[#allocation5 + $0x13d0] sm:$0xff]
    %v793 = vld [vmem:[#allocation5 + $0x13d8] sm:$0xff]
    %v794 = vld [vmem:[#allocation5 + $0x13e0] sm:$0xff]
    %v795 = vld [vmem:[#allocation5 + $0x13e8] sm:$0xff]
    %v796 = vld [vmem:[#allocation5 + $0x13f0] sm:$0xff]
    %v797 = vld [vmem:[#allocation5 + $0x13f8] sm:$0xff]
    %v798 = vld [vmem:[#allocation5 + $0x1400] sm:$0xff]
    %v799 = vld [vmem:[#allocation5 + $0x1408] sm:$0xff]
    %v800 = vld [vmem:[#allocation5 + $0x1410] sm:$0xff]
    %v801 = vld [vmem:[#allocation5 + $0x1418] sm:$0xff]
    %v802 = vld [vmem:[#allocation5 + $0x1420] sm:$0xff]
    %v803 = vld [vmem:[#allocation5 + $0x1428] sm:$0xff]
    %v804 = vld [vmem:[#allocation5 + $0x1430] sm:$0xff]
    %v805 = vld [vmem:[#allocation5 + $0x1438] sm:$0xff]
    %v806 = vld [vmem:[#allocation5 + $0x1440] sm:$0xff]
    %v807 = vld [vmem:[#allocation5 + $0x1448] sm:$0xff]
    %v808 = vld [vmem:[#allocation5 + $0x1450] sm:$0xff]
    %v809 = vld [vmem:[#allocation5 + $0x1458] sm:$0xff]
    %v810 = vld [vmem:[#allocation5 + $0x1460] sm:$0xff]
    %v811 = vld [vmem:[#allocation5 + $0x1468] sm:$0xff]
    %v812 = vld [vmem:[#allocation5 + $0x1470] sm:$0xff]
    %v813 = vld [vmem:[#allocation5 + $0x1478] sm:$0xff]
    %v814 = vld [vmem:[#allocation5 + $0x1480] sm:$0xff]
    %v815 = vld [vmem:[#allocation5 + $0x1488] sm:$0xff]
    %v816 = vld [vmem:[#allocation5 + $0x1490] sm:$0xff]
    %v817 = vld [vmem:[#allocation5 + $0x1498] sm:$0xff]
    %v818 = vld [vmem:[#allocation5 + $0x14a0] sm:$0xff]
    %v819 = vld [vmem:[#allocation5 + $0x14a8] sm:$0xff]
    %v820 = vld [vmem:[#allocation5 + $0x14b0] sm:$0xff]
    %v821 = vld [vmem:[#allocation5 + $0x14b8] sm:$0xff]
    %v822 = vld [vmem:[#allocation5 + $0x14c0] sm:$0xff]
    %v823 = vld [vmem:[#allocation5 + $0x14c8] sm:$0xff]
    %v824 = vld [vmem:[#allocation5 + $0x14d0] sm:$0xff]
    %v825 = vld [vmem:[#allocation5 + $0x14d8] sm:$0xff]
    %v826 = vld [vmem:[#allocation5 + $0x14e0] sm:$0xff]
    %v827 = vld [vmem:[#allocation5 + $0x14e8] sm:$0xff]
    %v828 = vld [vmem:[#allocation5 + $0x14f0] sm:$0xff]
    %v829 = vld [vmem:[#allocation5 + $0x14f8] sm:$0xff]
    %v830 = vld [vmem:[#allocation5 + $0x1500] sm:$0xff]
    %v831 = vld [vmem:[#allocation5 + $0x1508] sm:$0xff]
    %v832 = vld [vmem:[#allocation5 + $0x1510] sm:$0xff]
    %v833 = vld [vmem:[#allocation5 + $0x1518] sm:$0xff]
    %v834 = vld [vmem:[#allocation5 + $0x1520] sm:$0xff]
    %v835 = vld [vmem:[#allocation5 + $0x1528] sm:$0xff]
    %v836 = vld [vmem:[#allocation5 + $0x1530] sm:$0xff]
    %v837 = vld [vmem:[#allocation5 + $0x1538] sm:$0xff]
    %v838 = vld [vmem:[#allocation5 + $0x1540] sm:$0xff]
    %v839 = vld [vmem:[#allocation5 + $0x1548] sm:$0xff]
    %v840 = vld [vmem:[#allocation5 + $0x1550] sm:$0xff]
    %v841 = vld [vmem:[#allocation5 + $0x1558] sm:$0xff]
    %v842 = vld [vmem:[#allocation5 + $0x1560] sm:$0xff]
    %v843 = vld [vmem:[#allocation5 + $0x1568] sm:$0xff]
    %v844 = vld [vmem:[#allocation5 + $0x1570] sm:$0xff]
    %v845 = vld [vmem:[#allocation5 + $0x1578] sm:$0xff]
    %v846 = vld [vmem:[#allocation5 + $0x1580] sm:$0xff]
    %v847 = vld [vmem:[#allocation5 + $0x1588] sm:$0xff]
    %v848 = vld [vmem:[#allocation5 + $0x1590] sm:$0xff]
    %v849 = vld [vmem:[#allocation5 + $0x1598] sm:$0xff]
    %v850 = vld [vmem:[#allocation5 + $0x15a0] sm:$0xff]
    %v851 = vld [vmem:[#allocation5 + $0x15a8] sm:$0xff]
    %v852 = vld [vmem:[#allocation5 + $0x15b0] sm:$0xff]
    %v853 = vld [vmem:[#allocation5 + $0x15b8] sm:$0xff]
    %v854 = vld [vmem:[#allocation5 + $0x15c0] sm:$0xff]
    %v855 = vld [vmem:[#allocation5 + $0x15c8] sm:$0xff]
    %v856 = vld [vmem:[#allocation5 + $0x15d0] sm:$0xff]
    %v857 = vld [vmem:[#allocation5 + $0x15d8] sm:$0xff]
    %v858 = vld [vmem:[#allocation5 + $0x15e0] sm:$0xff]
    %v859 = vld [vmem:[#allocation5 + $0x15e8] sm:$0xff]
    %v860 = vld [vmem:[#allocation5 + $0x15f0] sm:$0xff]
    %v861 = vld [vmem:[#allocation5 + $0x15f8] sm:$0xff]
    %v862 = vld [vmem:[#allocation5 + $0x1600] sm:$0xff]
    %v863 = vld [vmem:[#allocation5 + $0x1608] sm:$0xff]
    %v864 = vld [vmem:[#allocation5 + $0x1610] sm:$0xff]
    %v865 = vld [vmem:[#allocation5 + $0x1618] sm:$0xff]
    %v866 = vld [vmem:[#allocation5 + $0x1620] sm:$0xff]
    %v867 = vld [vmem:[#allocation5 + $0x1628] sm:$0xff]
    %v868 = vld [vmem:[#allocation5 + $0x1630] sm:$0xff]
    %v869 = vld [vmem:[#allocation5 + $0x1638] sm:$0xff]
    %v870 = vld [vmem:[#allocation5 + $0x1640] sm:$0xff]
    %v871 = vld [vmem:[#allocation5 + $0x1648] sm:$0xff]
    %v872 = vld [vmem:[#allocation5 + $0x1650] sm:$0xff]
    %v873 = vld [vmem:[#allocation5 + $0x1658] sm:$0xff]
    %v874 = vld [vmem:[#allocation5 + $0x1660] sm:$0xff]
    %v875 = vld [vmem:[#allocation5 + $0x1668] sm:$0xff]
    %v876 = vld [vmem:[#allocation5 + $0x1670] sm:$0xff]
    %v877 = vld [vmem:[#allocation5 + $0x1678] sm:$0xff]
    %v878 = vld [vmem:[#allocation5 + $0x1680] sm:$0xff]
    %v879 = vld [vmem:[#allocation5 + $0x1688] sm:$0xff]
    %v880 = vld [vmem:[#allocation5 + $0x1690] sm:$0xff]
    %v881 = vld [vmem:[#allocation5 + $0x1698] sm:$0xff]
    %v882 = vld [vmem:[#allocation5 + $0x16a0] sm:$0xff]
    %v883 = vld [vmem:[#allocation5 + $0x16a8] sm:$0xff]
    %v884 = vld [vmem:[#allocation5 + $0x16b0] sm:$0xff]
    %v885 = vld [vmem:[#allocation5 + $0x16b8] sm:$0xff]
    %v886 = vld [vmem:[#allocation5 + $0x16c0] sm:$0xff]
    %v887 = vld [vmem:[#allocation5 + $0x16c8] sm:$0xff]
    %v888 = vld [vmem:[#allocation5 + $0x16d0] sm:$0xff]
    %v889 = vld [vmem:[#allocation5 + $0x16d8] sm:$0xff]
    %v890 = vld [vmem:[#allocation5 + $0x16e0] sm:$0xff]
    %v891 = vld [vmem:[#allocation5 + $0x16e8] sm:$0xff]
    %v892 = vld [vmem:[#allocation5 + $0x16f0] sm:$0xff]
    %v893 = vld [vmem:[#allocation5 + $0x16f8] sm:$0xff]
    %v894 = vld [vmem:[#allocation5 + $0x1700] sm:$0xff]
    %v895 = vld [vmem:[#allocation5 + $0x1708] sm:$0xff]
    %v896 = vld [vmem:[#allocation5 + $0x1710] sm:$0xff]
    %v897 = vld [vmem:[#allocation5 + $0x1718] sm:$0xff]
    %v898 = vld [vmem:[#allocation5 + $0x1720] sm:$0xff]
    %v899 = vld [vmem:[#allocation5 + $0x1728] sm:$0xff]
    %v900 = vld [vmem:[#allocation5 + $0x1730] sm:$0xff]
    %v901 = vld [vmem:[#allocation5 + $0x1738] sm:$0xff]
    %v902 = vld [vmem:[#allocation5 + $0x1740] sm:$0xff]
    %v903 = vld [vmem:[#allocation5 + $0x1748] sm:$0xff]
    %v904 = vld [vmem:[#allocation5 + $0x1750] sm:$0xff]
    %v905 = vld [vmem:[#allocation5 + $0x1758] sm:$0xff]
    %v906 = vld [vmem:[#allocation5 + $0x1760] sm:$0xff]
    %v907 = vld [vmem:[#allocation5 + $0x1768] sm:$0xff]
    %v908 = vld [vmem:[#allocation5 + $0x1770] sm:$0xff]
    %v909 = vld [vmem:[#allocation5 + $0x1778] sm:$0xff]
    %v910 = vld [vmem:[#allocation5 + $0x1780] sm:$0xff]
    %v911 = vld [vmem:[#allocation5 + $0x1788] sm:$0xff]
    %v912 = vld [vmem:[#allocation5 + $0x1790] sm:$0xff]
    %v913 = vld [vmem:[#allocation5 + $0x1798] sm:$0xff]
    %v914 = vld [vmem:[#allocation5 + $0x17a0] sm:$0xff]
    %v915 = vld [vmem:[#allocation5 + $0x17a8] sm:$0xff]
    %v916 = vld [vmem:[#allocation5 + $0x17b0] sm:$0xff]
    %v917 = vld [vmem:[#allocation5 + $0x17b8] sm:$0xff]
    %v918 = vld [vmem:[#allocation5 + $0x17c0] sm:$0xff]
    %v919 = vld [vmem:[#allocation5 + $0x17c8] sm:$0xff]
    %v920 = vld [vmem:[#allocation5 + $0x17d0] sm:$0xff]
    %v921 = vld [vmem:[#allocation5 + $0x17d8] sm:$0xff]
    %v922 = vld [vmem:[#allocation5 + $0x17e0] sm:$0xff]
    %v923 = vld [vmem:[#allocation5 + $0x17e8] sm:$0xff]
    %v924 = vld [vmem:[#allocation5 + $0x17f0] sm:$0xff]
    %v925 = vld [vmem:[#allocation5 + $0x17f8] sm:$0xff]
    %v926 = vld [vmem:[#allocation7] sm:$0xf]
    %v928 = vlaneseq
    %v929 = vshrl.u32 %v928, 7
    %v930 = vsub.s32 0, %v929
    %v931 = vrot.slane %v926, %v930
    %v932 = vlaneseq
    %v933 = vshrl.u32 %v932, 7
    %v934 = vsub.s32 1, %v933
    %v935 = vrot.slane %v926, %v934
    %v936 = vlaneseq
    %v937 = vshrl.u32 %v936, 7
    %v938 = vsub.s32 2, %v937
    %v939 = vrot.slane %v926, %v938
    %v940 = vlaneseq
    %v941 = vshrl.u32 %v940, 7
    %v942 = vsub.s32 3, %v941
    %v943 = vrot.slane %v926, %v942
    %v1716 = vunpack.c.l.b16 %v158
    %v1717 = vunpack.c.h.b16 %v158
    %v1718 = vunpack.c.l.b16 %v159
    %v1719 = vunpack.c.h.b16 %v159
    %v1720 = vunpack.c.l.b16 %v160
    %v1721 = vunpack.c.h.b16 %v160
    %v1722 = vunpack.c.l.b16 %v161
    %v1723 = vunpack.c.h.b16 %v161
    %v1724 = vunpack.c.l.b16 %v162
    %v1725 = vunpack.c.h.b16 %v162
    %v1726 = vunpack.c.l.b16 %v163
    %v1727 = vunpack.c.h.b16 %v163
    %v1728 = vunpack.c.l.b16 %v164
    %v1729 = vunpack.c.h.b16 %v164
    %v1730 = vunpack.c.l.b16 %v165
    %v1731 = vunpack.c.h.b16 %v165
    %v1732 = vunpack.c.l.b16 %v166
    %v1733 = vunpack.c.h.b16 %v166
    %v1734 = vunpack.c.l.b16 %v167
    %v1735 = vunpack.c.h.b16 %v167
    %v1736 = vunpack.c.l.b16 %v168
    %v1737 = vunpack.c.h.b16 %v168
    %v1738 = vunpack.c.l.b16 %v169
    %v1739 = vunpack.c.h.b16 %v169
    %v1740 = vunpack.c.l.b16 %v170
    %v1741 = vunpack.c.h.b16 %v170
    %v1742 = vunpack.c.l.b16 %v171
    %v1743 = vunpack.c.h.b16 %v171
    %v1744 = vunpack.c.l.b16 %v172
    %v1745 = vunpack.c.h.b16 %v172
    %v1746 = vunpack.c.l.b16 %v173
    %v1747 = vunpack.c.h.b16 %v173
    %v1748 = vunpack.c.l.b16 %v174
    %v1749 = vunpack.c.h.b16 %v174
    %v1750 = vunpack.c.l.b16 %v175
    %v1751 = vunpack.c.h.b16 %v175
    %v1752 = vunpack.c.l.b16 %v176
    %v1753 = vunpack.c.h.b16 %v176
    %v1754 = vunpack.c.l.b16 %v177
    %v1755 = vunpack.c.h.b16 %v177
    %v1756 = vunpack.c.l.b16 %v178
    %v1757 = vunpack.c.h.b16 %v178
    %v1758 = vunpack.c.l.b16 %v179
    %v1759 = vunpack.c.h.b16 %v179
    %v1760 = vunpack.c.l.b16 %v180
    %v1761 = vunpack.c.h.b16 %v180
    %v1762 = vunpack.c.l.b16 %v181
    %v1763 = vunpack.c.h.b16 %v181
    %v1764 = vunpack.c.l.b16 %v182
    %v1765 = vunpack.c.h.b16 %v182
    %v1766 = vunpack.c.l.b16 %v183
    %v1767 = vunpack.c.h.b16 %v183
    %v1768 = vunpack.c.l.b16 %v184
    %v1769 = vunpack.c.h.b16 %v184
    %v1770 = vunpack.c.l.b16 %v185
    %v1771 = vunpack.c.h.b16 %v185
    %v1772 = vunpack.c.l.b16 %v186
    %v1773 = vunpack.c.h.b16 %v186
    %v1774 = vunpack.c.l.b16 %v187
    %v1775 = vunpack.c.h.b16 %v187
    %v1776 = vunpack.c.l.b16 %v188
    %v1777 = vunpack.c.h.b16 %v188
    %v1778 = vunpack.c.l.b16 %v189
    %v1779 = vunpack.c.h.b16 %v189
    %v1780 = vunpack.c.l.b16 %v190
    %v1781 = vunpack.c.h.b16 %v190
    %v1782 = vunpack.c.l.b16 %v191
    %v1783 = vunpack.c.h.b16 %v191
    %v1784 = vunpack.c.l.b16 %v192
    %v1785 = vunpack.c.h.b16 %v192
    %v1786 = vunpack.c.l.b16 %v193
    %v1787 = vunpack.c.h.b16 %v193
    %v1788 = vunpack.c.l.b16 %v194
    %v1789 = vunpack.c.h.b16 %v194
    %v1790 = vunpack.c.l.b16 %v195
    %v1791 = vunpack.c.h.b16 %v195
    %v1792 = vunpack.c.l.b16 %v196
    %v1793 = vunpack.c.h.b16 %v196
    %v1794 = vunpack.c.l.b16 %v197
    %v1795 = vunpack.c.h.b16 %v197
    %v1796 = vunpack.c.l.b16 %v198
    %v1797 = vunpack.c.h.b16 %v198
    %v1798 = vunpack.c.l.b16 %v199
    %v1799 = vunpack.c.h.b16 %v199
    %v1800 = vunpack.c.l.b16 %v200
    %v1801 = vunpack.c.h.b16 %v200
    %v1802 = vunpack.c.l.b16 %v201
    %v1803 = vunpack.c.h.b16 %v201
    %v1804 = vunpack.c.l.b16 %v202
    %v1805 = vunpack.c.h.b16 %v202
    %v1806 = vunpack.c.l.b16 %v203
    %v1807 = vunpack.c.h.b16 %v203
    %v1808 = vunpack.c.l.b16 %v204
    %v1809 = vunpack.c.h.b16 %v204
    %v1810 = vunpack.c.l.b16 %v205
    %v1811 = vunpack.c.h.b16 %v205
    %v1812 = vunpack.c.l.b16 %v206
    %v1813 = vunpack.c.h.b16 %v206
    %v1814 = vunpack.c.l.b16 %v207
    %v1815 = vunpack.c.h.b16 %v207
    %v1816 = vunpack.c.l.b16 %v208
    %v1817 = vunpack.c.h.b16 %v208
    %v1818 = vunpack.c.l.b16 %v209
    %v1819 = vunpack.c.h.b16 %v209
    %v1820 = vunpack.c.l.b16 %v210
    %v1821 = vunpack.c.h.b16 %v210
    %v1822 = vunpack.c.l.b16 %v211
    %v1823 = vunpack.c.h.b16 %v211
    %v1824 = vunpack.c.l.b16 %v212
    %v1825 = vunpack.c.h.b16 %v212
    %v1826 = vunpack.c.l.b16 %v213
    %v1827 = vunpack.c.h.b16 %v213
    %v1828 = vunpack.c.l.b16 %v214
    %v1829 = vunpack.c.h.b16 %v214
    %v1830 = vunpack.c.l.b16 %v215
    %v1831 = vunpack.c.h.b16 %v215
    %v1832 = vunpack.c.l.b16 %v216
    %v1833 = vunpack.c.h.b16 %v216
    %v1834 = vunpack.c.l.b16 %v217
    %v1835 = vunpack.c.h.b16 %v217
    %v1836 = vunpack.c.l.b16 %v218
    %v1837 = vunpack.c.h.b16 %v218
    %v1838 = vunpack.c.l.b16 %v219
    %v1839 = vunpack.c.h.b16 %v219
    %v1840 = vunpack.c.l.b16 %v220
    %v1841 = vunpack.c.h.b16 %v220
    %v1842 = vunpack.c.l.b16 %v221
    %v1843 = vunpack.c.h.b16 %v221
    %v1844 = vunpack.c.l.b16 %v222
    %v1845 = vunpack.c.h.b16 %v222
    %v1846 = vunpack.c.l.b16 %v223
    %v1847 = vunpack.c.h.b16 %v223
    %v1848 = vunpack.c.l.b16 %v224
    %v1849 = vunpack.c.h.b16 %v224
    %v1850 = vunpack.c.l.b16 %v225
    %v1851 = vunpack.c.h.b16 %v225
    %v1852 = vunpack.c.l.b16 %v226
    %v1853 = vunpack.c.h.b16 %v226
    %v1854 = vunpack.c.l.b16 %v227
    %v1855 = vunpack.c.h.b16 %v227
    %v1856 = vunpack.c.l.b16 %v228
    %v1857 = vunpack.c.h.b16 %v228
    %v1858 = vunpack.c.l.b16 %v229
    %v1859 = vunpack.c.h.b16 %v229
    %v1860 = vunpack.c.l.b16 %v230
    %v1861 = vunpack.c.h.b16 %v230
    %v1862 = vunpack.c.l.b16 %v231
    %v1863 = vunpack.c.h.b16 %v231
    %v1864 = vunpack.c.l.b16 %v232
    %v1865 = vunpack.c.h.b16 %v232
    %v1866 = vunpack.c.l.b16 %v233
    %v1867 = vunpack.c.h.b16 %v233
    %v1868 = vunpack.c.l.b16 %v234
    %v1869 = vunpack.c.h.b16 %v234
    %v1870 = vunpack.c.l.b16 %v235
    %v1871 = vunpack.c.h.b16 %v235
    %v1872 = vunpack.c.l.b16 %v236
    %v1873 = vunpack.c.h.b16 %v236
    %v1874 = vunpack.c.l.b16 %v237
    %v1875 = vunpack.c.h.b16 %v237
    %v1876 = vunpack.c.l.b16 %v238
    %v1877 = vunpack.c.h.b16 %v238
    %v1878 = vunpack.c.l.b16 %v239
    %v1879 = vunpack.c.h.b16 %v239
    %v1880 = vunpack.c.l.b16 %v240
    %v1881 = vunpack.c.h.b16 %v240
    %v1882 = vunpack.c.l.b16 %v241
    %v1883 = vunpack.c.h.b16 %v241
    %v1884 = vunpack.c.l.b16 %v242
    %v1885 = vunpack.c.h.b16 %v242
    %v1886 = vunpack.c.l.b16 %v243
    %v1887 = vunpack.c.h.b16 %v243
    %v1888 = vunpack.c.l.b16 %v244
    %v1889 = vunpack.c.h.b16 %v244
    %v1890 = vunpack.c.l.b16 %v245
    %v1891 = vunpack.c.h.b16 %v245
    %v1892 = vunpack.c.l.b16 %v246
    %v1893 = vunpack.c.h.b16 %v246
    %v1894 = vunpack.c.l.b16 %v247
    %v1895 = vunpack.c.h.b16 %v247
    %v1896 = vunpack.c.l.b16 %v248
    %v1897 = vunpack.c.h.b16 %v248
    %v1898 = vunpack.c.l.b16 %v249
    %v1899 = vunpack.c.h.b16 %v249
    %v1900 = vunpack.c.l.b16 %v250
    %v1901 = vunpack.c.h.b16 %v250
    %v1902 = vunpack.c.l.b16 %v251
    %v1903 = vunpack.c.h.b16 %v251
    %v1904 = vunpack.c.l.b16 %v252
    %v1905 = vunpack.c.h.b16 %v252
    %v1906 = vunpack.c.l.b16 %v253
    %v1907 = vunpack.c.h.b16 %v253
    %v1908 = vunpack.c.l.b16 %v254
    %v1909 = vunpack.c.h.b16 %v254
    %v1910 = vunpack.c.l.b16 %v255
    %v1911 = vunpack.c.h.b16 %v255
    %v1912 = vunpack.c.l.b16 %v256
    %v1913 = vunpack.c.h.b16 %v256
    %v1914 = vunpack.c.l.b16 %v257
    %v1915 = vunpack.c.h.b16 %v257
    %v1916 = vunpack.c.l.b16 %v258
    %v1917 = vunpack.c.h.b16 %v258
    %v1918 = vunpack.c.l.b16 %v259
    %v1919 = vunpack.c.h.b16 %v259
    %v1920 = vunpack.c.l.b16 %v260
    %v1921 = vunpack.c.h.b16 %v260
    %v1922 = vunpack.c.l.b16 %v261
    %v1923 = vunpack.c.h.b16 %v261
    %v1924 = vunpack.c.l.b16 %v262
    %v1925 = vunpack.c.h.b16 %v262
    %v1926 = vunpack.c.l.b16 %v263
    %v1927 = vunpack.c.h.b16 %v263
    %v1928 = vunpack.c.l.b16 %v264
    %v1929 = vunpack.c.h.b16 %v264
    %v1930 = vunpack.c.l.b16 %v265
    %v1931 = vunpack.c.h.b16 %v265
    %v1932 = vunpack.c.l.b16 %v266
    %v1933 = vunpack.c.h.b16 %v266
    %v1934 = vunpack.c.l.b16 %v267
    %v1935 = vunpack.c.h.b16 %v267
    %v1936 = vunpack.c.l.b16 %v268
    %v1937 = vunpack.c.h.b16 %v268
    %v1938 = vunpack.c.l.b16 %v269
    %v1939 = vunpack.c.h.b16 %v269
    %v1940 = vunpack.c.l.b16 %v270
    %v1941 = vunpack.c.h.b16 %v270
    %v1942 = vunpack.c.l.b16 %v271
    %v1943 = vunpack.c.h.b16 %v271
    %v1944 = vunpack.c.l.b16 %v272
    %v1945 = vunpack.c.h.b16 %v272
    %v1946 = vunpack.c.l.b16 %v273
    %v1947 = vunpack.c.h.b16 %v273
    %v1948 = vunpack.c.l.b16 %v274
    %v1949 = vunpack.c.h.b16 %v274
    %v1950 = vunpack.c.l.b16 %v275
    %v1951 = vunpack.c.h.b16 %v275
    %v1952 = vunpack.c.l.b16 %v276
    %v1953 = vunpack.c.h.b16 %v276
    %v1954 = vunpack.c.l.b16 %v277
    %v1955 = vunpack.c.h.b16 %v277
    %v1956 = vunpack.c.l.b16 %v278
    %v1957 = vunpack.c.h.b16 %v278
    %v1958 = vunpack.c.l.b16 %v279
    %v1959 = vunpack.c.h.b16 %v279
    %v1960 = vunpack.c.l.b16 %v280
    %v1961 = vunpack.c.h.b16 %v280
    %v1962 = vunpack.c.l.b16 %v281
    %v1963 = vunpack.c.h.b16 %v281
    %v1964 = vunpack.c.l.b16 %v282
    %v1965 = vunpack.c.h.b16 %v282
    %v1966 = vunpack.c.l.b16 %v283
    %v1967 = vunpack.c.h.b16 %v283
    %v1968 = vunpack.c.l.b16 %v284
    %v1969 = vunpack.c.h.b16 %v284
    %v1970 = vunpack.c.l.b16 %v285
    %v1971 = vunpack.c.h.b16 %v285
    %v1972 = vunpack.c.l.b16 %v286
    %v1973 = vunpack.c.h.b16 %v286
    %v1974 = vunpack.c.l.b16 %v287
    %v1975 = vunpack.c.h.b16 %v287
    %v1976 = vunpack.c.l.b16 %v288
    %v1977 = vunpack.c.h.b16 %v288
    %v1978 = vunpack.c.l.b16 %v289
    %v1979 = vunpack.c.h.b16 %v289
    %v1980 = vunpack.c.l.b16 %v290
    %v1981 = vunpack.c.h.b16 %v290
    %v1982 = vunpack.c.l.b16 %v291
    %v1983 = vunpack.c.h.b16 %v291
    %v1984 = vunpack.c.l.b16 %v292
    %v1985 = vunpack.c.h.b16 %v292
    %v1986 = vunpack.c.l.b16 %v293
    %v1987 = vunpack.c.h.b16 %v293
    %v1988 = vunpack.c.l.b16 %v294
    %v1989 = vunpack.c.h.b16 %v294
    %v1990 = vunpack.c.l.b16 %v295
    %v1991 = vunpack.c.h.b16 %v295
    %v1992 = vunpack.c.l.b16 %v296
    %v1993 = vunpack.c.h.b16 %v296
    %v1994 = vunpack.c.l.b16 %v297
    %v1995 = vunpack.c.h.b16 %v297
    %v1996 = vunpack.c.l.b16 %v298
    %v1997 = vunpack.c.h.b16 %v298
    %v1998 = vunpack.c.l.b16 %v299
    %v1999 = vunpack.c.h.b16 %v299
    %v2000 = vunpack.c.l.b16 %v300
    %v2001 = vunpack.c.h.b16 %v300
    %v2002 = vunpack.c.l.b16 %v301
    %v2003 = vunpack.c.h.b16 %v301
    %v2004 = vunpack.c.l.b16 %v302
    %v2005 = vunpack.c.h.b16 %v302
    %v2006 = vunpack.c.l.b16 %v303
    %v2007 = vunpack.c.h.b16 %v303
    %v2008 = vunpack.c.l.b16 %v304
    %v2009 = vunpack.c.h.b16 %v304
    %v2010 = vunpack.c.l.b16 %v305
    %v2011 = vunpack.c.h.b16 %v305
    %v2012 = vunpack.c.l.b16 %v306
    %v2013 = vunpack.c.h.b16 %v306
    %v2014 = vunpack.c.l.b16 %v307
    %v2015 = vunpack.c.h.b16 %v307
    %v2016 = vunpack.c.l.b16 %v308
    %v2017 = vunpack.c.h.b16 %v308
    %v2018 = vunpack.c.l.b16 %v309
    %v2019 = vunpack.c.h.b16 %v309
    %v2020 = vunpack.c.l.b16 %v310
    %v2021 = vunpack.c.h.b16 %v310
    %v2022 = vunpack.c.l.b16 %v311
    %v2023 = vunpack.c.h.b16 %v311
    %v2024 = vunpack.c.l.b16 %v312
    %v2025 = vunpack.c.h.b16 %v312
    %v2026 = vunpack.c.l.b16 %v313
    %v2027 = vunpack.c.h.b16 %v313
    %v2028 = vunpack.c.l.b16 %v314
    %v2029 = vunpack.c.h.b16 %v314
    %v2030 = vunpack.c.l.b16 %v315
    %v2031 = vunpack.c.h.b16 %v315
    %v2032 = vunpack.c.l.b16 %v316
    %v2033 = vunpack.c.h.b16 %v316
    %v2034 = vunpack.c.l.b16 %v317
    %v2035 = vunpack.c.h.b16 %v317
    %v2036 = vunpack.c.l.b16 %v318
    %v2037 = vunpack.c.h.b16 %v318
    %v2038 = vunpack.c.l.b16 %v319
    %v2039 = vunpack.c.h.b16 %v319
    %v2040 = vunpack.c.l.b16 %v320
    %v2041 = vunpack.c.h.b16 %v320
    %v2042 = vunpack.c.l.b16 %v321
    %v2043 = vunpack.c.h.b16 %v321
    %v2044 = vunpack.c.l.b16 %v322
    %v2045 = vunpack.c.h.b16 %v322
    %v2046 = vunpack.c.l.b16 %v323
    %v2047 = vunpack.c.h.b16 %v323
    %v2048 = vunpack.c.l.b16 %v324
    %v2049 = vunpack.c.h.b16 %v324
    %v2050 = vunpack.c.l.b16 %v325
    %v2051 = vunpack.c.h.b16 %v325
    %v2052 = vunpack.c.l.b16 %v326
    %v2053 = vunpack.c.h.b16 %v326
    %v2054 = vunpack.c.l.b16 %v327
    %v2055 = vunpack.c.h.b16 %v327
    %v2056 = vunpack.c.l.b16 %v328
    %v2057 = vunpack.c.h.b16 %v328
    %v2058 = vunpack.c.l.b16 %v329
    %v2059 = vunpack.c.h.b16 %v329
    %v2060 = vunpack.c.l.b16 %v330
    %v2061 = vunpack.c.h.b16 %v330
    %v2062 = vunpack.c.l.b16 %v331
    %v2063 = vunpack.c.h.b16 %v331
    %v2064 = vunpack.c.l.b16 %v332
    %v2065 = vunpack.c.h.b16 %v332
    %v2066 = vunpack.c.l.b16 %v333
    %v2067 = vunpack.c.h.b16 %v333
    %v2068 = vunpack.c.l.b16 %v334
    %v2069 = vunpack.c.h.b16 %v334
    %v2070 = vunpack.c.l.b16 %v335
    %v2071 = vunpack.c.h.b16 %v335
    %v2072 = vunpack.c.l.b16 %v336
    %v2073 = vunpack.c.h.b16 %v336
    %v2074 = vunpack.c.l.b16 %v337
    %v2075 = vunpack.c.h.b16 %v337
    %v2076 = vunpack.c.l.b16 %v338
    %v2077 = vunpack.c.h.b16 %v338
    %v2078 = vunpack.c.l.b16 %v339
    %v2079 = vunpack.c.h.b16 %v339
    %v2080 = vunpack.c.l.b16 %v340
    %v2081 = vunpack.c.h.b16 %v340
    %v2082 = vunpack.c.l.b16 %v341
    %v2083 = vunpack.c.h.b16 %v341
    %v2084 = vunpack.c.l.b16 %v342
    %v2085 = vunpack.c.h.b16 %v342
    %v2086 = vunpack.c.l.b16 %v343
    %v2087 = vunpack.c.h.b16 %v343
    %v2088 = vunpack.c.l.b16 %v344
    %v2089 = vunpack.c.h.b16 %v344
    %v2090 = vunpack.c.l.b16 %v345
    %v2091 = vunpack.c.h.b16 %v345
    %v2092 = vunpack.c.l.b16 %v346
    %v2093 = vunpack.c.h.b16 %v346
    %v2094 = vunpack.c.l.b16 %v347
    %v2095 = vunpack.c.h.b16 %v347
    %v2096 = vunpack.c.l.b16 %v348
    %v2097 = vunpack.c.h.b16 %v348
    %v2098 = vunpack.c.l.b16 %v349
    %v2099 = vunpack.c.h.b16 %v349
    %v2100 = vunpack.c.l.b16 %v350
    %v2101 = vunpack.c.h.b16 %v350
    %v2102 = vunpack.c.l.b16 %v351
    %v2103 = vunpack.c.h.b16 %v351
    %v2104 = vunpack.c.l.b16 %v352
    %v2105 = vunpack.c.h.b16 %v352
    %v2106 = vunpack.c.l.b16 %v353
    %v2107 = vunpack.c.h.b16 %v353
    %v2108 = vunpack.c.l.b16 %v354
    %v2109 = vunpack.c.h.b16 %v354
    %v2110 = vunpack.c.l.b16 %v355
    %v2111 = vunpack.c.h.b16 %v355
    %v2112 = vunpack.c.l.b16 %v356
    %v2113 = vunpack.c.h.b16 %v356
    %v2114 = vunpack.c.l.b16 %v357
    %v2115 = vunpack.c.h.b16 %v357
    %v2116 = vunpack.c.l.b16 %v358
    %v2117 = vunpack.c.h.b16 %v358
    %v2118 = vunpack.c.l.b16 %v359
    %v2119 = vunpack.c.h.b16 %v359
    %v2120 = vunpack.c.l.b16 %v360
    %v2121 = vunpack.c.h.b16 %v360
    %v2122 = vunpack.c.l.b16 %v361
    %v2123 = vunpack.c.h.b16 %v361
    %v2124 = vunpack.c.l.b16 %v362
    %v2125 = vunpack.c.h.b16 %v362
    %v2126 = vunpack.c.l.b16 %v363
    %v2127 = vunpack.c.h.b16 %v363
    %v2128 = vunpack.c.l.b16 %v364
    %v2129 = vunpack.c.h.b16 %v364
    %v2130 = vunpack.c.l.b16 %v365
    %v2131 = vunpack.c.h.b16 %v365
    %v2132 = vunpack.c.l.b16 %v366
    %v2133 = vunpack.c.h.b16 %v366
    %v2134 = vunpack.c.l.b16 %v367
    %v2135 = vunpack.c.h.b16 %v367
    %v2136 = vunpack.c.l.b16 %v368
    %v2137 = vunpack.c.h.b16 %v368
    %v2138 = vunpack.c.l.b16 %v369
    %v2139 = vunpack.c.h.b16 %v369
    %v2140 = vunpack.c.l.b16 %v370
    %v2141 = vunpack.c.h.b16 %v370
    %v2142 = vunpack.c.l.b16 %v371
    %v2143 = vunpack.c.h.b16 %v371
    %v2144 = vunpack.c.l.b16 %v372
    %v2145 = vunpack.c.h.b16 %v372
    %v2146 = vunpack.c.l.b16 %v373
    %v2147 = vunpack.c.h.b16 %v373
    %v2148 = vunpack.c.l.b16 %v374
    %v2149 = vunpack.c.h.b16 %v374
    %v2150 = vunpack.c.l.b16 %v375
    %v2151 = vunpack.c.h.b16 %v375
    %v2152 = vunpack.c.l.b16 %v376
    %v2153 = vunpack.c.h.b16 %v376
    %v2154 = vunpack.c.l.b16 %v377
    %v2155 = vunpack.c.h.b16 %v377
    %v2156 = vunpack.c.l.b16 %v378
    %v2157 = vunpack.c.h.b16 %v378
    %v2158 = vunpack.c.l.b16 %v379
    %v2159 = vunpack.c.h.b16 %v379
    %v2160 = vunpack.c.l.b16 %v380
    %v2161 = vunpack.c.h.b16 %v380
    %v2162 = vunpack.c.l.b16 %v381
    %v2163 = vunpack.c.h.b16 %v381
    %v2164 = vunpack.c.l.b16 %v382
    %v2165 = vunpack.c.h.b16 %v382
    %v2166 = vunpack.c.l.b16 %v383
    %v2167 = vunpack.c.h.b16 %v383
    %v2168 = vunpack.c.l.b16 %v384
    %v2169 = vunpack.c.h.b16 %v384
    %v2170 = vunpack.c.l.b16 %v385
    %v2171 = vunpack.c.h.b16 %v385
    %v2172 = vunpack.c.l.b16 %v386
    %v2173 = vunpack.c.h.b16 %v386
    %v2174 = vunpack.c.l.b16 %v387
    %v2175 = vunpack.c.h.b16 %v387
    %v2176 = vunpack.c.l.b16 %v388
    %v2177 = vunpack.c.h.b16 %v388
    %v2178 = vunpack.c.l.b16 %v389
    %v2179 = vunpack.c.h.b16 %v389
    %v2180 = vunpack.c.l.b16 %v390
    %v2181 = vunpack.c.h.b16 %v390
    %v2182 = vunpack.c.l.b16 %v391
    %v2183 = vunpack.c.h.b16 %v391
    %v2184 = vunpack.c.l.b16 %v392
    %v2185 = vunpack.c.h.b16 %v392
    %v2186 = vunpack.c.l.b16 %v393
    %v2187 = vunpack.c.h.b16 %v393
    %v2188 = vunpack.c.l.b16 %v394
    %v2189 = vunpack.c.h.b16 %v394
    %v2190 = vunpack.c.l.b16 %v395
    %v2191 = vunpack.c.h.b16 %v395
    %v2192 = vunpack.c.l.b16 %v396
    %v2193 = vunpack.c.h.b16 %v396
    %v2194 = vunpack.c.l.b16 %v397
    %v2195 = vunpack.c.h.b16 %v397
    %v2196 = vunpack.c.l.b16 %v398
    %v2197 = vunpack.c.h.b16 %v398
    %v2198 = vunpack.c.l.b16 %v399
    %v2199 = vunpack.c.h.b16 %v399
    %v2200 = vunpack.c.l.b16 %v400
    %v2201 = vunpack.c.h.b16 %v400
    %v2202 = vunpack.c.l.b16 %v401
    %v2203 = vunpack.c.h.b16 %v401
    %v2204 = vunpack.c.l.b16 %v402
    %v2205 = vunpack.c.h.b16 %v402
    %v2206 = vunpack.c.l.b16 %v403
    %v2207 = vunpack.c.h.b16 %v403
    %v2208 = vunpack.c.l.b16 %v404
    %v2209 = vunpack.c.h.b16 %v404
    %v2210 = vunpack.c.l.b16 %v405
    %v2211 = vunpack.c.h.b16 %v405
    %v2212 = vunpack.c.l.b16 %v406
    %v2213 = vunpack.c.h.b16 %v406
    %v2214 = vunpack.c.l.b16 %v407
    %v2215 = vunpack.c.h.b16 %v407
    %v2216 = vunpack.c.l.b16 %v408
    %v2217 = vunpack.c.h.b16 %v408
    %v2218 = vunpack.c.l.b16 %v409
    %v2219 = vunpack.c.h.b16 %v409
    %v2220 = vunpack.c.l.b16 %v410
    %v2221 = vunpack.c.h.b16 %v410
    %v2222 = vunpack.c.l.b16 %v411
    %v2223 = vunpack.c.h.b16 %v411
    %v2224 = vunpack.c.l.b16 %v412
    %v2225 = vunpack.c.h.b16 %v412
    %v2226 = vunpack.c.l.b16 %v413
    %v2227 = vunpack.c.h.b16 %v413
    %v2228 = vunpack.c.l.b16 %v414
    %v2229 = vunpack.c.h.b16 %v414
    %v2230 = vunpack.c.l.b16 %v415
    %v2231 = vunpack.c.h.b16 %v415
    %v2232 = vunpack.c.l.b16 %v416
    %v2233 = vunpack.c.h.b16 %v416
    %v2234 = vunpack.c.l.b16 %v417
    %v2235 = vunpack.c.h.b16 %v417
    %v2236 = vunpack.c.l.b16 %v418
    %v2237 = vunpack.c.h.b16 %v418
    %v2238 = vunpack.c.l.b16 %v419
    %v2239 = vunpack.c.h.b16 %v419
    %v2240 = vunpack.c.l.b16 %v420
    %v2241 = vunpack.c.h.b16 %v420
    %v2242 = vunpack.c.l.b16 %v421
    %v2243 = vunpack.c.h.b16 %v421
    %v2244 = vunpack.c.l.b16 %v422
    %v2245 = vunpack.c.h.b16 %v422
    %v2246 = vunpack.c.l.b16 %v423
    %v2247 = vunpack.c.h.b16 %v423
    %v2248 = vunpack.c.l.b16 %v424
    %v2249 = vunpack.c.h.b16 %v424
    %v2250 = vunpack.c.l.b16 %v425
    %v2251 = vunpack.c.h.b16 %v425
    %v2252 = vunpack.c.l.b16 %v426
    %v2253 = vunpack.c.h.b16 %v426
    %v2254 = vunpack.c.l.b16 %v427
    %v2255 = vunpack.c.h.b16 %v427
    %v2256 = vunpack.c.l.b16 %v428
    %v2257 = vunpack.c.h.b16 %v428
    %v2258 = vunpack.c.l.b16 %v429
    %v2259 = vunpack.c.h.b16 %v429
    %v2260 = vunpack.c.l.b16 %v430
    %v2261 = vunpack.c.h.b16 %v430
    %v2262 = vunpack.c.l.b16 %v431
    %v2263 = vunpack.c.h.b16 %v431
    %v2264 = vunpack.c.l.b16 %v432
    %v2265 = vunpack.c.h.b16 %v432
    %v2266 = vunpack.c.l.b16 %v433
    %v2267 = vunpack.c.h.b16 %v433
    %v2268 = vunpack.c.l.b16 %v434
    %v2269 = vunpack.c.h.b16 %v434
    %v2270 = vunpack.c.l.b16 %v435
    %v2271 = vunpack.c.h.b16 %v435
    %v2272 = vunpack.c.l.b16 %v436
    %v2273 = vunpack.c.h.b16 %v436
    %v2274 = vunpack.c.l.b16 %v437
    %v2275 = vunpack.c.h.b16 %v437
    %v2276 = vunpack.c.l.b16 %v438
    %v2277 = vunpack.c.h.b16 %v438
    %v2278 = vunpack.c.l.b16 %v439
    %v2279 = vunpack.c.h.b16 %v439
    %v2280 = vunpack.c.l.b16 %v440
    %v2281 = vunpack.c.h.b16 %v440
    %v2282 = vunpack.c.l.b16 %v441
    %v2283 = vunpack.c.h.b16 %v441
    %v2284 = vunpack.c.l.b16 %v442
    %v2285 = vunpack.c.h.b16 %v442
    %v2286 = vunpack.c.l.b16 %v443
    %v2287 = vunpack.c.h.b16 %v443
    %v2288 = vunpack.c.l.b16 %v444
    %v2289 = vunpack.c.h.b16 %v444
    %v2290 = vunpack.c.l.b16 %v445
    %v2291 = vunpack.c.h.b16 %v445
    %v2292 = vunpack.c.l.b16 %v446
    %v2293 = vunpack.c.h.b16 %v446
    %v2294 = vunpack.c.l.b16 %v447
    %v2295 = vunpack.c.h.b16 %v447
    %v2296 = vunpack.c.l.b16 %v448
    %v2297 = vunpack.c.h.b16 %v448
    %v2298 = vunpack.c.l.b16 %v449
    %v2299 = vunpack.c.h.b16 %v449
    %v2300 = vunpack.c.l.b16 %v450
    %v2301 = vunpack.c.h.b16 %v450
    %v2302 = vunpack.c.l.b16 %v451
    %v2303 = vunpack.c.h.b16 %v451
    %v2304 = vunpack.c.l.b16 %v452
    %v2305 = vunpack.c.h.b16 %v452
    %v2306 = vunpack.c.l.b16 %v453
    %v2307 = vunpack.c.h.b16 %v453
    %v2308 = vunpack.c.l.b16 %v454
    %v2309 = vunpack.c.h.b16 %v454
    %v2310 = vunpack.c.l.b16 %v455
    %v2311 = vunpack.c.h.b16 %v455
    %v2312 = vunpack.c.l.b16 %v456
    %v2313 = vunpack.c.h.b16 %v456
    %v2314 = vunpack.c.l.b16 %v457
    %v2315 = vunpack.c.h.b16 %v457
    %v2316 = vunpack.c.l.b16 %v458
    %v2317 = vunpack.c.h.b16 %v458
    %v2318 = vunpack.c.l.b16 %v459
    %v2319 = vunpack.c.h.b16 %v459
    %v2320 = vunpack.c.l.b16 %v460
    %v2321 = vunpack.c.h.b16 %v460
    %v2322 = vunpack.c.l.b16 %v461
    %v2323 = vunpack.c.h.b16 %v461
    %v2324 = vunpack.c.l.b16 %v462
    %v2325 = vunpack.c.h.b16 %v462
    %v2326 = vunpack.c.l.b16 %v463
    %v2327 = vunpack.c.h.b16 %v463
    %v2328 = vunpack.c.l.b16 %v464
    %v2329 = vunpack.c.h.b16 %v464
    %v2330 = vunpack.c.l.b16 %v465
    %v2331 = vunpack.c.h.b16 %v465
    %v2332 = vunpack.c.l.b16 %v466
    %v2333 = vunpack.c.h.b16 %v466
    %v2334 = vunpack.c.l.b16 %v467
    %v2335 = vunpack.c.h.b16 %v467
    %v2336 = vunpack.c.l.b16 %v468
    %v2337 = vunpack.c.h.b16 %v468
    %v2338 = vunpack.c.l.b16 %v469
    %v2339 = vunpack.c.h.b16 %v469
    %v2340 = vunpack.c.l.b16 %v470
    %v2341 = vunpack.c.h.b16 %v470
    %v2342 = vunpack.c.l.b16 %v471
    %v2343 = vunpack.c.h.b16 %v471
    %v2344 = vunpack.c.l.b16 %v472
    %v2345 = vunpack.c.h.b16 %v472
    %v2346 = vunpack.c.l.b16 %v473
    %v2347 = vunpack.c.h.b16 %v473
    %v2348 = vunpack.c.l.b16 %v474
    %v2349 = vunpack.c.h.b16 %v474
    %v2350 = vunpack.c.l.b16 %v475
    %v2351 = vunpack.c.h.b16 %v475
    %v2352 = vunpack.c.l.b16 %v476
    %v2353 = vunpack.c.h.b16 %v476
    %v2354 = vunpack.c.l.b16 %v477
    %v2355 = vunpack.c.h.b16 %v477
    %v2356 = vunpack.c.l.b16 %v478
    %v2357 = vunpack.c.h.b16 %v478
    %v2358 = vunpack.c.l.b16 %v479
    %v2359 = vunpack.c.h.b16 %v479
    %v2360 = vunpack.c.l.b16 %v480
    %v2361 = vunpack.c.h.b16 %v480
    %v2362 = vunpack.c.l.b16 %v481
    %v2363 = vunpack.c.h.b16 %v481
    %v2364 = vunpack.c.l.b16 %v482
    %v2365 = vunpack.c.h.b16 %v482
    %v2366 = vunpack.c.l.b16 %v483
    %v2367 = vunpack.c.h.b16 %v483
    %v2368 = vunpack.c.l.b16 %v484
    %v2369 = vunpack.c.h.b16 %v484
    %v2370 = vunpack.c.l.b16 %v485
    %v2371 = vunpack.c.h.b16 %v485
    %v2372 = vunpack.c.l.b16 %v486
    %v2373 = vunpack.c.h.b16 %v486
    %v2374 = vunpack.c.l.b16 %v487
    %v2375 = vunpack.c.h.b16 %v487
    %v2376 = vunpack.c.l.b16 %v488
    %v2377 = vunpack.c.h.b16 %v488
    %v2378 = vunpack.c.l.b16 %v489
    %v2379 = vunpack.c.h.b16 %v489
    %v2380 = vunpack.c.l.b16 %v490
    %v2381 = vunpack.c.h.b16 %v490
    %v2382 = vunpack.c.l.b16 %v491
    %v2383 = vunpack.c.h.b16 %v491
    %v2384 = vunpack.c.l.b16 %v492
    %v2385 = vunpack.c.h.b16 %v492
    %v2386 = vunpack.c.l.b16 %v493
    %v2387 = vunpack.c.h.b16 %v493
    %v2388 = vunpack.c.l.b16 %v494
    %v2389 = vunpack.c.h.b16 %v494
    %v2390 = vunpack.c.l.b16 %v495
    %v2391 = vunpack.c.h.b16 %v495
    %v2392 = vunpack.c.l.b16 %v496
    %v2393 = vunpack.c.h.b16 %v496
    %v2394 = vunpack.c.l.b16 %v497
    %v2395 = vunpack.c.h.b16 %v497
    %v2396 = vunpack.c.l.b16 %v498
    %v2397 = vunpack.c.h.b16 %v498
    %v2398 = vunpack.c.l.b16 %v499
    %v2399 = vunpack.c.h.b16 %v499
    %v2400 = vunpack.c.l.b16 %v500
    %v2401 = vunpack.c.h.b16 %v500
    %v2402 = vunpack.c.l.b16 %v501
    %v2403 = vunpack.c.h.b16 %v501
    %v2404 = vunpack.c.l.b16 %v502
    %v2405 = vunpack.c.h.b16 %v502
    %v2406 = vunpack.c.l.b16 %v503
    %v2407 = vunpack.c.h.b16 %v503
    %v2408 = vunpack.c.l.b16 %v504
    %v2409 = vunpack.c.h.b16 %v504
    %v2410 = vunpack.c.l.b16 %v505
    %v2411 = vunpack.c.h.b16 %v505
    %v2412 = vunpack.c.l.b16 %v506
    %v2413 = vunpack.c.h.b16 %v506
    %v2414 = vunpack.c.l.b16 %v507
    %v2415 = vunpack.c.h.b16 %v507
    %v2416 = vunpack.c.l.b16 %v508
    %v2417 = vunpack.c.h.b16 %v508
    %v2418 = vunpack.c.l.b16 %v509
    %v2419 = vunpack.c.h.b16 %v509
    %v2420 = vunpack.c.l.b16 %v510
    %v2421 = vunpack.c.h.b16 %v510
    %v2422 = vunpack.c.l.b16 %v511
    %v2423 = vunpack.c.h.b16 %v511
    %v2424 = vunpack.c.l.b16 %v512
    %v2425 = vunpack.c.h.b16 %v512
    %v2426 = vunpack.c.l.b16 %v513
    %v2427 = vunpack.c.h.b16 %v513
    %v2428 = vunpack.c.l.b16 %v514
    %v2429 = vunpack.c.h.b16 %v514
    %v2430 = vunpack.c.l.b16 %v515
    %v2431 = vunpack.c.h.b16 %v515
    %v2432 = vunpack.c.l.b16 %v516
    %v2433 = vunpack.c.h.b16 %v516
    %v2434 = vunpack.c.l.b16 %v517
    %v2435 = vunpack.c.h.b16 %v517
    %v2436 = vunpack.c.l.b16 %v518
    %v2437 = vunpack.c.h.b16 %v518
    %v2438 = vunpack.c.l.b16 %v519
    %v2439 = vunpack.c.h.b16 %v519
    %v2440 = vunpack.c.l.b16 %v520
    %v2441 = vunpack.c.h.b16 %v520
    %v2442 = vunpack.c.l.b16 %v521
    %v2443 = vunpack.c.h.b16 %v521
    %v2444 = vunpack.c.l.b16 %v522
    %v2445 = vunpack.c.h.b16 %v522
    %v2446 = vunpack.c.l.b16 %v523
    %v2447 = vunpack.c.h.b16 %v523
    %v2448 = vunpack.c.l.b16 %v524
    %v2449 = vunpack.c.h.b16 %v524
    %v2450 = vunpack.c.l.b16 %v525
    %v2451 = vunpack.c.h.b16 %v525
    %v2452 = vunpack.c.l.b16 %v526
    %v2453 = vunpack.c.h.b16 %v526
    %v2454 = vunpack.c.l.b16 %v527
    %v2455 = vunpack.c.h.b16 %v527
    %v2456 = vunpack.c.l.b16 %v528
    %v2457 = vunpack.c.h.b16 %v528
    %v2458 = vunpack.c.l.b16 %v529
    %v2459 = vunpack.c.h.b16 %v529
    %v2460 = vunpack.c.l.b16 %v530
    %v2461 = vunpack.c.h.b16 %v530
    %v2462 = vunpack.c.l.b16 %v531
    %v2463 = vunpack.c.h.b16 %v531
    %v2464 = vunpack.c.l.b16 %v532
    %v2465 = vunpack.c.h.b16 %v532
    %v2466 = vunpack.c.l.b16 %v533
    %v2467 = vunpack.c.h.b16 %v533
    %v2468 = vunpack.c.l.b16 %v534
    %v2469 = vunpack.c.h.b16 %v534
    %v2470 = vunpack.c.l.b16 %v535
    %v2471 = vunpack.c.h.b16 %v535
    %v2472 = vunpack.c.l.b16 %v536
    %v2473 = vunpack.c.h.b16 %v536
    %v2474 = vunpack.c.l.b16 %v537
    %v2475 = vunpack.c.h.b16 %v537
    %v2476 = vunpack.c.l.b16 %v538
    %v2477 = vunpack.c.h.b16 %v538
    %v2478 = vunpack.c.l.b16 %v539
    %v2479 = vunpack.c.h.b16 %v539
    %v2480 = vunpack.c.l.b16 %v540
    %v2481 = vunpack.c.h.b16 %v540
    %v2482 = vunpack.c.l.b16 %v541
    %v2483 = vunpack.c.h.b16 %v541
    %v2484 = vunpack.c.l.b16 %v542
    %v2485 = vunpack.c.h.b16 %v542
    %v2486 = vunpack.c.l.b16 %v543
    %v2487 = vunpack.c.h.b16 %v543
    %v2488 = vunpack.c.l.b16 %v544
    %v2489 = vunpack.c.h.b16 %v544
    %v2490 = vunpack.c.l.b16 %v545
    %v2491 = vunpack.c.h.b16 %v545
    %v2492 = vunpack.c.l.b16 %v546
    %v2493 = vunpack.c.h.b16 %v546
    %v2494 = vunpack.c.l.b16 %v547
    %v2495 = vunpack.c.h.b16 %v547
    %v2496 = vunpack.c.l.b16 %v548
    %v2497 = vunpack.c.h.b16 %v548
    %v2498 = vunpack.c.l.b16 %v549
    %v2499 = vunpack.c.h.b16 %v549
    %v2500 = vunpack.c.l.b16 %v550
    %v2501 = vunpack.c.h.b16 %v550
    %v2502 = vunpack.c.l.b16 %v551
    %v2503 = vunpack.c.h.b16 %v551
    %v2504 = vunpack.c.l.b16 %v552
    %v2505 = vunpack.c.h.b16 %v552
    %v2506 = vunpack.c.l.b16 %v553
    %v2507 = vunpack.c.h.b16 %v553
    %v2508 = vunpack.c.l.b16 %v554
    %v2509 = vunpack.c.h.b16 %v554
    %v2510 = vunpack.c.l.b16 %v555
    %v2511 = vunpack.c.h.b16 %v555
    %v2512 = vunpack.c.l.b16 %v556
    %v2513 = vunpack.c.h.b16 %v556
    %v2514 = vunpack.c.l.b16 %v557
    %v2515 = vunpack.c.h.b16 %v557
    %v2516 = vunpack.c.l.b16 %v558
    %v2517 = vunpack.c.h.b16 %v558
    %v2518 = vunpack.c.l.b16 %v559
    %v2519 = vunpack.c.h.b16 %v559
    %v2520 = vunpack.c.l.b16 %v560
    %v2521 = vunpack.c.h.b16 %v560
    %v2522 = vunpack.c.l.b16 %v561
    %v2523 = vunpack.c.h.b16 %v561
    %v2524 = vunpack.c.l.b16 %v562
    %v2525 = vunpack.c.h.b16 %v562
    %v2526 = vunpack.c.l.b16 %v563
    %v2527 = vunpack.c.h.b16 %v563
    %v2528 = vunpack.c.l.b16 %v564
    %v2529 = vunpack.c.h.b16 %v564
    %v2530 = vunpack.c.l.b16 %v565
    %v2531 = vunpack.c.h.b16 %v565
    %v2532 = vunpack.c.l.b16 %v566
    %v2533 = vunpack.c.h.b16 %v566
    %v2534 = vunpack.c.l.b16 %v567
    %v2535 = vunpack.c.h.b16 %v567
    %v2536 = vunpack.c.l.b16 %v568
    %v2537 = vunpack.c.h.b16 %v568
    %v2538 = vunpack.c.l.b16 %v569
    %v2539 = vunpack.c.h.b16 %v569
    %v2540 = vunpack.c.l.b16 %v570
    %v2541 = vunpack.c.h.b16 %v570
    %v2542 = vunpack.c.l.b16 %v571
    %v2543 = vunpack.c.h.b16 %v571
    %v2544 = vunpack.c.l.b16 %v572
    %v2545 = vunpack.c.h.b16 %v572
    %v2546 = vunpack.c.l.b16 %v573
    %v2547 = vunpack.c.h.b16 %v573
    %v2548 = vunpack.c.l.b16 %v574
    %v2549 = vunpack.c.h.b16 %v574
    %v2550 = vunpack.c.l.b16 %v575
    %v2551 = vunpack.c.h.b16 %v575
    %v2552 = vunpack.c.l.b16 %v576
    %v2553 = vunpack.c.h.b16 %v576
    %v2554 = vunpack.c.l.b16 %v577
    %v2555 = vunpack.c.h.b16 %v577
    %v2556 = vunpack.c.l.b16 %v578
    %v2557 = vunpack.c.h.b16 %v578
    %v2558 = vunpack.c.l.b16 %v579
    %v2559 = vunpack.c.h.b16 %v579
    %v2560 = vunpack.c.l.b16 %v580
    %v2561 = vunpack.c.h.b16 %v580
    %v2562 = vunpack.c.l.b16 %v581
    %v2563 = vunpack.c.h.b16 %v581
    %v2564 = vunpack.c.l.b16 %v582
    %v2565 = vunpack.c.h.b16 %v582
    %v2566 = vunpack.c.l.b16 %v583
    %v2567 = vunpack.c.h.b16 %v583
    %v2568 = vunpack.c.l.b16 %v584
    %v2569 = vunpack.c.h.b16 %v584
    %v2570 = vunpack.c.l.b16 %v585
    %v2571 = vunpack.c.h.b16 %v585
    %v2572 = vunpack.c.l.b16 %v586
    %v2573 = vunpack.c.h.b16 %v586
    %v2574 = vunpack.c.l.b16 %v587
    %v2575 = vunpack.c.h.b16 %v587
    %v2576 = vunpack.c.l.b16 %v588
    %v2577 = vunpack.c.h.b16 %v588
    %v2578 = vunpack.c.l.b16 %v589
    %v2579 = vunpack.c.h.b16 %v589
    %v2580 = vunpack.c.l.b16 %v590
    %v2581 = vunpack.c.h.b16 %v590
    %v2582 = vunpack.c.l.b16 %v591
    %v2583 = vunpack.c.h.b16 %v591
    %v2584 = vunpack.c.l.b16 %v592
    %v2585 = vunpack.c.h.b16 %v592
    %v2586 = vunpack.c.l.b16 %v593
    %v2587 = vunpack.c.h.b16 %v593
    %v2588 = vunpack.c.l.b16 %v594
    %v2589 = vunpack.c.h.b16 %v594
    %v2590 = vunpack.c.l.b16 %v595
    %v2591 = vunpack.c.h.b16 %v595
    %v2592 = vunpack.c.l.b16 %v596
    %v2593 = vunpack.c.h.b16 %v596
    %v2594 = vunpack.c.l.b16 %v597
    %v2595 = vunpack.c.h.b16 %v597
    %v2596 = vunpack.c.l.b16 %v598
    %v2597 = vunpack.c.h.b16 %v598
    %v2598 = vunpack.c.l.b16 %v599
    %v2599 = vunpack.c.h.b16 %v599
    %v2600 = vunpack.c.l.b16 %v600
    %v2601 = vunpack.c.h.b16 %v600
    %v2602 = vunpack.c.l.b16 %v601
    %v2603 = vunpack.c.h.b16 %v601
    %v2604 = vunpack.c.l.b16 %v602
    %v2605 = vunpack.c.h.b16 %v602
    %v2606 = vunpack.c.l.b16 %v603
    %v2607 = vunpack.c.h.b16 %v603
    %v2608 = vunpack.c.l.b16 %v604
    %v2609 = vunpack.c.h.b16 %v604
    %v2610 = vunpack.c.l.b16 %v605
    %v2611 = vunpack.c.h.b16 %v605
    %v2612 = vunpack.c.l.b16 %v606
    %v2613 = vunpack.c.h.b16 %v606
    %v2614 = vunpack.c.l.b16 %v607
    %v2615 = vunpack.c.h.b16 %v607
    %v2616 = vunpack.c.l.b16 %v608
    %v2617 = vunpack.c.h.b16 %v608
    %v2618 = vunpack.c.l.b16 %v609
    %v2619 = vunpack.c.h.b16 %v609
    %v2620 = vunpack.c.l.b16 %v610
    %v2621 = vunpack.c.h.b16 %v610
    %v2622 = vunpack.c.l.b16 %v611
    %v2623 = vunpack.c.h.b16 %v611
    %v2624 = vunpack.c.l.b16 %v612
    %v2625 = vunpack.c.h.b16 %v612
    %v2626 = vunpack.c.l.b16 %v613
    %v2627 = vunpack.c.h.b16 %v613
    %v2628 = vunpack.c.l.b16 %v614
    %v2629 = vunpack.c.h.b16 %v614
    %v2630 = vunpack.c.l.b16 %v615
    %v2631 = vunpack.c.h.b16 %v615
    %v2632 = vunpack.c.l.b16 %v616
    %v2633 = vunpack.c.h.b16 %v616
    %v2634 = vunpack.c.l.b16 %v617
    %v2635 = vunpack.c.h.b16 %v617
    %v2636 = vunpack.c.l.b16 %v618
    %v2637 = vunpack.c.h.b16 %v618
    %v2638 = vunpack.c.l.b16 %v619
    %v2639 = vunpack.c.h.b16 %v619
    %v2640 = vunpack.c.l.b16 %v620
    %v2641 = vunpack.c.h.b16 %v620
    %v2642 = vunpack.c.l.b16 %v621
    %v2643 = vunpack.c.h.b16 %v621
    %v2644 = vunpack.c.l.b16 %v622
    %v2645 = vunpack.c.h.b16 %v622
    %v2646 = vunpack.c.l.b16 %v623
    %v2647 = vunpack.c.h.b16 %v623
    %v2648 = vunpack.c.l.b16 %v624
    %v2649 = vunpack.c.h.b16 %v624
    %v2650 = vunpack.c.l.b16 %v625
    %v2651 = vunpack.c.h.b16 %v625
    %v2652 = vunpack.c.l.b16 %v626
    %v2653 = vunpack.c.h.b16 %v626
    %v2654 = vunpack.c.l.b16 %v627
    %v2655 = vunpack.c.h.b16 %v627
    %v2656 = vunpack.c.l.b16 %v628
    %v2657 = vunpack.c.h.b16 %v628
    %v2658 = vunpack.c.l.b16 %v629
    %v2659 = vunpack.c.h.b16 %v629
    %v2660 = vunpack.c.l.b16 %v630
    %v2661 = vunpack.c.h.b16 %v630
    %v2662 = vunpack.c.l.b16 %v631
    %v2663 = vunpack.c.h.b16 %v631
    %v2664 = vunpack.c.l.b16 %v632
    %v2665 = vunpack.c.h.b16 %v632
    %v2666 = vunpack.c.l.b16 %v633
    %v2667 = vunpack.c.h.b16 %v633
    %v2668 = vunpack.c.l.b16 %v634
    %v2669 = vunpack.c.h.b16 %v634
    %v2670 = vunpack.c.l.b16 %v635
    %v2671 = vunpack.c.h.b16 %v635
    %v2672 = vunpack.c.l.b16 %v636
    %v2673 = vunpack.c.h.b16 %v636
    %v2674 = vunpack.c.l.b16 %v637
    %v2675 = vunpack.c.h.b16 %v637
    %v2676 = vunpack.c.l.b16 %v638
    %v2677 = vunpack.c.h.b16 %v638
    %v2678 = vunpack.c.l.b16 %v639
    %v2679 = vunpack.c.h.b16 %v639
    %v2680 = vunpack.c.l.b16 %v640
    %v2681 = vunpack.c.h.b16 %v640
    %v2682 = vunpack.c.l.b16 %v641
    %v2683 = vunpack.c.h.b16 %v641
    %v2684 = vunpack.c.l.b16 %v642
    %v2685 = vunpack.c.h.b16 %v642
    %v2686 = vunpack.c.l.b16 %v643
    %v2687 = vunpack.c.h.b16 %v643
    %v2688 = vunpack.c.l.b16 %v644
    %v2689 = vunpack.c.h.b16 %v644
    %v2690 = vunpack.c.l.b16 %v645
    %v2691 = vunpack.c.h.b16 %v645
    %v2692 = vunpack.c.l.b16 %v646
    %v2693 = vunpack.c.h.b16 %v646
    %v2694 = vunpack.c.l.b16 %v647
    %v2695 = vunpack.c.h.b16 %v647
    %v2696 = vunpack.c.l.b16 %v648
    %v2697 = vunpack.c.h.b16 %v648
    %v2698 = vunpack.c.l.b16 %v649
    %v2699 = vunpack.c.h.b16 %v649
    %v2700 = vunpack.c.l.b16 %v650
    %v2701 = vunpack.c.h.b16 %v650
    %v2702 = vunpack.c.l.b16 %v651
    %v2703 = vunpack.c.h.b16 %v651
    %v2704 = vunpack.c.l.b16 %v652
    %v2705 = vunpack.c.h.b16 %v652
    %v2706 = vunpack.c.l.b16 %v653
    %v2707 = vunpack.c.h.b16 %v653
    %v2708 = vunpack.c.l.b16 %v654
    %v2709 = vunpack.c.h.b16 %v654
    %v2710 = vunpack.c.l.b16 %v655
    %v2711 = vunpack.c.h.b16 %v655
    %v2712 = vunpack.c.l.b16 %v656
    %v2713 = vunpack.c.h.b16 %v656
    %v2714 = vunpack.c.l.b16 %v657
    %v2715 = vunpack.c.h.b16 %v657
    %v2716 = vunpack.c.l.b16 %v658
    %v2717 = vunpack.c.h.b16 %v658
    %v2718 = vunpack.c.l.b16 %v659
    %v2719 = vunpack.c.h.b16 %v659
    %v2720 = vunpack.c.l.b16 %v660
    %v2721 = vunpack.c.h.b16 %v660
    %v2722 = vunpack.c.l.b16 %v661
    %v2723 = vunpack.c.h.b16 %v661
    %v2724 = vunpack.c.l.b16 %v662
    %v2725 = vunpack.c.h.b16 %v662
    %v2726 = vunpack.c.l.b16 %v663
    %v2727 = vunpack.c.h.b16 %v663
    %v2728 = vunpack.c.l.b16 %v664
    %v2729 = vunpack.c.h.b16 %v664
    %v2730 = vunpack.c.l.b16 %v665
    %v2731 = vunpack.c.h.b16 %v665
    %v2732 = vunpack.c.l.b16 %v666
    %v2733 = vunpack.c.h.b16 %v666
    %v2734 = vunpack.c.l.b16 %v667
    %v2735 = vunpack.c.h.b16 %v667
    %v2736 = vunpack.c.l.b16 %v668
    %v2737 = vunpack.c.h.b16 %v668
    %v2738 = vunpack.c.l.b16 %v669
    %v2739 = vunpack.c.h.b16 %v669
    %v2740 = vunpack.c.l.b16 %v670
    %v2741 = vunpack.c.h.b16 %v670
    %v2742 = vunpack.c.l.b16 %v671
    %v2743 = vunpack.c.h.b16 %v671
    %v2744 = vunpack.c.l.b16 %v672
    %v2745 = vunpack.c.h.b16 %v672
    %v2746 = vunpack.c.l.b16 %v673
    %v2747 = vunpack.c.h.b16 %v673
    %v2748 = vunpack.c.l.b16 %v674
    %v2749 = vunpack.c.h.b16 %v674
    %v2750 = vunpack.c.l.b16 %v675
    %v2751 = vunpack.c.h.b16 %v675
    %v2752 = vunpack.c.l.b16 %v676
    %v2753 = vunpack.c.h.b16 %v676
    %v2754 = vunpack.c.l.b16 %v677
    %v2755 = vunpack.c.h.b16 %v677
    %v2756 = vunpack.c.l.b16 %v678
    %v2757 = vunpack.c.h.b16 %v678
    %v2758 = vunpack.c.l.b16 %v679
    %v2759 = vunpack.c.h.b16 %v679
    %v2760 = vunpack.c.l.b16 %v680
    %v2761 = vunpack.c.h.b16 %v680
    %v2762 = vunpack.c.l.b16 %v681
    %v2763 = vunpack.c.h.b16 %v681
    %v2764 = vunpack.c.l.b16 %v682
    %v2765 = vunpack.c.h.b16 %v682
    %v2766 = vunpack.c.l.b16 %v683
    %v2767 = vunpack.c.h.b16 %v683
    %v2768 = vunpack.c.l.b16 %v684
    %v2769 = vunpack.c.h.b16 %v684
    %v2770 = vunpack.c.l.b16 %v685
    %v2771 = vunpack.c.h.b16 %v685
    %v2772 = vunpack.c.l.b16 %v686
    %v2773 = vunpack.c.h.b16 %v686
    %v2774 = vunpack.c.l.b16 %v687
    %v2775 = vunpack.c.h.b16 %v687
    %v2776 = vunpack.c.l.b16 %v688
    %v2777 = vunpack.c.h.b16 %v688
    %v2778 = vunpack.c.l.b16 %v689
    %v2779 = vunpack.c.h.b16 %v689
    %v2780 = vunpack.c.l.b16 %v690
    %v2781 = vunpack.c.h.b16 %v690
    %v2782 = vunpack.c.l.b16 %v691
    %v2783 = vunpack.c.h.b16 %v691
    %v2784 = vunpack.c.l.b16 %v692
    %v2785 = vunpack.c.h.b16 %v692
    %v2786 = vunpack.c.l.b16 %v693
    %v2787 = vunpack.c.h.b16 %v693
    %v2788 = vunpack.c.l.b16 %v694
    %v2789 = vunpack.c.h.b16 %v694
    %v2790 = vunpack.c.l.b16 %v695
    %v2791 = vunpack.c.h.b16 %v695
    %v2792 = vunpack.c.l.b16 %v696
    %v2793 = vunpack.c.h.b16 %v696
    %v2794 = vunpack.c.l.b16 %v697
    %v2795 = vunpack.c.h.b16 %v697
    %v2796 = vunpack.c.l.b16 %v698
    %v2797 = vunpack.c.h.b16 %v698
    %v2798 = vunpack.c.l.b16 %v699
    %v2799 = vunpack.c.h.b16 %v699
    %v2800 = vunpack.c.l.b16 %v700
    %v2801 = vunpack.c.h.b16 %v700
    %v2802 = vunpack.c.l.b16 %v701
    %v2803 = vunpack.c.h.b16 %v701
    %v2804 = vunpack.c.l.b16 %v702
    %v2805 = vunpack.c.h.b16 %v702
    %v2806 = vunpack.c.l.b16 %v703
    %v2807 = vunpack.c.h.b16 %v703
    %v2808 = vunpack.c.l.b16 %v704
    %v2809 = vunpack.c.h.b16 %v704
    %v2810 = vunpack.c.l.b16 %v705
    %v2811 = vunpack.c.h.b16 %v705
    %v2812 = vunpack.c.l.b16 %v706
    %v2813 = vunpack.c.h.b16 %v706
    %v2814 = vunpack.c.l.b16 %v707
    %v2815 = vunpack.c.h.b16 %v707
    %v2816 = vunpack.c.l.b16 %v708
    %v2817 = vunpack.c.h.b16 %v708
    %v2818 = vunpack.c.l.b16 %v709
    %v2819 = vunpack.c.h.b16 %v709
    %v2820 = vunpack.c.l.b16 %v710
    %v2821 = vunpack.c.h.b16 %v710
    %v2822 = vunpack.c.l.b16 %v711
    %v2823 = vunpack.c.h.b16 %v711
    %v2824 = vunpack.c.l.b16 %v712
    %v2825 = vunpack.c.h.b16 %v712
    %v2826 = vunpack.c.l.b16 %v713
    %v2827 = vunpack.c.h.b16 %v713
    %v2828 = vunpack.c.l.b16 %v714
    %v2829 = vunpack.c.h.b16 %v714
    %v2830 = vunpack.c.l.b16 %v715
    %v2831 = vunpack.c.h.b16 %v715
    %v2832 = vunpack.c.l.b16 %v716
    %v2833 = vunpack.c.h.b16 %v716
    %v2834 = vunpack.c.l.b16 %v717
    %v2835 = vunpack.c.h.b16 %v717
    %v2836 = vunpack.c.l.b16 %v718
    %v2837 = vunpack.c.h.b16 %v718
    %v2838 = vunpack.c.l.b16 %v719
    %v2839 = vunpack.c.h.b16 %v719
    %v2840 = vunpack.c.l.b16 %v720
    %v2841 = vunpack.c.h.b16 %v720
    %v2842 = vunpack.c.l.b16 %v721
    %v2843 = vunpack.c.h.b16 %v721
    %v2844 = vunpack.c.l.b16 %v722
    %v2845 = vunpack.c.h.b16 %v722
    %v2846 = vunpack.c.l.b16 %v723
    %v2847 = vunpack.c.h.b16 %v723
    %v2848 = vunpack.c.l.b16 %v724
    %v2849 = vunpack.c.h.b16 %v724
    %v2850 = vunpack.c.l.b16 %v725
    %v2851 = vunpack.c.h.b16 %v725
    %v2852 = vunpack.c.l.b16 %v726
    %v2853 = vunpack.c.h.b16 %v726
    %v2854 = vunpack.c.l.b16 %v727
    %v2855 = vunpack.c.h.b16 %v727
    %v2856 = vunpack.c.l.b16 %v728
    %v2857 = vunpack.c.h.b16 %v728
    %v2858 = vunpack.c.l.b16 %v729
    %v2859 = vunpack.c.h.b16 %v729
    %v2860 = vunpack.c.l.b16 %v730
    %v2861 = vunpack.c.h.b16 %v730
    %v2862 = vunpack.c.l.b16 %v731
    %v2863 = vunpack.c.h.b16 %v731
    %v2864 = vunpack.c.l.b16 %v732
    %v2865 = vunpack.c.h.b16 %v732
    %v2866 = vunpack.c.l.b16 %v733
    %v2867 = vunpack.c.h.b16 %v733
    %v2868 = vunpack.c.l.b16 %v734
    %v2869 = vunpack.c.h.b16 %v734
    %v2870 = vunpack.c.l.b16 %v735
    %v2871 = vunpack.c.h.b16 %v735
    %v2872 = vunpack.c.l.b16 %v736
    %v2873 = vunpack.c.h.b16 %v736
    %v2874 = vunpack.c.l.b16 %v737
    %v2875 = vunpack.c.h.b16 %v737
    %v2876 = vunpack.c.l.b16 %v738
    %v2877 = vunpack.c.h.b16 %v738
    %v2878 = vunpack.c.l.b16 %v739
    %v2879 = vunpack.c.h.b16 %v739
    %v2880 = vunpack.c.l.b16 %v740
    %v2881 = vunpack.c.h.b16 %v740
    %v2882 = vunpack.c.l.b16 %v741
    %v2883 = vunpack.c.h.b16 %v741
    %v2884 = vunpack.c.l.b16 %v742
    %v2885 = vunpack.c.h.b16 %v742
    %v2886 = vunpack.c.l.b16 %v743
    %v2887 = vunpack.c.h.b16 %v743
    %v2888 = vunpack.c.l.b16 %v744
    %v2889 = vunpack.c.h.b16 %v744
    %v2890 = vunpack.c.l.b16 %v745
    %v2891 = vunpack.c.h.b16 %v745
    %v2892 = vunpack.c.l.b16 %v746
    %v2893 = vunpack.c.h.b16 %v746
    %v2894 = vunpack.c.l.b16 %v747
    %v2895 = vunpack.c.h.b16 %v747
    %v2896 = vunpack.c.l.b16 %v748
    %v2897 = vunpack.c.h.b16 %v748
    %v2898 = vunpack.c.l.b16 %v749
    %v2899 = vunpack.c.h.b16 %v749
    %v2900 = vunpack.c.l.b16 %v750
    %v2901 = vunpack.c.h.b16 %v750
    %v2902 = vunpack.c.l.b16 %v751
    %v2903 = vunpack.c.h.b16 %v751
    %v2904 = vunpack.c.l.b16 %v752
    %v2905 = vunpack.c.h.b16 %v752
    %v2906 = vunpack.c.l.b16 %v753
    %v2907 = vunpack.c.h.b16 %v753
    %v2908 = vunpack.c.l.b16 %v754
    %v2909 = vunpack.c.h.b16 %v754
    %v2910 = vunpack.c.l.b16 %v755
    %v2911 = vunpack.c.h.b16 %v755
    %v2912 = vunpack.c.l.b16 %v756
    %v2913 = vunpack.c.h.b16 %v756
    %v2914 = vunpack.c.l.b16 %v757
    %v2915 = vunpack.c.h.b16 %v757
    %v2916 = vunpack.c.l.b16 %v758
    %v2917 = vunpack.c.h.b16 %v758
    %v2918 = vunpack.c.l.b16 %v759
    %v2919 = vunpack.c.h.b16 %v759
    %v2920 = vunpack.c.l.b16 %v760
    %v2921 = vunpack.c.h.b16 %v760
    %v2922 = vunpack.c.l.b16 %v761
    %v2923 = vunpack.c.h.b16 %v761
    %v2924 = vunpack.c.l.b16 %v762
    %v2925 = vunpack.c.h.b16 %v762
    %v2926 = vunpack.c.l.b16 %v763
    %v2927 = vunpack.c.h.b16 %v763
    %v2928 = vunpack.c.l.b16 %v764
    %v2929 = vunpack.c.h.b16 %v764
    %v2930 = vunpack.c.l.b16 %v765
    %v2931 = vunpack.c.h.b16 %v765
    %v2932 = vunpack.c.l.b16 %v766
    %v2933 = vunpack.c.h.b16 %v766
    %v2934 = vunpack.c.l.b16 %v767
    %v2935 = vunpack.c.h.b16 %v767
    %v2936 = vunpack.c.l.b16 %v768
    %v2937 = vunpack.c.h.b16 %v768
    %v2938 = vunpack.c.l.b16 %v769
    %v2939 = vunpack.c.h.b16 %v769
    %v2940 = vunpack.c.l.b16 %v770
    %v2941 = vunpack.c.h.b16 %v770
    %v2942 = vunpack.c.l.b16 %v771
    %v2943 = vunpack.c.h.b16 %v771
    %v2944 = vunpack.c.l.b16 %v772
    %v2945 = vunpack.c.h.b16 %v772
    %v2946 = vunpack.c.l.b16 %v773
    %v2947 = vunpack.c.h.b16 %v773
    %v2948 = vunpack.c.l.b16 %v774
    %v2949 = vunpack.c.h.b16 %v774
    %v2950 = vunpack.c.l.b16 %v775
    %v2951 = vunpack.c.h.b16 %v775
    %v2952 = vunpack.c.l.b16 %v776
    %v2953 = vunpack.c.h.b16 %v776
    %v2954 = vunpack.c.l.b16 %v777
    %v2955 = vunpack.c.h.b16 %v777
    %v2956 = vunpack.c.l.b16 %v778
    %v2957 = vunpack.c.h.b16 %v778
    %v2958 = vunpack.c.l.b16 %v779
    %v2959 = vunpack.c.h.b16 %v779
    %v2960 = vunpack.c.l.b16 %v780
    %v2961 = vunpack.c.h.b16 %v780
    %v2962 = vunpack.c.l.b16 %v781
    %v2963 = vunpack.c.h.b16 %v781
    %v2964 = vunpack.c.l.b16 %v782
    %v2965 = vunpack.c.h.b16 %v782
    %v2966 = vunpack.c.l.b16 %v783
    %v2967 = vunpack.c.h.b16 %v783
    %v2968 = vunpack.c.l.b16 %v784
    %v2969 = vunpack.c.h.b16 %v784
    %v2970 = vunpack.c.l.b16 %v785
    %v2971 = vunpack.c.h.b16 %v785
    %v2972 = vunpack.c.l.b16 %v786
    %v2973 = vunpack.c.h.b16 %v786
    %v2974 = vunpack.c.l.b16 %v787
    %v2975 = vunpack.c.h.b16 %v787
    %v2976 = vunpack.c.l.b16 %v788
    %v2977 = vunpack.c.h.b16 %v788
    %v2978 = vunpack.c.l.b16 %v789
    %v2979 = vunpack.c.h.b16 %v789
    %v2980 = vunpack.c.l.b16 %v790
    %v2981 = vunpack.c.h.b16 %v790
    %v2982 = vunpack.c.l.b16 %v791
    %v2983 = vunpack.c.h.b16 %v791
    %v2984 = vunpack.c.l.b16 %v792
    %v2985 = vunpack.c.h.b16 %v792
    %v2986 = vunpack.c.l.b16 %v793
    %v2987 = vunpack.c.h.b16 %v793
    %v2988 = vunpack.c.l.b16 %v794
    %v2989 = vunpack.c.h.b16 %v794
    %v2990 = vunpack.c.l.b16 %v795
    %v2991 = vunpack.c.h.b16 %v795
    %v2992 = vunpack.c.l.b16 %v796
    %v2993 = vunpack.c.h.b16 %v796
    %v2994 = vunpack.c.l.b16 %v797
    %v2995 = vunpack.c.h.b16 %v797
    %v2996 = vunpack.c.l.b16 %v798
    %v2997 = vunpack.c.h.b16 %v798
    %v2998 = vunpack.c.l.b16 %v799
    %v2999 = vunpack.c.h.b16 %v799
    %v3000 = vunpack.c.l.b16 %v800
    %v3001 = vunpack.c.h.b16 %v800
    %v3002 = vunpack.c.l.b16 %v801
    %v3003 = vunpack.c.h.b16 %v801
    %v3004 = vunpack.c.l.b16 %v802
    %v3005 = vunpack.c.h.b16 %v802
    %v3006 = vunpack.c.l.b16 %v803
    %v3007 = vunpack.c.h.b16 %v803
    %v3008 = vunpack.c.l.b16 %v804
    %v3009 = vunpack.c.h.b16 %v804
    %v3010 = vunpack.c.l.b16 %v805
    %v3011 = vunpack.c.h.b16 %v805
    %v3012 = vunpack.c.l.b16 %v806
    %v3013 = vunpack.c.h.b16 %v806
    %v3014 = vunpack.c.l.b16 %v807
    %v3015 = vunpack.c.h.b16 %v807
    %v3016 = vunpack.c.l.b16 %v808
    %v3017 = vunpack.c.h.b16 %v808
    %v3018 = vunpack.c.l.b16 %v809
    %v3019 = vunpack.c.h.b16 %v809
    %v3020 = vunpack.c.l.b16 %v810
    %v3021 = vunpack.c.h.b16 %v810
    %v3022 = vunpack.c.l.b16 %v811
    %v3023 = vunpack.c.h.b16 %v811
    %v3024 = vunpack.c.l.b16 %v812
    %v3025 = vunpack.c.h.b16 %v812
    %v3026 = vunpack.c.l.b16 %v813
    %v3027 = vunpack.c.h.b16 %v813
    %v3028 = vunpack.c.l.b16 %v814
    %v3029 = vunpack.c.h.b16 %v814
    %v3030 = vunpack.c.l.b16 %v815
    %v3031 = vunpack.c.h.b16 %v815
    %v3032 = vunpack.c.l.b16 %v816
    %v3033 = vunpack.c.h.b16 %v816
    %v3034 = vunpack.c.l.b16 %v817
    %v3035 = vunpack.c.h.b16 %v817
    %v3036 = vunpack.c.l.b16 %v818
    %v3037 = vunpack.c.h.b16 %v818
    %v3038 = vunpack.c.l.b16 %v819
    %v3039 = vunpack.c.h.b16 %v819
    %v3040 = vunpack.c.l.b16 %v820
    %v3041 = vunpack.c.h.b16 %v820
    %v3042 = vunpack.c.l.b16 %v821
    %v3043 = vunpack.c.h.b16 %v821
    %v3044 = vunpack.c.l.b16 %v822
    %v3045 = vunpack.c.h.b16 %v822
    %v3046 = vunpack.c.l.b16 %v823
    %v3047 = vunpack.c.h.b16 %v823
    %v3048 = vunpack.c.l.b16 %v824
    %v3049 = vunpack.c.h.b16 %v824
    %v3050 = vunpack.c.l.b16 %v825
    %v3051 = vunpack.c.h.b16 %v825
    %v3052 = vunpack.c.l.b16 %v826
    %v3053 = vunpack.c.h.b16 %v826
    %v3054 = vunpack.c.l.b16 %v827
    %v3055 = vunpack.c.h.b16 %v827
    %v3056 = vunpack.c.l.b16 %v828
    %v3057 = vunpack.c.h.b16 %v828
    %v3058 = vunpack.c.l.b16 %v829
    %v3059 = vunpack.c.h.b16 %v829
    %v3060 = vunpack.c.l.b16 %v830
    %v3061 = vunpack.c.h.b16 %v830
    %v3062 = vunpack.c.l.b16 %v831
    %v3063 = vunpack.c.h.b16 %v831
    %v3064 = vunpack.c.l.b16 %v832
    %v3065 = vunpack.c.h.b16 %v832
    %v3066 = vunpack.c.l.b16 %v833
    %v3067 = vunpack.c.h.b16 %v833
    %v3068 = vunpack.c.l.b16 %v834
    %v3069 = vunpack.c.h.b16 %v834
    %v3070 = vunpack.c.l.b16 %v835
    %v3071 = vunpack.c.h.b16 %v835
    %v3072 = vunpack.c.l.b16 %v836
    %v3073 = vunpack.c.h.b16 %v836
    %v3074 = vunpack.c.l.b16 %v837
    %v3075 = vunpack.c.h.b16 %v837
    %v3076 = vunpack.c.l.b16 %v838
    %v3077 = vunpack.c.h.b16 %v838
    %v3078 = vunpack.c.l.b16 %v839
    %v3079 = vunpack.c.h.b16 %v839
    %v3080 = vunpack.c.l.b16 %v840
    %v3081 = vunpack.c.h.b16 %v840
    %v3082 = vunpack.c.l.b16 %v841
    %v3083 = vunpack.c.h.b16 %v841
    %v3084 = vunpack.c.l.b16 %v842
    %v3085 = vunpack.c.h.b16 %v842
    %v3086 = vunpack.c.l.b16 %v843
    %v3087 = vunpack.c.h.b16 %v843
    %v3088 = vunpack.c.l.b16 %v844
    %v3089 = vunpack.c.h.b16 %v844
    %v3090 = vunpack.c.l.b16 %v845
    %v3091 = vunpack.c.h.b16 %v845
    %v3092 = vunpack.c.l.b16 %v846
    %v3093 = vunpack.c.h.b16 %v846
    %v3094 = vunpack.c.l.b16 %v847
    %v3095 = vunpack.c.h.b16 %v847
    %v3096 = vunpack.c.l.b16 %v848
    %v3097 = vunpack.c.h.b16 %v848
    %v3098 = vunpack.c.l.b16 %v849
    %v3099 = vunpack.c.h.b16 %v849
    %v3100 = vunpack.c.l.b16 %v850
    %v3101 = vunpack.c.h.b16 %v850
    %v3102 = vunpack.c.l.b16 %v851
    %v3103 = vunpack.c.h.b16 %v851
    %v3104 = vunpack.c.l.b16 %v852
    %v3105 = vunpack.c.h.b16 %v852
    %v3106 = vunpack.c.l.b16 %v853
    %v3107 = vunpack.c.h.b16 %v853
    %v3108 = vunpack.c.l.b16 %v854
    %v3109 = vunpack.c.h.b16 %v854
    %v3110 = vunpack.c.l.b16 %v855
    %v3111 = vunpack.c.h.b16 %v855
    %v3112 = vunpack.c.l.b16 %v856
    %v3113 = vunpack.c.h.b16 %v856
    %v3114 = vunpack.c.l.b16 %v857
    %v3115 = vunpack.c.h.b16 %v857
    %v3116 = vunpack.c.l.b16 %v858
    %v3117 = vunpack.c.h.b16 %v858
    %v3118 = vunpack.c.l.b16 %v859
    %v3119 = vunpack.c.h.b16 %v859
    %v3120 = vunpack.c.l.b16 %v860
    %v3121 = vunpack.c.h.b16 %v860
    %v3122 = vunpack.c.l.b16 %v861
    %v3123 = vunpack.c.h.b16 %v861
    %v3124 = vunpack.c.l.b16 %v862
    %v3125 = vunpack.c.h.b16 %v862
    %v3126 = vunpack.c.l.b16 %v863
    %v3127 = vunpack.c.h.b16 %v863
    %v3128 = vunpack.c.l.b16 %v864
    %v3129 = vunpack.c.h.b16 %v864
    %v3130 = vunpack.c.l.b16 %v865
    %v3131 = vunpack.c.h.b16 %v865
    %v3132 = vunpack.c.l.b16 %v866
    %v3133 = vunpack.c.h.b16 %v866
    %v3134 = vunpack.c.l.b16 %v867
    %v3135 = vunpack.c.h.b16 %v867
    %v3136 = vunpack.c.l.b16 %v868
    %v3137 = vunpack.c.h.b16 %v868
    %v3138 = vunpack.c.l.b16 %v869
    %v3139 = vunpack.c.h.b16 %v869
    %v3140 = vunpack.c.l.b16 %v870
    %v3141 = vunpack.c.h.b16 %v870
    %v3142 = vunpack.c.l.b16 %v871
    %v3143 = vunpack.c.h.b16 %v871
    %v3144 = vunpack.c.l.b16 %v872
    %v3145 = vunpack.c.h.b16 %v872
    %v3146 = vunpack.c.l.b16 %v873
    %v3147 = vunpack.c.h.b16 %v873
    %v3148 = vunpack.c.l.b16 %v874
    %v3149 = vunpack.c.h.b16 %v874
    %v3150 = vunpack.c.l.b16 %v875
    %v3151 = vunpack.c.h.b16 %v875
    %v3152 = vunpack.c.l.b16 %v876
    %v3153 = vunpack.c.h.b16 %v876
    %v3154 = vunpack.c.l.b16 %v877
    %v3155 = vunpack.c.h.b16 %v877
    %v3156 = vunpack.c.l.b16 %v878
    %v3157 = vunpack.c.h.b16 %v878
    %v3158 = vunpack.c.l.b16 %v879
    %v3159 = vunpack.c.h.b16 %v879
    %v3160 = vunpack.c.l.b16 %v880
    %v3161 = vunpack.c.h.b16 %v880
    %v3162 = vunpack.c.l.b16 %v881
    %v3163 = vunpack.c.h.b16 %v881
    %v3164 = vunpack.c.l.b16 %v882
    %v3165 = vunpack.c.h.b16 %v882
    %v3166 = vunpack.c.l.b16 %v883
    %v3167 = vunpack.c.h.b16 %v883
    %v3168 = vunpack.c.l.b16 %v884
    %v3169 = vunpack.c.h.b16 %v884
    %v3170 = vunpack.c.l.b16 %v885
    %v3171 = vunpack.c.h.b16 %v885
    %v3172 = vunpack.c.l.b16 %v886
    %v3173 = vunpack.c.h.b16 %v886
    %v3174 = vunpack.c.l.b16 %v887
    %v3175 = vunpack.c.h.b16 %v887
    %v3176 = vunpack.c.l.b16 %v888
    %v3177 = vunpack.c.h.b16 %v888
    %v3178 = vunpack.c.l.b16 %v889
    %v3179 = vunpack.c.h.b16 %v889
    %v3180 = vunpack.c.l.b16 %v890
    %v3181 = vunpack.c.h.b16 %v890
    %v3182 = vunpack.c.l.b16 %v891
    %v3183 = vunpack.c.h.b16 %v891
    %v3184 = vunpack.c.l.b16 %v892
    %v3185 = vunpack.c.h.b16 %v892
    %v3186 = vunpack.c.l.b16 %v893
    %v3187 = vunpack.c.h.b16 %v893
    %v3188 = vunpack.c.l.b16 %v894
    %v3189 = vunpack.c.h.b16 %v894
    %v3190 = vunpack.c.l.b16 %v895
    %v3191 = vunpack.c.h.b16 %v895
    %v3192 = vunpack.c.l.b16 %v896
    %v3193 = vunpack.c.h.b16 %v896
    %v3194 = vunpack.c.l.b16 %v897
    %v3195 = vunpack.c.h.b16 %v897
    %v3196 = vunpack.c.l.b16 %v898
    %v3197 = vunpack.c.h.b16 %v898
    %v3198 = vunpack.c.l.b16 %v899
    %v3199 = vunpack.c.h.b16 %v899
    %v3200 = vunpack.c.l.b16 %v900
    %v3201 = vunpack.c.h.b16 %v900
    %v3202 = vunpack.c.l.b16 %v901
    %v3203 = vunpack.c.h.b16 %v901
    %v3204 = vunpack.c.l.b16 %v902
    %v3205 = vunpack.c.h.b16 %v902
    %v3206 = vunpack.c.l.b16 %v903
    %v3207 = vunpack.c.h.b16 %v903
    %v3208 = vunpack.c.l.b16 %v904
    %v3209 = vunpack.c.h.b16 %v904
    %v3210 = vunpack.c.l.b16 %v905
    %v3211 = vunpack.c.h.b16 %v905
    %v3212 = vunpack.c.l.b16 %v906
    %v3213 = vunpack.c.h.b16 %v906
    %v3214 = vunpack.c.l.b16 %v907
    %v3215 = vunpack.c.h.b16 %v907
    %v3216 = vunpack.c.l.b16 %v908
    %v3217 = vunpack.c.h.b16 %v908
    %v3218 = vunpack.c.l.b16 %v909
    %v3219 = vunpack.c.h.b16 %v909
    %v3220 = vunpack.c.l.b16 %v910
    %v3221 = vunpack.c.h.b16 %v910
    %v3222 = vunpack.c.l.b16 %v911
    %v3223 = vunpack.c.h.b16 %v911
    %v3224 = vunpack.c.l.b16 %v912
    %v3225 = vunpack.c.h.b16 %v912
    %v3226 = vunpack.c.l.b16 %v913
    %v3227 = vunpack.c.h.b16 %v913
    %v3228 = vunpack.c.l.b16 %v914
    %v3229 = vunpack.c.h.b16 %v914
    %v3230 = vunpack.c.l.b16 %v915
    %v3231 = vunpack.c.h.b16 %v915
    %v3232 = vunpack.c.l.b16 %v916
    %v3233 = vunpack.c.h.b16 %v916
    %v3234 = vunpack.c.l.b16 %v917
    %v3235 = vunpack.c.h.b16 %v917
    %v3236 = vunpack.c.l.b16 %v918
    %v3237 = vunpack.c.h.b16 %v918
    %v3238 = vunpack.c.l.b16 %v919
    %v3239 = vunpack.c.h.b16 %v919
    %v3240 = vunpack.c.l.b16 %v920
    %v3241 = vunpack.c.h.b16 %v920
    %v3242 = vunpack.c.l.b16 %v921
    %v3243 = vunpack.c.h.b16 %v921
    %v3244 = vunpack.c.l.b16 %v922
    %v3245 = vunpack.c.h.b16 %v922
    %v3246 = vunpack.c.l.b16 %v923
    %v3247 = vunpack.c.h.b16 %v923
    %v3248 = vunpack.c.l.b16 %v924
    %v3249 = vunpack.c.h.b16 %v924
    %v3250 = vunpack.c.l.b16 %v925
    %v3251 = vunpack.c.h.b16 %v925
    %v3252 = vpack.c.b16 %v1720, %v1716
    %v3253 = vpack.c.b16 %v1721, %v1717
    %v3254 = vpack.c.b16 %v1722, %v1718
    %v3255 = vpack.c.b16 %v1723, %v1719
    %v3256 = vpack.c.b16 %v1728, %v1724
    %v3257 = vpack.c.b16 %v1729, %v1725
    %v3258 = vpack.c.b16 %v1730, %v1726
    %v3259 = vpack.c.b16 %v1731, %v1727
    %v3260 = vpack.c.b16 %v1736, %v1732
    %v3261 = vpack.c.b16 %v1737, %v1733
    %v3262 = vpack.c.b16 %v1738, %v1734
    %v3263 = vpack.c.b16 %v1739, %v1735
    %v3264 = vpack.c.b16 %v1744, %v1740
    %v3265 = vpack.c.b16 %v1745, %v1741
    %v3266 = vpack.c.b16 %v1746, %v1742
    %v3267 = vpack.c.b16 %v1747, %v1743
    %v3268 = vpack.c.b16 %v1752, %v1748
    %v3269 = vpack.c.b16 %v1753, %v1749
    %v3270 = vpack.c.b16 %v1754, %v1750
    %v3271 = vpack.c.b16 %v1755, %v1751
    %v3272 = vpack.c.b16 %v1760, %v1756
    %v3273 = vpack.c.b16 %v1761, %v1757
    %v3274 = vpack.c.b16 %v1762, %v1758
    %v3275 = vpack.c.b16 %v1763, %v1759
    %v3276 = vpack.c.b16 %v1768, %v1764
    %v3277 = vpack.c.b16 %v1769, %v1765
    %v3278 = vpack.c.b16 %v1770, %v1766
    %v3279 = vpack.c.b16 %v1771, %v1767
    %v3280 = vpack.c.b16 %v1776, %v1772
    %v3281 = vpack.c.b16 %v1777, %v1773
    %v3282 = vpack.c.b16 %v1778, %v1774
    %v3283 = vpack.c.b16 %v1779, %v1775
    %v3284 = vpack.c.b16 %v1784, %v1780
    %v3285 = vpack.c.b16 %v1785, %v1781
    %v3286 = vpack.c.b16 %v1786, %v1782
    %v3287 = vpack.c.b16 %v1787, %v1783
    %v3288 = vpack.c.b16 %v1792, %v1788
    %v3289 = vpack.c.b16 %v1793, %v1789
    %v3290 = vpack.c.b16 %v1794, %v1790
    %v3291 = vpack.c.b16 %v1795, %v1791
    %v3292 = vpack.c.b16 %v1800, %v1796
    %v3293 = vpack.c.b16 %v1801, %v1797
    %v3294 = vpack.c.b16 %v1802, %v1798
    %v3295 = vpack.c.b16 %v1803, %v1799
    %v3296 = vpack.c.b16 %v1808, %v1804
    %v3297 = vpack.c.b16 %v1809, %v1805
    %v3298 = vpack.c.b16 %v1810, %v1806
    %v3299 = vpack.c.b16 %v1811, %v1807
    %v3300 = vpack.c.b16 %v1816, %v1812
    %v3301 = vpack.c.b16 %v1817, %v1813
    %v3302 = vpack.c.b16 %v1818, %v1814
    %v3303 = vpack.c.b16 %v1819, %v1815
    %v3304 = vpack.c.b16 %v1824, %v1820
    %v3305 = vpack.c.b16 %v1825, %v1821
    %v3306 = vpack.c.b16 %v1826, %v1822
    %v3307 = vpack.c.b16 %v1827, %v1823
    %v3308 = vpack.c.b16 %v1832, %v1828
    %v3309 = vpack.c.b16 %v1833, %v1829
    %v3310 = vpack.c.b16 %v1834, %v1830
    %v3311 = vpack.c.b16 %v1835, %v1831
    %v3312 = vpack.c.b16 %v1840, %v1836
    %v3313 = vpack.c.b16 %v1841, %v1837
    %v3314 = vpack.c.b16 %v1842, %v1838
    %v3315 = vpack.c.b16 %v1843, %v1839
    %v3316 = vpack.c.b16 %v1848, %v1844
    %v3317 = vpack.c.b16 %v1849, %v1845
    %v3318 = vpack.c.b16 %v1850, %v1846
    %v3319 = vpack.c.b16 %v1851, %v1847
    %v3320 = vpack.c.b16 %v1856, %v1852
    %v3321 = vpack.c.b16 %v1857, %v1853
    %v3322 = vpack.c.b16 %v1858, %v1854
    %v3323 = vpack.c.b16 %v1859, %v1855
    %v3324 = vpack.c.b16 %v1864, %v1860
    %v3325 = vpack.c.b16 %v1865, %v1861
    %v3326 = vpack.c.b16 %v1866, %v1862
    %v3327 = vpack.c.b16 %v1867, %v1863
    %v3328 = vpack.c.b16 %v1872, %v1868
    %v3329 = vpack.c.b16 %v1873, %v1869
    %v3330 = vpack.c.b16 %v1874, %v1870
    %v3331 = vpack.c.b16 %v1875, %v1871
    %v3332 = vpack.c.b16 %v1880, %v1876
    %v3333 = vpack.c.b16 %v1881, %v1877
    %v3334 = vpack.c.b16 %v1882, %v1878
    %v3335 = vpack.c.b16 %v1883, %v1879
    %v3336 = vpack.c.b16 %v1888, %v1884
    %v3337 = vpack.c.b16 %v1889, %v1885
    %v3338 = vpack.c.b16 %v1890, %v1886
    %v3339 = vpack.c.b16 %v1891, %v1887
    %v3340 = vpack.c.b16 %v1896, %v1892
    %v3341 = vpack.c.b16 %v1897, %v1893
    %v3342 = vpack.c.b16 %v1898, %v1894
    %v3343 = vpack.c.b16 %v1899, %v1895
    %v3344 = vpack.c.b16 %v1904, %v1900
    %v3345 = vpack.c.b16 %v1905, %v1901
    %v3346 = vpack.c.b16 %v1906, %v1902
    %v3347 = vpack.c.b16 %v1907, %v1903
    %v3348 = vpack.c.b16 %v1912, %v1908
    %v3349 = vpack.c.b16 %v1913, %v1909
    %v3350 = vpack.c.b16 %v1914, %v1910
    %v3351 = vpack.c.b16 %v1915, %v1911
    %v3352 = vpack.c.b16 %v1920, %v1916
    %v3353 = vpack.c.b16 %v1921, %v1917
    %v3354 = vpack.c.b16 %v1922, %v1918
    %v3355 = vpack.c.b16 %v1923, %v1919
    %v3356 = vpack.c.b16 %v1928, %v1924
    %v3357 = vpack.c.b16 %v1929, %v1925
    %v3358 = vpack.c.b16 %v1930, %v1926
    %v3359 = vpack.c.b16 %v1931, %v1927
    %v3360 = vpack.c.b16 %v1936, %v1932
    %v3361 = vpack.c.b16 %v1937, %v1933
    %v3362 = vpack.c.b16 %v1938, %v1934
    %v3363 = vpack.c.b16 %v1939, %v1935
    %v3364 = vpack.c.b16 %v1944, %v1940
    %v3365 = vpack.c.b16 %v1945, %v1941
    %v3366 = vpack.c.b16 %v1946, %v1942
    %v3367 = vpack.c.b16 %v1947, %v1943
    %v3368 = vpack.c.b16 %v1952, %v1948
    %v3369 = vpack.c.b16 %v1953, %v1949
    %v3370 = vpack.c.b16 %v1954, %v1950
    %v3371 = vpack.c.b16 %v1955, %v1951
    %v3372 = vpack.c.b16 %v1960, %v1956
    %v3373 = vpack.c.b16 %v1961, %v1957
    %v3374 = vpack.c.b16 %v1962, %v1958
    %v3375 = vpack.c.b16 %v1963, %v1959
    %v3376 = vpack.c.b16 %v1968, %v1964
    %v3377 = vpack.c.b16 %v1969, %v1965
    %v3378 = vpack.c.b16 %v1970, %v1966
    %v3379 = vpack.c.b16 %v1971, %v1967
    %v3380 = vpack.c.b16 %v1976, %v1972
    %v3381 = vpack.c.b16 %v1977, %v1973
    %v3382 = vpack.c.b16 %v1978, %v1974
    %v3383 = vpack.c.b16 %v1979, %v1975
    %v3384 = vpack.c.b16 %v1984, %v1980
    %v3385 = vpack.c.b16 %v1985, %v1981
    %v3386 = vpack.c.b16 %v1986, %v1982
    %v3387 = vpack.c.b16 %v1987, %v1983
    %v3388 = vpack.c.b16 %v1992, %v1988
    %v3389 = vpack.c.b16 %v1993, %v1989
    %v3390 = vpack.c.b16 %v1994, %v1990
    %v3391 = vpack.c.b16 %v1995, %v1991
    %v3392 = vpack.c.b16 %v2000, %v1996
    %v3393 = vpack.c.b16 %v2001, %v1997
    %v3394 = vpack.c.b16 %v2002, %v1998
    %v3395 = vpack.c.b16 %v2003, %v1999
    %v3396 = vpack.c.b16 %v2008, %v2004
    %v3397 = vpack.c.b16 %v2009, %v2005
    %v3398 = vpack.c.b16 %v2010, %v2006
    %v3399 = vpack.c.b16 %v2011, %v2007
    %v3400 = vpack.c.b16 %v2016, %v2012
    %v3401 = vpack.c.b16 %v2017, %v2013
    %v3402 = vpack.c.b16 %v2018, %v2014
    %v3403 = vpack.c.b16 %v2019, %v2015
    %v3404 = vpack.c.b16 %v2024, %v2020
    %v3405 = vpack.c.b16 %v2025, %v2021
    %v3406 = vpack.c.b16 %v2026, %v2022
    %v3407 = vpack.c.b16 %v2027, %v2023
    %v3408 = vpack.c.b16 %v2032, %v2028
    %v3409 = vpack.c.b16 %v2033, %v2029
    %v3410 = vpack.c.b16 %v2034, %v2030
    %v3411 = vpack.c.b16 %v2035, %v2031
    %v3412 = vpack.c.b16 %v2040, %v2036
    %v3413 = vpack.c.b16 %v2041, %v2037
    %v3414 = vpack.c.b16 %v2042, %v2038
    %v3415 = vpack.c.b16 %v2043, %v2039
    %v3416 = vpack.c.b16 %v2048, %v2044
    %v3417 = vpack.c.b16 %v2049, %v2045
    %v3418 = vpack.c.b16 %v2050, %v2046
    %v3419 = vpack.c.b16 %v2051, %v2047
    %v3420 = vpack.c.b16 %v2056, %v2052
    %v3421 = vpack.c.b16 %v2057, %v2053
    %v3422 = vpack.c.b16 %v2058, %v2054
    %v3423 = vpack.c.b16 %v2059, %v2055
    %v3424 = vpack.c.b16 %v2064, %v2060
    %v3425 = vpack.c.b16 %v2065, %v2061
    %v3426 = vpack.c.b16 %v2066, %v2062
    %v3427 = vpack.c.b16 %v2067, %v2063
    %v3428 = vpack.c.b16 %v2072, %v2068
    %v3429 = vpack.c.b16 %v2073, %v2069
    %v3430 = vpack.c.b16 %v2074, %v2070
    %v3431 = vpack.c.b16 %v2075, %v2071
    %v3432 = vpack.c.b16 %v2080, %v2076
    %v3433 = vpack.c.b16 %v2081, %v2077
    %v3434 = vpack.c.b16 %v2082, %v2078
    %v3435 = vpack.c.b16 %v2083, %v2079
    %v3436 = vpack.c.b16 %v2088, %v2084
    %v3437 = vpack.c.b16 %v2089, %v2085
    %v3438 = vpack.c.b16 %v2090, %v2086
    %v3439 = vpack.c.b16 %v2091, %v2087
    %v3440 = vpack.c.b16 %v2096, %v2092
    %v3441 = vpack.c.b16 %v2097, %v2093
    %v3442 = vpack.c.b16 %v2098, %v2094
    %v3443 = vpack.c.b16 %v2099, %v2095
    %v3444 = vpack.c.b16 %v2104, %v2100
    %v3445 = vpack.c.b16 %v2105, %v2101
    %v3446 = vpack.c.b16 %v2106, %v2102
    %v3447 = vpack.c.b16 %v2107, %v2103
    %v3448 = vpack.c.b16 %v2112, %v2108
    %v3449 = vpack.c.b16 %v2113, %v2109
    %v3450 = vpack.c.b16 %v2114, %v2110
    %v3451 = vpack.c.b16 %v2115, %v2111
    %v3452 = vpack.c.b16 %v2120, %v2116
    %v3453 = vpack.c.b16 %v2121, %v2117
    %v3454 = vpack.c.b16 %v2122, %v2118
    %v3455 = vpack.c.b16 %v2123, %v2119
    %v3456 = vpack.c.b16 %v2128, %v2124
    %v3457 = vpack.c.b16 %v2129, %v2125
    %v3458 = vpack.c.b16 %v2130, %v2126
    %v3459 = vpack.c.b16 %v2131, %v2127
    %v3460 = vpack.c.b16 %v2136, %v2132
    %v3461 = vpack.c.b16 %v2137, %v2133
    %v3462 = vpack.c.b16 %v2138, %v2134
    %v3463 = vpack.c.b16 %v2139, %v2135
    %v3464 = vpack.c.b16 %v2144, %v2140
    %v3465 = vpack.c.b16 %v2145, %v2141
    %v3466 = vpack.c.b16 %v2146, %v2142
    %v3467 = vpack.c.b16 %v2147, %v2143
    %v3468 = vpack.c.b16 %v2152, %v2148
    %v3469 = vpack.c.b16 %v2153, %v2149
    %v3470 = vpack.c.b16 %v2154, %v2150
    %v3471 = vpack.c.b16 %v2155, %v2151
    %v3472 = vpack.c.b16 %v2160, %v2156
    %v3473 = vpack.c.b16 %v2161, %v2157
    %v3474 = vpack.c.b16 %v2162, %v2158
    %v3475 = vpack.c.b16 %v2163, %v2159
    %v3476 = vpack.c.b16 %v2168, %v2164
    %v3477 = vpack.c.b16 %v2169, %v2165
    %v3478 = vpack.c.b16 %v2170, %v2166
    %v3479 = vpack.c.b16 %v2171, %v2167
    %v3480 = vpack.c.b16 %v2176, %v2172
    %v3481 = vpack.c.b16 %v2177, %v2173
    %v3482 = vpack.c.b16 %v2178, %v2174
    %v3483 = vpack.c.b16 %v2179, %v2175
    %v3484 = vpack.c.b16 %v2184, %v2180
    %v3485 = vpack.c.b16 %v2185, %v2181
    %v3486 = vpack.c.b16 %v2186, %v2182
    %v3487 = vpack.c.b16 %v2187, %v2183
    %v3488 = vpack.c.b16 %v2192, %v2188
    %v3489 = vpack.c.b16 %v2193, %v2189
    %v3490 = vpack.c.b16 %v2194, %v2190
    %v3491 = vpack.c.b16 %v2195, %v2191
    %v3492 = vpack.c.b16 %v2200, %v2196
    %v3493 = vpack.c.b16 %v2201, %v2197
    %v3494 = vpack.c.b16 %v2202, %v2198
    %v3495 = vpack.c.b16 %v2203, %v2199
    %v3496 = vpack.c.b16 %v2208, %v2204
    %v3497 = vpack.c.b16 %v2209, %v2205
    %v3498 = vpack.c.b16 %v2210, %v2206
    %v3499 = vpack.c.b16 %v2211, %v2207
    %v3500 = vpack.c.b16 %v2216, %v2212
    %v3501 = vpack.c.b16 %v2217, %v2213
    %v3502 = vpack.c.b16 %v2218, %v2214
    %v3503 = vpack.c.b16 %v2219, %v2215
    %v3504 = vpack.c.b16 %v2224, %v2220
    %v3505 = vpack.c.b16 %v2225, %v2221
    %v3506 = vpack.c.b16 %v2226, %v2222
    %v3507 = vpack.c.b16 %v2227, %v2223
    %v3508 = vpack.c.b16 %v2232, %v2228
    %v3509 = vpack.c.b16 %v2233, %v2229
    %v3510 = vpack.c.b16 %v2234, %v2230
    %v3511 = vpack.c.b16 %v2235, %v2231
    %v3512 = vpack.c.b16 %v2240, %v2236
    %v3513 = vpack.c.b16 %v2241, %v2237
    %v3514 = vpack.c.b16 %v2242, %v2238
    %v3515 = vpack.c.b16 %v2243, %v2239
    %v3516 = vpack.c.b16 %v2248, %v2244
    %v3517 = vpack.c.b16 %v2249, %v2245
    %v3518 = vpack.c.b16 %v2250, %v2246
    %v3519 = vpack.c.b16 %v2251, %v2247
    %v3520 = vpack.c.b16 %v2256, %v2252
    %v3521 = vpack.c.b16 %v2257, %v2253
    %v3522 = vpack.c.b16 %v2258, %v2254
    %v3523 = vpack.c.b16 %v2259, %v2255
    %v3524 = vpack.c.b16 %v2264, %v2260
    %v3525 = vpack.c.b16 %v2265, %v2261
    %v3526 = vpack.c.b16 %v2266, %v2262
    %v3527 = vpack.c.b16 %v2267, %v2263
    %v3528 = vpack.c.b16 %v2272, %v2268
    %v3529 = vpack.c.b16 %v2273, %v2269
    %v3530 = vpack.c.b16 %v2274, %v2270
    %v3531 = vpack.c.b16 %v2275, %v2271
    %v3532 = vpack.c.b16 %v2280, %v2276
    %v3533 = vpack.c.b16 %v2281, %v2277
    %v3534 = vpack.c.b16 %v2282, %v2278
    %v3535 = vpack.c.b16 %v2283, %v2279
    %v3536 = vpack.c.b16 %v2288, %v2284
    %v3537 = vpack.c.b16 %v2289, %v2285
    %v3538 = vpack.c.b16 %v2290, %v2286
    %v3539 = vpack.c.b16 %v2291, %v2287
    %v3540 = vpack.c.b16 %v2296, %v2292
    %v3541 = vpack.c.b16 %v2297, %v2293
    %v3542 = vpack.c.b16 %v2298, %v2294
    %v3543 = vpack.c.b16 %v2299, %v2295
    %v3544 = vpack.c.b16 %v2304, %v2300
    %v3545 = vpack.c.b16 %v2305, %v2301
    %v3546 = vpack.c.b16 %v2306, %v2302
    %v3547 = vpack.c.b16 %v2307, %v2303
    %v3548 = vpack.c.b16 %v2312, %v2308
    %v3549 = vpack.c.b16 %v2313, %v2309
    %v3550 = vpack.c.b16 %v2314, %v2310
    %v3551 = vpack.c.b16 %v2315, %v2311
    %v3552 = vpack.c.b16 %v2320, %v2316
    %v3553 = vpack.c.b16 %v2321, %v2317
    %v3554 = vpack.c.b16 %v2322, %v2318
    %v3555 = vpack.c.b16 %v2323, %v2319
    %v3556 = vpack.c.b16 %v2328, %v2324
    %v3557 = vpack.c.b16 %v2329, %v2325
    %v3558 = vpack.c.b16 %v2330, %v2326
    %v3559 = vpack.c.b16 %v2331, %v2327
    %v3560 = vpack.c.b16 %v2336, %v2332
    %v3561 = vpack.c.b16 %v2337, %v2333
    %v3562 = vpack.c.b16 %v2338, %v2334
    %v3563 = vpack.c.b16 %v2339, %v2335
    %v3564 = vpack.c.b16 %v2344, %v2340
    %v3565 = vpack.c.b16 %v2345, %v2341
    %v3566 = vpack.c.b16 %v2346, %v2342
    %v3567 = vpack.c.b16 %v2347, %v2343
    %v3568 = vpack.c.b16 %v2352, %v2348
    %v3569 = vpack.c.b16 %v2353, %v2349
    %v3570 = vpack.c.b16 %v2354, %v2350
    %v3571 = vpack.c.b16 %v2355, %v2351
    %v3572 = vpack.c.b16 %v2360, %v2356
    %v3573 = vpack.c.b16 %v2361, %v2357
    %v3574 = vpack.c.b16 %v2362, %v2358
    %v3575 = vpack.c.b16 %v2363, %v2359
    %v3576 = vpack.c.b16 %v2368, %v2364
    %v3577 = vpack.c.b16 %v2369, %v2365
    %v3578 = vpack.c.b16 %v2370, %v2366
    %v3579 = vpack.c.b16 %v2371, %v2367
    %v3580 = vpack.c.b16 %v2376, %v2372
    %v3581 = vpack.c.b16 %v2377, %v2373
    %v3582 = vpack.c.b16 %v2378, %v2374
    %v3583 = vpack.c.b16 %v2379, %v2375
    %v3584 = vpack.c.b16 %v2384, %v2380
    %v3585 = vpack.c.b16 %v2385, %v2381
    %v3586 = vpack.c.b16 %v2386, %v2382
    %v3587 = vpack.c.b16 %v2387, %v2383
    %v3588 = vpack.c.b16 %v2392, %v2388
    %v3589 = vpack.c.b16 %v2393, %v2389
    %v3590 = vpack.c.b16 %v2394, %v2390
    %v3591 = vpack.c.b16 %v2395, %v2391
    %v3592 = vpack.c.b16 %v2400, %v2396
    %v3593 = vpack.c.b16 %v2401, %v2397
    %v3594 = vpack.c.b16 %v2402, %v2398
    %v3595 = vpack.c.b16 %v2403, %v2399
    %v3596 = vpack.c.b16 %v2408, %v2404
    %v3597 = vpack.c.b16 %v2409, %v2405
    %v3598 = vpack.c.b16 %v2410, %v2406
    %v3599 = vpack.c.b16 %v2411, %v2407
    %v3600 = vpack.c.b16 %v2416, %v2412
    %v3601 = vpack.c.b16 %v2417, %v2413
    %v3602 = vpack.c.b16 %v2418, %v2414
    %v3603 = vpack.c.b16 %v2419, %v2415
    %v3604 = vpack.c.b16 %v2424, %v2420
    %v3605 = vpack.c.b16 %v2425, %v2421
    %v3606 = vpack.c.b16 %v2426, %v2422
    %v3607 = vpack.c.b16 %v2427, %v2423
    %v3608 = vpack.c.b16 %v2432, %v2428
    %v3609 = vpack.c.b16 %v2433, %v2429
    %v3610 = vpack.c.b16 %v2434, %v2430
    %v3611 = vpack.c.b16 %v2435, %v2431
    %v3612 = vpack.c.b16 %v2440, %v2436
    %v3613 = vpack.c.b16 %v2441, %v2437
    %v3614 = vpack.c.b16 %v2442, %v2438
    %v3615 = vpack.c.b16 %v2443, %v2439
    %v3616 = vpack.c.b16 %v2448, %v2444
    %v3617 = vpack.c.b16 %v2449, %v2445
    %v3618 = vpack.c.b16 %v2450, %v2446
    %v3619 = vpack.c.b16 %v2451, %v2447
    %v3620 = vpack.c.b16 %v2456, %v2452
    %v3621 = vpack.c.b16 %v2457, %v2453
    %v3622 = vpack.c.b16 %v2458, %v2454
    %v3623 = vpack.c.b16 %v2459, %v2455
    %v3624 = vpack.c.b16 %v2464, %v2460
    %v3625 = vpack.c.b16 %v2465, %v2461
    %v3626 = vpack.c.b16 %v2466, %v2462
    %v3627 = vpack.c.b16 %v2467, %v2463
    %v3628 = vpack.c.b16 %v2472, %v2468
    %v3629 = vpack.c.b16 %v2473, %v2469
    %v3630 = vpack.c.b16 %v2474, %v2470
    %v3631 = vpack.c.b16 %v2475, %v2471
    %v3632 = vpack.c.b16 %v2480, %v2476
    %v3633 = vpack.c.b16 %v2481, %v2477
    %v3634 = vpack.c.b16 %v2482, %v2478
    %v3635 = vpack.c.b16 %v2483, %v2479
    %v3636 = vpack.c.b16 %v2488, %v2484
    %v3637 = vpack.c.b16 %v2489, %v2485
    %v3638 = vpack.c.b16 %v2490, %v2486
    %v3639 = vpack.c.b16 %v2491, %v2487
    %v3640 = vpack.c.b16 %v2496, %v2492
    %v3641 = vpack.c.b16 %v2497, %v2493
    %v3642 = vpack.c.b16 %v2498, %v2494
    %v3643 = vpack.c.b16 %v2499, %v2495
    %v3644 = vpack.c.b16 %v2504, %v2500
    %v3645 = vpack.c.b16 %v2505, %v2501
    %v3646 = vpack.c.b16 %v2506, %v2502
    %v3647 = vpack.c.b16 %v2507, %v2503
    %v3648 = vpack.c.b16 %v2512, %v2508
    %v3649 = vpack.c.b16 %v2513, %v2509
    %v3650 = vpack.c.b16 %v2514, %v2510
    %v3651 = vpack.c.b16 %v2515, %v2511
    %v3652 = vpack.c.b16 %v2520, %v2516
    %v3653 = vpack.c.b16 %v2521, %v2517
    %v3654 = vpack.c.b16 %v2522, %v2518
    %v3655 = vpack.c.b16 %v2523, %v2519
    %v3656 = vpack.c.b16 %v2528, %v2524
    %v3657 = vpack.c.b16 %v2529, %v2525
    %v3658 = vpack.c.b16 %v2530, %v2526
    %v3659 = vpack.c.b16 %v2531, %v2527
    %v3660 = vpack.c.b16 %v2536, %v2532
    %v3661 = vpack.c.b16 %v2537, %v2533
    %v3662 = vpack.c.b16 %v2538, %v2534
    %v3663 = vpack.c.b16 %v2539, %v2535
    %v3664 = vpack.c.b16 %v2544, %v2540
    %v3665 = vpack.c.b16 %v2545, %v2541
    %v3666 = vpack.c.b16 %v2546, %v2542
    %v3667 = vpack.c.b16 %v2547, %v2543
    %v3668 = vpack.c.b16 %v2552, %v2548
    %v3669 = vpack.c.b16 %v2553, %v2549
    %v3670 = vpack.c.b16 %v2554, %v2550
    %v3671 = vpack.c.b16 %v2555, %v2551
    %v3672 = vpack.c.b16 %v2560, %v2556
    %v3673 = vpack.c.b16 %v2561, %v2557
    %v3674 = vpack.c.b16 %v2562, %v2558
    %v3675 = vpack.c.b16 %v2563, %v2559
    %v3676 = vpack.c.b16 %v2568, %v2564
    %v3677 = vpack.c.b16 %v2569, %v2565
    %v3678 = vpack.c.b16 %v2570, %v2566
    %v3679 = vpack.c.b16 %v2571, %v2567
    %v3680 = vpack.c.b16 %v2576, %v2572
    %v3681 = vpack.c.b16 %v2577, %v2573
    %v3682 = vpack.c.b16 %v2578, %v2574
    %v3683 = vpack.c.b16 %v2579, %v2575
    %v3684 = vpack.c.b16 %v2584, %v2580
    %v3685 = vpack.c.b16 %v2585, %v2581
    %v3686 = vpack.c.b16 %v2586, %v2582
    %v3687 = vpack.c.b16 %v2587, %v2583
    %v3688 = vpack.c.b16 %v2592, %v2588
    %v3689 = vpack.c.b16 %v2593, %v2589
    %v3690 = vpack.c.b16 %v2594, %v2590
    %v3691 = vpack.c.b16 %v2595, %v2591
    %v3692 = vpack.c.b16 %v2600, %v2596
    %v3693 = vpack.c.b16 %v2601, %v2597
    %v3694 = vpack.c.b16 %v2602, %v2598
    %v3695 = vpack.c.b16 %v2603, %v2599
    %v3696 = vpack.c.b16 %v2608, %v2604
    %v3697 = vpack.c.b16 %v2609, %v2605
    %v3698 = vpack.c.b16 %v2610, %v2606
    %v3699 = vpack.c.b16 %v2611, %v2607
    %v3700 = vpack.c.b16 %v2616, %v2612
    %v3701 = vpack.c.b16 %v2617, %v2613
    %v3702 = vpack.c.b16 %v2618, %v2614
    %v3703 = vpack.c.b16 %v2619, %v2615
    %v3704 = vpack.c.b16 %v2624, %v2620
    %v3705 = vpack.c.b16 %v2625, %v2621
    %v3706 = vpack.c.b16 %v2626, %v2622
    %v3707 = vpack.c.b16 %v2627, %v2623
    %v3708 = vpack.c.b16 %v2632, %v2628
    %v3709 = vpack.c.b16 %v2633, %v2629
    %v3710 = vpack.c.b16 %v2634, %v2630
    %v3711 = vpack.c.b16 %v2635, %v2631
    %v3712 = vpack.c.b16 %v2640, %v2636
    %v3713 = vpack.c.b16 %v2641, %v2637
    %v3714 = vpack.c.b16 %v2642, %v2638
    %v3715 = vpack.c.b16 %v2643, %v2639
    %v3716 = vpack.c.b16 %v2648, %v2644
    %v3717 = vpack.c.b16 %v2649, %v2645
    %v3718 = vpack.c.b16 %v2650, %v2646
    %v3719 = vpack.c.b16 %v2651, %v2647
    %v3720 = vpack.c.b16 %v2656, %v2652
    %v3721 = vpack.c.b16 %v2657, %v2653
    %v3722 = vpack.c.b16 %v2658, %v2654
    %v3723 = vpack.c.b16 %v2659, %v2655
    %v3724 = vpack.c.b16 %v2664, %v2660
    %v3725 = vpack.c.b16 %v2665, %v2661
    %v3726 = vpack.c.b16 %v2666, %v2662
    %v3727 = vpack.c.b16 %v2667, %v2663
    %v3728 = vpack.c.b16 %v2672, %v2668
    %v3729 = vpack.c.b16 %v2673, %v2669
    %v3730 = vpack.c.b16 %v2674, %v2670
    %v3731 = vpack.c.b16 %v2675, %v2671
    %v3732 = vpack.c.b16 %v2680, %v2676
    %v3733 = vpack.c.b16 %v2681, %v2677
    %v3734 = vpack.c.b16 %v2682, %v2678
    %v3735 = vpack.c.b16 %v2683, %v2679
    %v3736 = vpack.c.b16 %v2688, %v2684
    %v3737 = vpack.c.b16 %v2689, %v2685
    %v3738 = vpack.c.b16 %v2690, %v2686
    %v3739 = vpack.c.b16 %v2691, %v2687
    %v3740 = vpack.c.b16 %v2696, %v2692
    %v3741 = vpack.c.b16 %v2697, %v2693
    %v3742 = vpack.c.b16 %v2698, %v2694
    %v3743 = vpack.c.b16 %v2699, %v2695
    %v3744 = vpack.c.b16 %v2704, %v2700
    %v3745 = vpack.c.b16 %v2705, %v2701
    %v3746 = vpack.c.b16 %v2706, %v2702
    %v3747 = vpack.c.b16 %v2707, %v2703
    %v3748 = vpack.c.b16 %v2712, %v2708
    %v3749 = vpack.c.b16 %v2713, %v2709
    %v3750 = vpack.c.b16 %v2714, %v2710
    %v3751 = vpack.c.b16 %v2715, %v2711
    %v3752 = vpack.c.b16 %v2720, %v2716
    %v3753 = vpack.c.b16 %v2721, %v2717
    %v3754 = vpack.c.b16 %v2722, %v2718
    %v3755 = vpack.c.b16 %v2723, %v2719
    %v3756 = vpack.c.b16 %v2728, %v2724
    %v3757 = vpack.c.b16 %v2729, %v2725
    %v3758 = vpack.c.b16 %v2730, %v2726
    %v3759 = vpack.c.b16 %v2731, %v2727
    %v3760 = vpack.c.b16 %v2736, %v2732
    %v3761 = vpack.c.b16 %v2737, %v2733
    %v3762 = vpack.c.b16 %v2738, %v2734
    %v3763 = vpack.c.b16 %v2739, %v2735
    %v3764 = vpack.c.b16 %v2744, %v2740
    %v3765 = vpack.c.b16 %v2745, %v2741
    %v3766 = vpack.c.b16 %v2746, %v2742
    %v3767 = vpack.c.b16 %v2747, %v2743
    %v3768 = vpack.c.b16 %v2752, %v2748
    %v3769 = vpack.c.b16 %v2753, %v2749
    %v3770 = vpack.c.b16 %v2754, %v2750
    %v3771 = vpack.c.b16 %v2755, %v2751
    %v3772 = vpack.c.b16 %v2760, %v2756
    %v3773 = vpack.c.b16 %v2761, %v2757
    %v3774 = vpack.c.b16 %v2762, %v2758
    %v3775 = vpack.c.b16 %v2763, %v2759
    %v3776 = vpack.c.b16 %v2768, %v2764
    %v3777 = vpack.c.b16 %v2769, %v2765
    %v3778 = vpack.c.b16 %v2770, %v2766
    %v3779 = vpack.c.b16 %v2771, %v2767
    %v3780 = vpack.c.b16 %v2776, %v2772
    %v3781 = vpack.c.b16 %v2777, %v2773
    %v3782 = vpack.c.b16 %v2778, %v2774
    %v3783 = vpack.c.b16 %v2779, %v2775
    %v3784 = vpack.c.b16 %v2784, %v2780
    %v3785 = vpack.c.b16 %v2785, %v2781
    %v3786 = vpack.c.b16 %v2786, %v2782
    %v3787 = vpack.c.b16 %v2787, %v2783
    %v3788 = vpack.c.b16 %v2792, %v2788
    %v3789 = vpack.c.b16 %v2793, %v2789
    %v3790 = vpack.c.b16 %v2794, %v2790
    %v3791 = vpack.c.b16 %v2795, %v2791
    %v3792 = vpack.c.b16 %v2800, %v2796
    %v3793 = vpack.c.b16 %v2801, %v2797
    %v3794 = vpack.c.b16 %v2802, %v2798
    %v3795 = vpack.c.b16 %v2803, %v2799
    %v3796 = vpack.c.b16 %v2808, %v2804
    %v3797 = vpack.c.b16 %v2809, %v2805
    %v3798 = vpack.c.b16 %v2810, %v2806
    %v3799 = vpack.c.b16 %v2811, %v2807
    %v3800 = vpack.c.b16 %v2816, %v2812
    %v3801 = vpack.c.b16 %v2817, %v2813
    %v3802 = vpack.c.b16 %v2818, %v2814
    %v3803 = vpack.c.b16 %v2819, %v2815
    %v3804 = vpack.c.b16 %v2824, %v2820
    %v3805 = vpack.c.b16 %v2825, %v2821
    %v3806 = vpack.c.b16 %v2826, %v2822
    %v3807 = vpack.c.b16 %v2827, %v2823
    %v3808 = vpack.c.b16 %v2832, %v2828
    %v3809 = vpack.c.b16 %v2833, %v2829
    %v3810 = vpack.c.b16 %v2834, %v2830
    %v3811 = vpack.c.b16 %v2835, %v2831
    %v3812 = vpack.c.b16 %v2840, %v2836
    %v3813 = vpack.c.b16 %v2841, %v2837
    %v3814 = vpack.c.b16 %v2842, %v2838
    %v3815 = vpack.c.b16 %v2843, %v2839
    %v3816 = vpack.c.b16 %v2848, %v2844
    %v3817 = vpack.c.b16 %v2849, %v2845
    %v3818 = vpack.c.b16 %v2850, %v2846
    %v3819 = vpack.c.b16 %v2851, %v2847
    %v3820 = vpack.c.b16 %v2856, %v2852
    %v3821 = vpack.c.b16 %v2857, %v2853
    %v3822 = vpack.c.b16 %v2858, %v2854
    %v3823 = vpack.c.b16 %v2859, %v2855
    %v3824 = vpack.c.b16 %v2864, %v2860
    %v3825 = vpack.c.b16 %v2865, %v2861
    %v3826 = vpack.c.b16 %v2866, %v2862
    %v3827 = vpack.c.b16 %v2867, %v2863
    %v3828 = vpack.c.b16 %v2872, %v2868
    %v3829 = vpack.c.b16 %v2873, %v2869
    %v3830 = vpack.c.b16 %v2874, %v2870
    %v3831 = vpack.c.b16 %v2875, %v2871
    %v3832 = vpack.c.b16 %v2880, %v2876
    %v3833 = vpack.c.b16 %v2881, %v2877
    %v3834 = vpack.c.b16 %v2882, %v2878
    %v3835 = vpack.c.b16 %v2883, %v2879
    %v3836 = vpack.c.b16 %v2888, %v2884
    %v3837 = vpack.c.b16 %v2889, %v2885
    %v3838 = vpack.c.b16 %v2890, %v2886
    %v3839 = vpack.c.b16 %v2891, %v2887
    %v3840 = vpack.c.b16 %v2896, %v2892
    %v3841 = vpack.c.b16 %v2897, %v2893
    %v3842 = vpack.c.b16 %v2898, %v2894
    %v3843 = vpack.c.b16 %v2899, %v2895
    %v3844 = vpack.c.b16 %v2904, %v2900
    %v3845 = vpack.c.b16 %v2905, %v2901
    %v3846 = vpack.c.b16 %v2906, %v2902
    %v3847 = vpack.c.b16 %v2907, %v2903
    %v3848 = vpack.c.b16 %v2912, %v2908
    %v3849 = vpack.c.b16 %v2913, %v2909
    %v3850 = vpack.c.b16 %v2914, %v2910
    %v3851 = vpack.c.b16 %v2915, %v2911
    %v3852 = vpack.c.b16 %v2920, %v2916
    %v3853 = vpack.c.b16 %v2921, %v2917
    %v3854 = vpack.c.b16 %v2922, %v2918
    %v3855 = vpack.c.b16 %v2923, %v2919
    %v3856 = vpack.c.b16 %v2928, %v2924
    %v3857 = vpack.c.b16 %v2929, %v2925
    %v3858 = vpack.c.b16 %v2930, %v2926
    %v3859 = vpack.c.b16 %v2931, %v2927
    %v3860 = vpack.c.b16 %v2936, %v2932
    %v3861 = vpack.c.b16 %v2937, %v2933
    %v3862 = vpack.c.b16 %v2938, %v2934
    %v3863 = vpack.c.b16 %v2939, %v2935
    %v3864 = vpack.c.b16 %v2944, %v2940
    %v3865 = vpack.c.b16 %v2945, %v2941
    %v3866 = vpack.c.b16 %v2946, %v2942
    %v3867 = vpack.c.b16 %v2947, %v2943
    %v3868 = vpack.c.b16 %v2952, %v2948
    %v3869 = vpack.c.b16 %v2953, %v2949
    %v3870 = vpack.c.b16 %v2954, %v2950
    %v3871 = vpack.c.b16 %v2955, %v2951
    %v3872 = vpack.c.b16 %v2960, %v2956
    %v3873 = vpack.c.b16 %v2961, %v2957
    %v3874 = vpack.c.b16 %v2962, %v2958
    %v3875 = vpack.c.b16 %v2963, %v2959
    %v3876 = vpack.c.b16 %v2968, %v2964
    %v3877 = vpack.c.b16 %v2969, %v2965
    %v3878 = vpack.c.b16 %v2970, %v2966
    %v3879 = vpack.c.b16 %v2971, %v2967
    %v3880 = vpack.c.b16 %v2976, %v2972
    %v3881 = vpack.c.b16 %v2977, %v2973
    %v3882 = vpack.c.b16 %v2978, %v2974
    %v3883 = vpack.c.b16 %v2979, %v2975
    %v3884 = vpack.c.b16 %v2984, %v2980
    %v3885 = vpack.c.b16 %v2985, %v2981
    %v3886 = vpack.c.b16 %v2986, %v2982
    %v3887 = vpack.c.b16 %v2987, %v2983
    %v3888 = vpack.c.b16 %v2992, %v2988
    %v3889 = vpack.c.b16 %v2993, %v2989
    %v3890 = vpack.c.b16 %v2994, %v2990
    %v3891 = vpack.c.b16 %v2995, %v2991
    %v3892 = vpack.c.b16 %v3000, %v2996
    %v3893 = vpack.c.b16 %v3001, %v2997
    %v3894 = vpack.c.b16 %v3002, %v2998
    %v3895 = vpack.c.b16 %v3003, %v2999
    %v3896 = vpack.c.b16 %v3008, %v3004
    %v3897 = vpack.c.b16 %v3009, %v3005
    %v3898 = vpack.c.b16 %v3010, %v3006
    %v3899 = vpack.c.b16 %v3011, %v3007
    %v3900 = vpack.c.b16 %v3016, %v3012
    %v3901 = vpack.c.b16 %v3017, %v3013
    %v3902 = vpack.c.b16 %v3018, %v3014
    %v3903 = vpack.c.b16 %v3019, %v3015
    %v3904 = vpack.c.b16 %v3024, %v3020
    %v3905 = vpack.c.b16 %v3025, %v3021
    %v3906 = vpack.c.b16 %v3026, %v3022
    %v3907 = vpack.c.b16 %v3027, %v3023
    %v3908 = vpack.c.b16 %v3032, %v3028
    %v3909 = vpack.c.b16 %v3033, %v3029
    %v3910 = vpack.c.b16 %v3034, %v3030
    %v3911 = vpack.c.b16 %v3035, %v3031
    %v3912 = vpack.c.b16 %v3040, %v3036
    %v3913 = vpack.c.b16 %v3041, %v3037
    %v3914 = vpack.c.b16 %v3042, %v3038
    %v3915 = vpack.c.b16 %v3043, %v3039
    %v3916 = vpack.c.b16 %v3048, %v3044
    %v3917 = vpack.c.b16 %v3049, %v3045
    %v3918 = vpack.c.b16 %v3050, %v3046
    %v3919 = vpack.c.b16 %v3051, %v3047
    %v3920 = vpack.c.b16 %v3056, %v3052
    %v3921 = vpack.c.b16 %v3057, %v3053
    %v3922 = vpack.c.b16 %v3058, %v3054
    %v3923 = vpack.c.b16 %v3059, %v3055
    %v3924 = vpack.c.b16 %v3064, %v3060
    %v3925 = vpack.c.b16 %v3065, %v3061
    %v3926 = vpack.c.b16 %v3066, %v3062
    %v3927 = vpack.c.b16 %v3067, %v3063
    %v3928 = vpack.c.b16 %v3072, %v3068
    %v3929 = vpack.c.b16 %v3073, %v3069
    %v3930 = vpack.c.b16 %v3074, %v3070
    %v3931 = vpack.c.b16 %v3075, %v3071
    %v3932 = vpack.c.b16 %v3080, %v3076
    %v3933 = vpack.c.b16 %v3081, %v3077
    %v3934 = vpack.c.b16 %v3082, %v3078
    %v3935 = vpack.c.b16 %v3083, %v3079
    %v3936 = vpack.c.b16 %v3088, %v3084
    %v3937 = vpack.c.b16 %v3089, %v3085
    %v3938 = vpack.c.b16 %v3090, %v3086
    %v3939 = vpack.c.b16 %v3091, %v3087
    %v3940 = vpack.c.b16 %v3096, %v3092
    %v3941 = vpack.c.b16 %v3097, %v3093
    %v3942 = vpack.c.b16 %v3098, %v3094
    %v3943 = vpack.c.b16 %v3099, %v3095
    %v3944 = vpack.c.b16 %v3104, %v3100
    %v3945 = vpack.c.b16 %v3105, %v3101
    %v3946 = vpack.c.b16 %v3106, %v3102
    %v3947 = vpack.c.b16 %v3107, %v3103
    %v3948 = vpack.c.b16 %v3112, %v3108
    %v3949 = vpack.c.b16 %v3113, %v3109
    %v3950 = vpack.c.b16 %v3114, %v3110
    %v3951 = vpack.c.b16 %v3115, %v3111
    %v3952 = vpack.c.b16 %v3120, %v3116
    %v3953 = vpack.c.b16 %v3121, %v3117
    %v3954 = vpack.c.b16 %v3122, %v3118
    %v3955 = vpack.c.b16 %v3123, %v3119
    %v3956 = vpack.c.b16 %v3128, %v3124
    %v3957 = vpack.c.b16 %v3129, %v3125
    %v3958 = vpack.c.b16 %v3130, %v3126
    %v3959 = vpack.c.b16 %v3131, %v3127
    %v3960 = vpack.c.b16 %v3136, %v3132
    %v3961 = vpack.c.b16 %v3137, %v3133
    %v3962 = vpack.c.b16 %v3138, %v3134
    %v3963 = vpack.c.b16 %v3139, %v3135
    %v3964 = vpack.c.b16 %v3144, %v3140
    %v3965 = vpack.c.b16 %v3145, %v3141
    %v3966 = vpack.c.b16 %v3146, %v3142
    %v3967 = vpack.c.b16 %v3147, %v3143
    %v3968 = vpack.c.b16 %v3152, %v3148
    %v3969 = vpack.c.b16 %v3153, %v3149
    %v3970 = vpack.c.b16 %v3154, %v3150
    %v3971 = vpack.c.b16 %v3155, %v3151
    %v3972 = vpack.c.b16 %v3160, %v3156
    %v3973 = vpack.c.b16 %v3161, %v3157
    %v3974 = vpack.c.b16 %v3162, %v3158
    %v3975 = vpack.c.b16 %v3163, %v3159
    %v3976 = vpack.c.b16 %v3168, %v3164
    %v3977 = vpack.c.b16 %v3169, %v3165
    %v3978 = vpack.c.b16 %v3170, %v3166
    %v3979 = vpack.c.b16 %v3171, %v3167
    %v3980 = vpack.c.b16 %v3176, %v3172
    %v3981 = vpack.c.b16 %v3177, %v3173
    %v3982 = vpack.c.b16 %v3178, %v3174
    %v3983 = vpack.c.b16 %v3179, %v3175
    %v3984 = vpack.c.b16 %v3184, %v3180
    %v3985 = vpack.c.b16 %v3185, %v3181
    %v3986 = vpack.c.b16 %v3186, %v3182
    %v3987 = vpack.c.b16 %v3187, %v3183
    %v3988 = vpack.c.b16 %v3192, %v3188
    %v3989 = vpack.c.b16 %v3193, %v3189
    %v3990 = vpack.c.b16 %v3194, %v3190
    %v3991 = vpack.c.b16 %v3195, %v3191
    %v3992 = vpack.c.b16 %v3200, %v3196
    %v3993 = vpack.c.b16 %v3201, %v3197
    %v3994 = vpack.c.b16 %v3202, %v3198
    %v3995 = vpack.c.b16 %v3203, %v3199
    %v3996 = vpack.c.b16 %v3208, %v3204
    %v3997 = vpack.c.b16 %v3209, %v3205
    %v3998 = vpack.c.b16 %v3210, %v3206
    %v3999 = vpack.c.b16 %v3211, %v3207
    %v4000 = vpack.c.b16 %v3216, %v3212
    %v4001 = vpack.c.b16 %v3217, %v3213
    %v4002 = vpack.c.b16 %v3218, %v3214
    %v4003 = vpack.c.b16 %v3219, %v3215
    %v4004 = vpack.c.b16 %v3224, %v3220
    %v4005 = vpack.c.b16 %v3225, %v3221
    %v4006 = vpack.c.b16 %v3226, %v3222
    %v4007 = vpack.c.b16 %v3227, %v3223
    %v4008 = vpack.c.b16 %v3232, %v3228
    %v4009 = vpack.c.b16 %v3233, %v3229
    %v4010 = vpack.c.b16 %v3234, %v3230
    %v4011 = vpack.c.b16 %v3235, %v3231
    %v4012 = vpack.c.b16 %v3240, %v3236
    %v4013 = vpack.c.b16 %v3241, %v3237
    %v4014 = vpack.c.b16 %v3242, %v3238
    %v4015 = vpack.c.b16 %v3243, %v3239
    %v4016 = vpack.c.b16 %v3248, %v3244
    %v4017 = vpack.c.b16 %v3249, %v3245
    %v4018 = vpack.c.b16 %v3250, %v3246
    %v4019 = vpack.c.b16 %v3251, %v3247
    %4788 = vmatprep.subr.bf16.mxu0 %v3253
    %4789 = vmatpush1.bf16.msra.mxu0 %v3252
    %4790 = vmatprep.subr.bf16.mxu0 %v3257
    %4791 = vmatpush1.bf16.msra.mxu0 %v3256
    %4792 = vmatprep.subr.bf16.mxu0 %v3261
    %4793 = vmatpush1.bf16.msra.mxu0 %v3260
    %4794 = vmatprep.subr.bf16.mxu0 %v3265
    %4795 = vmatpush1.bf16.msra.mxu0 %v3264
    %4796 = vmatprep.subr.bf16.mxu0 %v3269
    %4797 = vmatpush1.bf16.msra.mxu0 %v3268
    %4798 = vmatprep.subr.bf16.mxu0 %v3273
    %4799 = vmatpush1.bf16.msra.mxu0 %v3272
    %4800 = vmatprep.subr.bf16.mxu0 %v3277
    %4801 = vmatpush1.bf16.msra.mxu0 %v3276
    %4802 = vmatprep.subr.bf16.mxu0 %v3281
    %4803 = vmatpush1.bf16.msra.mxu0 %v3280
    %4804 = vmatprep.subr.bf16.mxu0 %v3285
    %4805 = vmatpush1.bf16.msra.mxu0 %v3284
    %4806 = vmatprep.subr.bf16.mxu0 %v3289
    %4807 = vmatpush1.bf16.msra.mxu0 %v3288
    %4808 = vmatprep.subr.bf16.mxu0 %v3293
    %4809 = vmatpush1.bf16.msra.mxu0 %v3292
    %4810 = vmatprep.subr.bf16.mxu0 %v3297
    %4811 = vmatpush1.bf16.msra.mxu0 %v3296
    %4812 = vmatprep.subr.bf16.mxu0 %v3301
    %4813 = vmatpush1.bf16.msra.mxu0 %v3300
    %4814 = vmatprep.subr.bf16.mxu0 %v3305
    %4815 = vmatpush1.bf16.msra.mxu0 %v3304
    %4816 = vmatprep.subr.bf16.mxu0 %v3309
    %4817 = vmatpush1.bf16.msra.mxu0 %v3308
    %4818 = vmatprep.subr.bf16.mxu0 %v3313
    %4819 = vmatpush1.bf16.msra.mxu0 %v3312
    %4820 = vmatprep.mubr.bf16.mxu0 %v135
    %4821 = vmatmul.mubr.bf16.gmra.mrb[0].mxu0 %v134
    %v4822 = vpop.f32.mrb[0].mxu0
    %v4823 = vadd.f32 %v931, %v4822
    %v4824 = vpop.f32.mrb[0].mxu0
    %v4825 = vadd.f32 %v935, %v4824
    %v4826 = vpop.f32.mrb[0].mxu0
    %v4827 = vadd.f32 %v931, %v4826
    %v4828 = vpop.f32.mrb[0].mxu0
    %v4829 = vadd.f32 %v935, %v4828
    %4830 = vdwg.mxu0
    %4831 = vmatprep.subr.bf16.mxu0 %v3317
    %4832 = vmatpush1.bf16.msra.mxu0 %v3316
    %4833 = vmatprep.subr.bf16.mxu0 %v3321
    %4834 = vmatpush1.bf16.msra.mxu0 %v3320
    %4835 = vmatprep.subr.bf16.mxu0 %v3325
    %4836 = vmatpush1.bf16.msra.mxu0 %v3324
    %4837 = vmatprep.subr.bf16.mxu0 %v3329
    %4838 = vmatpush1.bf16.msra.mxu0 %v3328
    %4839 = vmatprep.subr.bf16.mxu0 %v3333
    %4840 = vmatpush1.bf16.msra.mxu0 %v3332
    %4841 = vmatprep.subr.bf16.mxu0 %v3337
    %4842 = vmatpush1.bf16.msra.mxu0 %v3336
    %4843 = vmatprep.subr.bf16.mxu0 %v3341
    %4844 = vmatpush1.bf16.msra.mxu0 %v3340
    %4845 = vmatprep.subr.bf16.mxu0 %v3345
    %4846 = vmatpush1.bf16.msra.mxu0 %v3344
    %4847 = vmatprep.subr.bf16.mxu0 %v3349
    %4848 = vmatpush1.bf16.msra.mxu0 %v3348
    %4849 = vmatprep.subr.bf16.mxu0 %v3353
    %4850 = vmatpush1.bf16.msra.mxu0 %v3352
    %4851 = vmatprep.subr.bf16.mxu0 %v3357
    %4852 = vmatpush1.bf16.msra.mxu0 %v3356
    %4853 = vmatprep.subr.bf16.mxu0 %v3361
    %4854 = vmatpush1.bf16.msra.mxu0 %v3360
    %4855 = vmatprep.subr.bf16.mxu0 %v3365
    %4856 = vmatpush1.bf16.msra.mxu0 %v3364
    %4857 = vmatprep.subr.bf16.mxu0 %v3369
    %4858 = vmatpush1.bf16.msra.mxu0 %v3368
    %4859 = vmatprep.subr.bf16.mxu0 %v3373
    %4860 = vmatpush1.bf16.msra.mxu0 %v3372
    %4861 = vmatprep.subr.bf16.mxu0 %v3377
    %4862 = vmatpush1.bf16.msra.mxu0 %v3376
    %4863 = vmatprep.mubr.bf16.mxu0 %v137
    %4864 = vmatmul.mubr.bf16.gmra.mrb[0].mxu0 %v136
    %v4865 = vpop.f32.mrb[0].mxu0
    %v4866 = vadd.f32 %v4823, %v4865
    %v4867 = vpop.f32.mrb[0].mxu0
    %v4868 = vadd.f32 %v4825, %v4867
    %v4869 = vpop.f32.mrb[0].mxu0
    %v4870 = vadd.f32 %v4827, %v4869
    %v4871 = vpop.f32.mrb[0].mxu0
    %v4872 = vadd.f32 %v4829, %v4871
    %4873 = vdwg.mxu0
    %4874 = vmatprep.subr.bf16.mxu0 %v3381
    %4875 = vmatpush1.bf16.msra.mxu0 %v3380
    %4876 = vmatprep.subr.bf16.mxu0 %v3385
    %4877 = vmatpush1.bf16.msra.mxu0 %v3384
    %4878 = vmatprep.subr.bf16.mxu0 %v3389
    %4879 = vmatpush1.bf16.msra.mxu0 %v3388
    %4880 = vmatprep.subr.bf16.mxu0 %v3393
    %4881 = vmatpush1.bf16.msra.mxu0 %v3392
    %4882 = vmatprep.subr.bf16.mxu0 %v3397
    %4883 = vmatpush1.bf16.msra.mxu0 %v3396
    %4884 = vmatprep.subr.bf16.mxu0 %v3401
    %4885 = vmatpush1.bf16.msra.mxu0 %v3400
    %4886 = vmatprep.subr.bf16.mxu0 %v3405
    %4887 = vmatpush1.bf16.msra.mxu0 %v3404
    %4888 = vmatprep.subr.bf16.mxu0 %v3409
    %4889 = vmatpush1.bf16.msra.mxu0 %v3408
    %4890 = vmatprep.subr.bf16.mxu0 %v3413
    %4891 = vmatpush1.bf16.msra.mxu0 %v3412
    %4892 = vmatprep.subr.bf16.mxu0 %v3417
    %4893 = vmatpush1.bf16.msra.mxu0 %v3416
    %4894 = vmatprep.subr.bf16.mxu0 %v3421
    %4895 = vmatpush1.bf16.msra.mxu0 %v3420
    %4896 = vmatprep.subr.bf16.mxu0 %v3425
    %4897 = vmatpush1.bf16.msra.mxu0 %v3424
    %4898 = vmatprep.subr.bf16.mxu0 %v3429
    %4899 = vmatpush1.bf16.msra.mxu0 %v3428
    %4900 = vmatprep.subr.bf16.mxu0 %v3433
    %4901 = vmatpush1.bf16.msra.mxu0 %v3432
    %4902 = vmatprep.subr.bf16.mxu0 %v3437
    %4903 = vmatpush1.bf16.msra.mxu0 %v3436
    %4904 = vmatprep.subr.bf16.mxu0 %v3441
    %4905 = vmatpush1.bf16.msra.mxu0 %v3440
    %4906 = vmatprep.mubr.bf16.mxu0 %v139
    %4907 = vmatmul.mubr.bf16.gmra.mrb[0].mxu0 %v138
    %v4908 = vpop.f32.mrb[0].mxu0
    %v4909 = vadd.f32 %v4866, %v4908
    %v4910 = vpop.f32.mrb[0].mxu0
    %v4911 = vadd.f32 %v4868, %v4910
    %v4912 = vpop.f32.mrb[0].mxu0
    %v4913 = vadd.f32 %v4870, %v4912
    %v4914 = vpop.f32.mrb[0].mxu0
    %v4915 = vadd.f32 %v4872, %v4914
    %4916 = vdwg.mxu0
    %4917 = vmatprep.subr.bf16.mxu0 %v3445
    %4918 = vmatpush1.bf16.msra.mxu0 %v3444
    %4919 = vmatprep.subr.bf16.mxu0 %v3449
    %4920 = vmatpush1.bf16.msra.mxu0 %v3448
    %4921 = vmatprep.subr.bf16.mxu0 %v3453
    %4922 = vmatpush1.bf16.msra.mxu0 %v3452
    %4923 = vmatprep.subr.bf16.mxu0 %v3457
    %4924 = vmatpush1.bf16.msra.mxu0 %v3456
    %4925 = vmatprep.subr.bf16.mxu0 %v3461
    %4926 = vmatpush1.bf16.msra.mxu0 %v3460
    %4927 = vmatprep.subr.bf16.mxu0 %v3465
    %4928 = vmatpush1.bf16.msra.mxu0 %v3464
    %4929 = vmatprep.subr.bf16.mxu0 %v3469
    %4930 = vmatpush1.bf16.msra.mxu0 %v3468
    %4931 = vmatprep.subr.bf16.mxu0 %v3473
    %4932 = vmatpush1.bf16.msra.mxu0 %v3472
    %4933 = vmatprep.subr.bf16.mxu0 %v3477
    %4934 = vmatpush1.bf16.msra.mxu0 %v3476
    %4935 = vmatprep.subr.bf16.mxu0 %v3481
    %4936 = vmatpush1.bf16.msra.mxu0 %v3480
    %4937 = vmatprep.subr.bf16.mxu0 %v3485
    %4938 = vmatpush1.bf16.msra.mxu0 %v3484
    %4939 = vmatprep.subr.bf16.mxu0 %v3489
    %4940 = vmatpush1.bf16.msra.mxu0 %v3488
    %4941 = vmatprep.subr.bf16.mxu0 %v3493
    %4942 = vmatpush1.bf16.msra.mxu0 %v3492
    %4943 = vmatprep.subr.bf16.mxu0 %v3497
    %4944 = vmatpush1.bf16.msra.mxu0 %v3496
    %4945 = vmatprep.subr.bf16.mxu0 %v3501
    %4946 = vmatpush1.bf16.msra.mxu0 %v3500
    %4947 = vmatprep.subr.bf16.mxu0 %v3505
    %4948 = vmatpush1.bf16.msra.mxu0 %v3504
    %4949 = vmatprep.mubr.bf16.mxu0 %v141
    %4950 = vmatmul.mubr.bf16.gmra.mrb[0].mxu0 %v140
    %v4951 = vpop.f32.mrb[0].mxu0
    %v4952 = vadd.f32 %v4909, %v4951
    %v4953 = vpop.f32.mrb[0].mxu0
    %v4954 = vadd.f32 %v4911, %v4953
    %v4955 = vpop.f32.mrb[0].mxu0
    %v4956 = vadd.f32 %v4913, %v4955
    %v4957 = vpop.f32.mrb[0].mxu0
    %v4958 = vadd.f32 %v4915, %v4957
    %4959 = vdwg.mxu0
    %4960 = vmatprep.subr.bf16.mxu0 %v3509
    %4961 = vmatpush1.bf16.msra.mxu0 %v3508
    %4962 = vmatprep.subr.bf16.mxu0 %v3513
    %4963 = vmatpush1.bf16.msra.mxu0 %v3512
    %4964 = vmatprep.subr.bf16.mxu0 %v3517
    %4965 = vmatpush1.bf16.msra.mxu0 %v3516
    %4966 = vmatprep.subr.bf16.mxu0 %v3521
    %4967 = vmatpush1.bf16.msra.mxu0 %v3520
    %4968 = vmatprep.subr.bf16.mxu0 %v3525
    %4969 = vmatpush1.bf16.msra.mxu0 %v3524
    %4970 = vmatprep.subr.bf16.mxu0 %v3529
    %4971 = vmatpush1.bf16.msra.mxu0 %v3528
    %4972 = vmatprep.subr.bf16.mxu0 %v3533
    %4973 = vmatpush1.bf16.msra.mxu0 %v3532
    %4974 = vmatprep.subr.bf16.mxu0 %v3537
    %4975 = vmatpush1.bf16.msra.mxu0 %v3536
    %4976 = vmatprep.subr.bf16.mxu0 %v3541
    %4977 = vmatpush1.bf16.msra.mxu0 %v3540
    %4978 = vmatprep.subr.bf16.mxu0 %v3545
    %4979 = vmatpush1.bf16.msra.mxu0 %v3544
    %4980 = vmatprep.subr.bf16.mxu0 %v3549
    %4981 = vmatpush1.bf16.msra.mxu0 %v3548
    %4982 = vmatprep.subr.bf16.mxu0 %v3553
    %4983 = vmatpush1.bf16.msra.mxu0 %v3552
    %4984 = vmatprep.subr.bf16.mxu0 %v3557
    %4985 = vmatpush1.bf16.msra.mxu0 %v3556
    %4986 = vmatprep.subr.bf16.mxu0 %v3561
    %4987 = vmatpush1.bf16.msra.mxu0 %v3560
    %4988 = vmatprep.subr.bf16.mxu0 %v3565
    %4989 = vmatpush1.bf16.msra.mxu0 %v3564
    %4990 = vmatprep.subr.bf16.mxu0 %v3569
    %4991 = vmatpush1.bf16.msra.mxu0 %v3568
    %4992 = vmatprep.mubr.bf16.mxu0 %v143
    %4993 = vmatmul.mubr.bf16.gmra.mrb[0].mxu0 %v142
    %v4994 = vpop.f32.mrb[0].mxu0
    %v4995 = vadd.f32 %v4952, %v4994
    %v4996 = vpop.f32.mrb[0].mxu0
    %v4997 = vadd.f32 %v4954, %v4996
    %v4998 = vpop.f32.mrb[0].mxu0
    %v4999 = vadd.f32 %v4956, %v4998
    %v5000 = vpop.f32.mrb[0].mxu0
    %v5001 = vadd.f32 %v4958, %v5000
    %5002 = vdwg.mxu0
    %5003 = vmatprep.subr.bf16.mxu0 %v3573
    %5004 = vmatpush1.bf16.msra.mxu0 %v3572
    %5005 = vmatprep.subr.bf16.mxu0 %v3577
    %5006 = vmatpush1.bf16.msra.mxu0 %v3576
    %5007 = vmatprep.subr.bf16.mxu0 %v3581
    %5008 = vmatpush1.bf16.msra.mxu0 %v3580
    %5009 = vmatprep.subr.bf16.mxu0 %v3585
    %5010 = vmatpush1.bf16.msra.mxu0 %v3584
    %5011 = vmatprep.subr.bf16.mxu0 %v3589
    %5012 = vmatpush1.bf16.msra.mxu0 %v3588
    %5013 = vmatprep.subr.bf16.mxu0 %v3593
    %5014 = vmatpush1.bf16.msra.mxu0 %v3592
    %5015 = vmatprep.subr.bf16.mxu0 %v3597
    %5016 = vmatpush1.bf16.msra.mxu0 %v3596
    %5017 = vmatprep.subr.bf16.mxu0 %v3601
    %5018 = vmatpush1.bf16.msra.mxu0 %v3600
    %5019 = vmatprep.subr.bf16.mxu0 %v3605
    %5020 = vmatpush1.bf16.msra.mxu0 %v3604
    %5021 = vmatprep.subr.bf16.mxu0 %v3609
    %5022 = vmatpush1.bf16.msra.mxu0 %v3608
    %5023 = vmatprep.subr.bf16.mxu0 %v3613
    %5024 = vmatpush1.bf16.msra.mxu0 %v3612
    %5025 = vmatprep.subr.bf16.mxu0 %v3617
    %5026 = vmatpush1.bf16.msra.mxu0 %v3616
    %5027 = vmatprep.subr.bf16.mxu0 %v3621
    %5028 = vmatpush1.bf16.msra.mxu0 %v3620
    %5029 = vmatprep.subr.bf16.mxu0 %v3625
    %5030 = vmatpush1.bf16.msra.mxu0 %v3624
    %5031 = vmatprep.subr.bf16.mxu0 %v3629
    %5032 = vmatpush1.bf16.msra.mxu0 %v3628
    %5033 = vmatprep.subr.bf16.mxu0 %v3633
    %5034 = vmatpush1.bf16.msra.mxu0 %v3632
    %5035 = vmatprep.mubr.bf16.mxu0 %v145
    %5036 = vmatmul.mubr.bf16.gmra.mrb[0].mxu0 %v144
    %v5037 = vpop.f32.mrb[0].mxu0
    %v5038 = vadd.f32 %v4995, %v5037
    %v5039 = vpop.f32.mrb[0].mxu0
    %v5040 = vadd.f32 %v4997, %v5039
    %v5041 = vpop.f32.mrb[0].mxu0
    %v5042 = vadd.f32 %v4999, %v5041
    %v5043 = vpop.f32.mrb[0].mxu0
    %v5044 = vadd.f32 %v5001, %v5043
    %5045 = vdwg.mxu0
    %5046 = vmatprep.subr.bf16.mxu0 %v3637
    %5047 = vmatpush1.bf16.msra.mxu0 %v3636
    %5048 = vmatprep.subr.bf16.mxu0 %v3641
    %5049 = vmatpush1.bf16.msra.mxu0 %v3640
    %5050 = vmatprep.subr.bf16.mxu0 %v3645
    %5051 = vmatpush1.bf16.msra.mxu0 %v3644
    %5052 = vmatprep.subr.bf16.mxu0 %v3649
    %5053 = vmatpush1.bf16.msra.mxu0 %v3648
    %5054 = vmatprep.subr.bf16.mxu0 %v3653
    %5055 = vmatpush1.bf16.msra.mxu0 %v3652
    %5056 = vmatprep.subr.bf16.mxu0 %v3657
    %5057 = vmatpush1.bf16.msra.mxu0 %v3656
    %5058 = vmatprep.subr.bf16.mxu0 %v3661
    %5059 = vmatpush1.bf16.msra.mxu0 %v3660
    %5060 = vmatprep.subr.bf16.mxu0 %v3665
    %5061 = vmatpush1.bf16.msra.mxu0 %v3664
    %5062 = vmatprep.subr.bf16.mxu0 %v3669
    %5063 = vmatpush1.bf16.msra.mxu0 %v3668
    %5064 = vmatprep.subr.bf16.mxu0 %v3673
    %5065 = vmatpush1.bf16.msra.mxu0 %v3672
    %5066 = vmatprep.subr.bf16.mxu0 %v3677
    %5067 = vmatpush1.bf16.msra.mxu0 %v3676
    %5068 = vmatprep.subr.bf16.mxu0 %v3681
    %5069 = vmatpush1.bf16.msra.mxu0 %v3680
    %5070 = vmatprep.subr.bf16.mxu0 %v3685
    %5071 = vmatpush1.bf16.msra.mxu0 %v3684
    %5072 = vmatprep.subr.bf16.mxu0 %v3689
    %5073 = vmatpush1.bf16.msra.mxu0 %v3688
    %5074 = vmatprep.subr.bf16.mxu0 %v3693
    %5075 = vmatpush1.bf16.msra.mxu0 %v3692
    %5076 = vmatprep.subr.bf16.mxu0 %v3697
    %5077 = vmatpush1.bf16.msra.mxu0 %v3696
    %5078 = vmatprep.mubr.bf16.mxu0 %v147
    %5079 = vmatmul.mubr.bf16.gmra.mrb[0].mxu0 %v146
    %v5080 = vpop.f32.mrb[0].mxu0
    %v5081 = vadd.f32 %v5038, %v5080
    %v5082 = vpop.f32.mrb[0].mxu0
    %v5083 = vadd.f32 %v5040, %v5082
    %v5084 = vpop.f32.mrb[0].mxu0
    %v5085 = vadd.f32 %v5042, %v5084
    %v5086 = vpop.f32.mrb[0].mxu0
    %v5087 = vadd.f32 %v5044, %v5086
    %5088 = vdwg.mxu0
    %5089 = vmatprep.subr.bf16.mxu0 %v3701
    %5090 = vmatpush1.bf16.msra.mxu0 %v3700
    %5091 = vmatprep.subr.bf16.mxu0 %v3705
    %5092 = vmatpush1.bf16.msra.mxu0 %v3704
    %5093 = vmatprep.subr.bf16.mxu0 %v3709
    %5094 = vmatpush1.bf16.msra.mxu0 %v3708
    %5095 = vmatprep.subr.bf16.mxu0 %v3713
    %5096 = vmatpush1.bf16.msra.mxu0 %v3712
    %5097 = vmatprep.subr.bf16.mxu0 %v3717
    %5098 = vmatpush1.bf16.msra.mxu0 %v3716
    %5099 = vmatprep.subr.bf16.mxu0 %v3721
    %5100 = vmatpush1.bf16.msra.mxu0 %v3720
    %5101 = vmatprep.subr.bf16.mxu0 %v3725
    %5102 = vmatpush1.bf16.msra.mxu0 %v3724
    %5103 = vmatprep.subr.bf16.mxu0 %v3729
    %5104 = vmatpush1.bf16.msra.mxu0 %v3728
    %5105 = vmatprep.subr.bf16.mxu0 %v3733
    %5106 = vmatpush1.bf16.msra.mxu0 %v3732
    %5107 = vmatprep.subr.bf16.mxu0 %v3737
    %5108 = vmatpush1.bf16.msra.mxu0 %v3736
    %5109 = vmatprep.subr.bf16.mxu0 %v3741
    %5110 = vmatpush1.bf16.msra.mxu0 %v3740
    %5111 = vmatprep.subr.bf16.mxu0 %v3745
    %5112 = vmatpush1.bf16.msra.mxu0 %v3744
    %5113 = vmatprep.subr.bf16.mxu0 %v3749
    %5114 = vmatpush1.bf16.msra.mxu0 %v3748
    %5115 = vmatprep.subr.bf16.mxu0 %v3753
    %5116 = vmatpush1.bf16.msra.mxu0 %v3752
    %5117 = vmatprep.subr.bf16.mxu0 %v3757
    %5118 = vmatpush1.bf16.msra.mxu0 %v3756
    %5119 = vmatprep.subr.bf16.mxu0 %v3761
    %5120 = vmatpush1.bf16.msra.mxu0 %v3760
    %5121 = vmatprep.mubr.bf16.mxu0 %v149
    %5122 = vmatmul.mubr.bf16.gmra.mrb[0].mxu0 %v148
    %v5123 = vpop.f32.mrb[0].mxu0
    %v5124 = vadd.f32 %v5081, %v5123
    %v5125 = vpop.f32.mrb[0].mxu0
    %v5126 = vadd.f32 %v5083, %v5125
    %v5127 = vpop.f32.mrb[0].mxu0
    %v5128 = vadd.f32 %v5085, %v5127
    %v5129 = vpop.f32.mrb[0].mxu0
    %v5130 = vadd.f32 %v5087, %v5129
    %5131 = vdwg.mxu0
    %5132 = vmatprep.subr.bf16.mxu0 %v3765
    %5133 = vmatpush1.bf16.msra.mxu0 %v3764
    %5134 = vmatprep.subr.bf16.mxu0 %v3769
    %5135 = vmatpush1.bf16.msra.mxu0 %v3768
    %5136 = vmatprep.subr.bf16.mxu0 %v3773
    %5137 = vmatpush1.bf16.msra.mxu0 %v3772
    %5138 = vmatprep.subr.bf16.mxu0 %v3777
    %5139 = vmatpush1.bf16.msra.mxu0 %v3776
    %5140 = vmatprep.subr.bf16.mxu0 %v3781
    %5141 = vmatpush1.bf16.msra.mxu0 %v3780
    %5142 = vmatprep.subr.bf16.mxu0 %v3785
    %5143 = vmatpush1.bf16.msra.mxu0 %v3784
    %5144 = vmatprep.subr.bf16.mxu0 %v3789
    %5145 = vmatpush1.bf16.msra.mxu0 %v3788
    %5146 = vmatprep.subr.bf16.mxu0 %v3793
    %5147 = vmatpush1.bf16.msra.mxu0 %v3792
    %5148 = vmatprep.subr.bf16.mxu0 %v3797
    %5149 = vmatpush1.bf16.msra.mxu0 %v3796
    %5150 = vmatprep.subr.bf16.mxu0 %v3801
    %5151 = vmatpush1.bf16.msra.mxu0 %v3800
    %5152 = vmatprep.subr.bf16.mxu0 %v3805
    %5153 = vmatpush1.bf16.msra.mxu0 %v3804
    %5154 = vmatprep.subr.bf16.mxu0 %v3809
    %5155 = vmatpush1.bf16.msra.mxu0 %v3808
    %5156 = vmatprep.subr.bf16.mxu0 %v3813
    %5157 = vmatpush1.bf16.msra.mxu0 %v3812
    %5158 = vmatprep.subr.bf16.mxu0 %v3817
    %5159 = vmatpush1.bf16.msra.mxu0 %v3816
    %5160 = vmatprep.subr.bf16.mxu0 %v3821
    %5161 = vmatpush1.bf16.msra.mxu0 %v3820
    %5162 = vmatprep.subr.bf16.mxu0 %v3825
    %5163 = vmatpush1.bf16.msra.mxu0 %v3824
    %5164 = vmatprep.mubr.bf16.mxu0 %v151
    %5165 = vmatmul.mubr.bf16.gmra.mrb[0].mxu0 %v150
    %v5166 = vpop.f32.mrb[0].mxu0
    %v5167 = vadd.f32 %v5124, %v5166
    %v5168 = vpop.f32.mrb[0].mxu0
    %v5169 = vadd.f32 %v5126, %v5168
    %v5170 = vpop.f32.mrb[0].mxu0
    %v5171 = vadd.f32 %v5128, %v5170
    %v5172 = vpop.f32.mrb[0].mxu0
    %v5173 = vadd.f32 %v5130, %v5172
    %5174 = vdwg.mxu0
    %5175 = vmatprep.subr.bf16.mxu0 %v3829
    %5176 = vmatpush1.bf16.msra.mxu0 %v3828
    %5177 = vmatprep.subr.bf16.mxu0 %v3833
    %5178 = vmatpush1.bf16.msra.mxu0 %v3832
    %5179 = vmatprep.subr.bf16.mxu0 %v3837
    %5180 = vmatpush1.bf16.msra.mxu0 %v3836
    %5181 = vmatprep.subr.bf16.mxu0 %v3841
    %5182 = vmatpush1.bf16.msra.mxu0 %v3840
    %5183 = vmatprep.subr.bf16.mxu0 %v3845
    %5184 = vmatpush1.bf16.msra.mxu0 %v3844
    %5185 = vmatprep.subr.bf16.mxu0 %v3849
    %5186 = vmatpush1.bf16.msra.mxu0 %v3848
    %5187 = vmatprep.subr.bf16.mxu0 %v3853
    %5188 = vmatpush1.bf16.msra.mxu0 %v3852
    %5189 = vmatprep.subr.bf16.mxu0 %v3857
    %5190 = vmatpush1.bf16.msra.mxu0 %v3856
    %5191 = vmatprep.subr.bf16.mxu0 %v3861
    %5192 = vmatpush1.bf16.msra.mxu0 %v3860
    %5193 = vmatprep.subr.bf16.mxu0 %v3865
    %5194 = vmatpush1.bf16.msra.mxu0 %v3864
    %5195 = vmatprep.subr.bf16.mxu0 %v3869
    %5196 = vmatpush1.bf16.msra.mxu0 %v3868
    %5197 = vmatprep.subr.bf16.mxu0 %v3873
    %5198 = vmatpush1.bf16.msra.mxu0 %v3872
    %5199 = vmatprep.subr.bf16.mxu0 %v3877
    %5200 = vmatpush1.bf16.msra.mxu0 %v3876
    %5201 = vmatprep.subr.bf16.mxu0 %v3881
    %5202 = vmatpush1.bf16.msra.mxu0 %v3880
    %5203 = vmatprep.subr.bf16.mxu0 %v3885
    %5204 = vmatpush1.bf16.msra.mxu0 %v3884
    %5205 = vmatprep.subr.bf16.mxu0 %v3889
    %5206 = vmatpush1.bf16.msra.mxu0 %v3888
    %5207 = vmatprep.mubr.bf16.mxu0 %v153
    %5208 = vmatmul.mubr.bf16.gmra.mrb[0].mxu0 %v152
    %v5209 = vpop.f32.mrb[0].mxu0
    %v5210 = vadd.f32 %v5167, %v5209
    %v5211 = vpop.f32.mrb[0].mxu0
    %v5212 = vadd.f32 %v5169, %v5211
    %v5213 = vpop.f32.mrb[0].mxu0
    %v5214 = vadd.f32 %v5171, %v5213
    %v5215 = vpop.f32.mrb[0].mxu0
    %v5216 = vadd.f32 %v5173, %v5215
    %5217 = vdwg.mxu0
    %5218 = vmatprep.subr.bf16.mxu0 %v3893
    %5219 = vmatpush1.bf16.msra.mxu0 %v3892
    %5220 = vmatprep.subr.bf16.mxu0 %v3897
    %5221 = vmatpush1.bf16.msra.mxu0 %v3896
    %5222 = vmatprep.subr.bf16.mxu0 %v3901
    %5223 = vmatpush1.bf16.msra.mxu0 %v3900
    %5224 = vmatprep.subr.bf16.mxu0 %v3905
    %5225 = vmatpush1.bf16.msra.mxu0 %v3904
    %5226 = vmatprep.subr.bf16.mxu0 %v3909
    %5227 = vmatpush1.bf16.msra.mxu0 %v3908
    %5228 = vmatprep.subr.bf16.mxu0 %v3913
    %5229 = vmatpush1.bf16.msra.mxu0 %v3912
    %5230 = vmatprep.subr.bf16.mxu0 %v3917
    %5231 = vmatpush1.bf16.msra.mxu0 %v3916
    %5232 = vmatprep.subr.bf16.mxu0 %v3921
    %5233 = vmatpush1.bf16.msra.mxu0 %v3920
    %5234 = vmatprep.subr.bf16.mxu0 %v3925
    %5235 = vmatpush1.bf16.msra.mxu0 %v3924
    %5236 = vmatprep.subr.bf16.mxu0 %v3929
    %5237 = vmatpush1.bf16.msra.mxu0 %v3928
    %5238 = vmatprep.subr.bf16.mxu0 %v3933
    %5239 = vmatpush1.bf16.msra.mxu0 %v3932
    %5240 = vmatprep.subr.bf16.mxu0 %v3937
    %5241 = vmatpush1.bf16.msra.mxu0 %v3936
    %5242 = vmatprep.subr.bf16.mxu0 %v3941
    %5243 = vmatpush1.bf16.msra.mxu0 %v3940
    %5244 = vmatprep.subr.bf16.mxu0 %v3945
    %5245 = vmatpush1.bf16.msra.mxu0 %v3944
    %5246 = vmatprep.subr.bf16.mxu0 %v3949
    %5247 = vmatpush1.bf16.msra.mxu0 %v3948
    %5248 = vmatprep.subr.bf16.mxu0 %v3953
    %5249 = vmatpush1.bf16.msra.mxu0 %v3952
    %5250 = vmatprep.mubr.bf16.mxu0 %v155
    %5251 = vmatmul.mubr.bf16.gmra.mrb[0].mxu0 %v154
    %v5252 = vpop.f32.mrb[0].mxu0
    %v5253 = vadd.f32 %v5210, %v5252
    %v5254 = vpop.f32.mrb[0].mxu0
    %v5255 = vadd.f32 %v5212, %v5254
    %v5256 = vpop.f32.mrb[0].mxu0
    %v5257 = vadd.f32 %v5214, %v5256
    %v5258 = vpop.f32.mrb[0].mxu0
    %v5259 = vadd.f32 %v5216, %v5258
    %5260 = vdwg.mxu0
    %5261 = vmatprep.subr.bf16.mxu0 %v3957
    %5262 = vmatpush1.bf16.msra.mxu0 %v3956
    %5263 = vmatprep.subr.bf16.mxu0 %v3961
    %5264 = vmatpush1.bf16.msra.mxu0 %v3960
    %5265 = vmatprep.subr.bf16.mxu0 %v3965
    %5266 = vmatpush1.bf16.msra.mxu0 %v3964
    %5267 = vmatprep.subr.bf16.mxu0 %v3969
    %5268 = vmatpush1.bf16.msra.mxu0 %v3968
    %5269 = vmatprep.subr.bf16.mxu0 %v3973
    %5270 = vmatpush1.bf16.msra.mxu0 %v3972
    %5271 = vmatprep.subr.bf16.mxu0 %v3977
    %5272 = vmatpush1.bf16.msra.mxu0 %v3976
    %5273 = vmatprep.subr.bf16.mxu0 %v3981
    %5274 = vmatpush1.bf16.msra.mxu0 %v3980
    %5275 = vmatprep.subr.bf16.mxu0 %v3985
    %5276 = vmatpush1.bf16.msra.mxu0 %v3984
    %5277 = vmatprep.subr.bf16.mxu0 %v3989
    %5278 = vmatpush1.bf16.msra.mxu0 %v3988
    %5279 = vmatprep.subr.bf16.mxu0 %v3993
    %5280 = vmatpush1.bf16.msra.mxu0 %v3992
    %5281 = vmatprep.subr.bf16.mxu0 %v3997
    %5282 = vmatpush1.bf16.msra.mxu0 %v3996
    %5283 = vmatprep.subr.bf16.mxu0 %v4001
    %5284 = vmatpush1.bf16.msra.mxu0 %v4000
    %5285 = vmatprep.subr.bf16.mxu0 %v4005
    %5286 = vmatpush1.bf16.msra.mxu0 %v4004
    %5287 = vmatprep.subr.bf16.mxu0 %v4009
    %5288 = vmatpush1.bf16.msra.mxu0 %v4008
    %5289 = vmatprep.subr.bf16.mxu0 %v4013
    %5290 = vmatpush1.bf16.msra.mxu0 %v4012
    %5291 = vmatprep.subr.bf16.mxu0 %v4017
    %5292 = vmatpush1.bf16.msra.mxu0 %v4016
    %5293 = vmatprep.mubr.bf16.mxu0 %v157
    %5294 = vmatmul.mubr.bf16.gmra.mrb[0].mxu0 %v156
    %v5295 = vpop.f32.mrb[0].mxu0
    %v5296 = vadd.f32 %v5253, %v5295
    %v5297 = vpop.f32.mrb[0].mxu0
    %v5298 = vadd.f32 %v5255, %v5297
    %v5299 = vpop.f32.mrb[0].mxu0
    %v5300 = vadd.f32 %v5257, %v5299
    %v5301 = vpop.f32.mrb[0].mxu0
    %v5302 = vadd.f32 %v5259, %v5301
    %5303 = vdwg.mxu0
    %5304 = vmatprep.subr.bf16.mxu0 %v3255
    %5305 = vmatpush1.bf16.msra.mxu0 %v3254
    %5306 = vmatprep.subr.bf16.mxu0 %v3259
    %5307 = vmatpush1.bf16.msra.mxu0 %v3258
    %5308 = vmatprep.subr.bf16.mxu0 %v3263
    %5309 = vmatpush1.bf16.msra.mxu0 %v3262
    %5310 = vmatprep.subr.bf16.mxu0 %v3267
    %5311 = vmatpush1.bf16.msra.mxu0 %v3266
    %5312 = vmatprep.subr.bf16.mxu0 %v3271
    %5313 = vmatpush1.bf16.msra.mxu0 %v3270
    %5314 = vmatprep.subr.bf16.mxu0 %v3275
    %5315 = vmatpush1.bf16.msra.mxu0 %v3274
    %5316 = vmatprep.subr.bf16.mxu0 %v3279
    %5317 = vmatpush1.bf16.msra.mxu0 %v3278
    %5318 = vmatprep.subr.bf16.mxu0 %v3283
    %5319 = vmatpush1.bf16.msra.mxu0 %v3282
    %5320 = vmatprep.subr.bf16.mxu0 %v3287
    %5321 = vmatpush1.bf16.msra.mxu0 %v3286
    %5322 = vmatprep.subr.bf16.mxu0 %v3291
    %5323 = vmatpush1.bf16.msra.mxu0 %v3290
    %5324 = vmatprep.subr.bf16.mxu0 %v3295
    %5325 = vmatpush1.bf16.msra.mxu0 %v3294
    %5326 = vmatprep.subr.bf16.mxu0 %v3299
    %5327 = vmatpush1.bf16.msra.mxu0 %v3298
    %5328 = vmatprep.subr.bf16.mxu0 %v3303
    %5329 = vmatpush1.bf16.msra.mxu0 %v3302
    %5330 = vmatprep.subr.bf16.mxu0 %v3307
    %5331 = vmatpush1.bf16.msra.mxu0 %v3306
    %5332 = vmatprep.subr.bf16.mxu0 %v3311
    %5333 = vmatpush1.bf16.msra.mxu0 %v3310
    %5334 = vmatprep.subr.bf16.mxu0 %v3315
    %5335 = vmatpush1.bf16.msra.mxu0 %v3314
    %5336 = vmatprep.mubr.bf16.mxu0 %v135
    %5337 = vmatmul.mubr.bf16.gmra.mrb[0].mxu0 %v134
    %v5338 = vpop.f32.mrb[0].mxu0
    %v5339 = vadd.f32 %v939, %v5338
    %v5340 = vpop.f32.mrb[0].mxu0
    %v5341 = vadd.f32 %v943, %v5340
    %v5342 = vpop.f32.mrb[0].mxu0
    %v5343 = vadd.f32 %v939, %v5342
    %v5344 = vpop.f32.mrb[0].mxu0
    %v5345 = vadd.f32 %v943, %v5344
    %5346 = vdwg.mxu0
    %5347 = vmatprep.subr.bf16.mxu0 %v3319
    %5348 = vmatpush1.bf16.msra.mxu0 %v3318
    %5349 = vmatprep.subr.bf16.mxu0 %v3323
    %5350 = vmatpush1.bf16.msra.mxu0 %v3322
    %5351 = vmatprep.subr.bf16.mxu0 %v3327
    %5352 = vmatpush1.bf16.msra.mxu0 %v3326
    %5353 = vmatprep.subr.bf16.mxu0 %v3331
    %5354 = vmatpush1.bf16.msra.mxu0 %v3330
    %5355 = vmatprep.subr.bf16.mxu0 %v3335
    %5356 = vmatpush1.bf16.msra.mxu0 %v3334
    %5357 = vmatprep.subr.bf16.mxu0 %v3339
    %5358 = vmatpush1.bf16.msra.mxu0 %v3338
    %5359 = vmatprep.subr.bf16.mxu0 %v3343
    %5360 = vmatpush1.bf16.msra.mxu0 %v3342
    %5361 = vmatprep.subr.bf16.mxu0 %v3347
    %5362 = vmatpush1.bf16.msra.mxu0 %v3346
    %5363 = vmatprep.subr.bf16.mxu0 %v3351
    %5364 = vmatpush1.bf16.msra.mxu0 %v3350
    %5365 = vmatprep.subr.bf16.mxu0 %v3355
    %5366 = vmatpush1.bf16.msra.mxu0 %v3354
    %5367 = vmatprep.subr.bf16.mxu0 %v3359
    %5368 = vmatpush1.bf16.msra.mxu0 %v3358
    %5369 = vmatprep.subr.bf16.mxu0 %v3363
    %5370 = vmatpush1.bf16.msra.mxu0 %v3362
    %5371 = vmatprep.subr.bf16.mxu0 %v3367
    %5372 = vmatpush1.bf16.msra.mxu0 %v3366
    %5373 = vmatprep.subr.bf16.mxu0 %v3371
    %5374 = vmatpush1.bf16.msra.mxu0 %v3370
    %5375 = vmatprep.subr.bf16.mxu0 %v3375
    %5376 = vmatpush1.bf16.msra.mxu0 %v3374
    %5377 = vmatprep.subr.bf16.mxu0 %v3379
    %5378 = vmatpush1.bf16.msra.mxu0 %v3378
    %5379 = vmatprep.mubr.bf16.mxu0 %v137
    %5380 = vmatmul.mubr.bf16.gmra.mrb[0].mxu0 %v136
    %v5381 = vpop.f32.mrb[0].mxu0
    %v5382 = vadd.f32 %v5339, %v5381
    %v5383 = vpop.f32.mrb[0].mxu0
    %v5384 = vadd.f32 %v5341, %v5383
    %v5385 = vpop.f32.mrb[0].mxu0
    %v5386 = vadd.f32 %v5343, %v5385
    %v5387 = vpop.f32.mrb[0].mxu0
    %v5388 = vadd.f32 %v5345, %v5387
    %5389 = vdwg.mxu0
    %5390 = vmatprep.subr.bf16.mxu0 %v3383
    %5391 = vmatpush1.bf16.msra.mxu0 %v3382
    %5392 = vmatprep.subr.bf16.mxu0 %v3387
    %5393 = vmatpush1.bf16.msra.mxu0 %v3386
    %5394 = vmatprep.subr.bf16.mxu0 %v3391
    %5395 = vmatpush1.bf16.msra.mxu0 %v3390
    %5396 = vmatprep.subr.bf16.mxu0 %v3395
    %5397 = vmatpush1.bf16.msra.mxu0 %v3394
    %5398 = vmatprep.subr.bf16.mxu0 %v3399
    %5399 = vmatpush1.bf16.msra.mxu0 %v3398
    %5400 = vmatprep.subr.bf16.mxu0 %v3403
    %5401 = vmatpush1.bf16.msra.mxu0 %v3402
    %5402 = vmatprep.subr.bf16.mxu0 %v3407
    %5403 = vmatpush1.bf16.msra.mxu0 %v3406
    %5404 = vmatprep.subr.bf16.mxu0 %v3411
    %5405 = vmatpush1.bf16.msra.mxu0 %v3410
    %5406 = vmatprep.subr.bf16.mxu0 %v3415
    %5407 = vmatpush1.bf16.msra.mxu0 %v3414
    %5408 = vmatprep.subr.bf16.mxu0 %v3419
    %5409 = vmatpush1.bf16.msra.mxu0 %v3418
    %5410 = vmatprep.subr.bf16.mxu0 %v3423
    %5411 = vmatpush1.bf16.msra.mxu0 %v3422
    %5412 = vmatprep.subr.bf16.mxu0 %v3427
    %5413 = vmatpush1.bf16.msra.mxu0 %v3426
    %5414 = vmatprep.subr.bf16.mxu0 %v3431
    %5415 = vmatpush1.bf16.msra.mxu0 %v3430
    %5416 = vmatprep.subr.bf16.mxu0 %v3435
    %5417 = vmatpush1.bf16.msra.mxu0 %v3434
    %5418 = vmatprep.subr.bf16.mxu0 %v3439
    %5419 = vmatpush1.bf16.msra.mxu0 %v3438
    %5420 = vmatprep.subr.bf16.mxu0 %v3443
    %5421 = vmatpush1.bf16.msra.mxu0 %v3442
    %5422 = vmatprep.mubr.bf16.mxu0 %v139
    %5423 = vmatmul.mubr.bf16.gmra.mrb[0].mxu0 %v138
    %v5424 = vpop.f32.mrb[0].mxu0
    %v5425 = vadd.f32 %v5382, %v5424
    %v5426 = vpop.f32.mrb[0].mxu0
    %v5427 = vadd.f32 %v5384, %v5426
    %v5428 = vpop.f32.mrb[0].mxu0
    %v5429 = vadd.f32 %v5386, %v5428
    %v5430 = vpop.f32.mrb[0].mxu0
    %v5431 = vadd.f32 %v5388, %v5430
    %5432 = vdwg.mxu0
    %5433 = vmatprep.subr.bf16.mxu0 %v3447
    %5434 = vmatpush1.bf16.msra.mxu0 %v3446
    %5435 = vmatprep.subr.bf16.mxu0 %v3451
    %5436 = vmatpush1.bf16.msra.mxu0 %v3450
    %5437 = vmatprep.subr.bf16.mxu0 %v3455
    %5438 = vmatpush1.bf16.msra.mxu0 %v3454
    %5439 = vmatprep.subr.bf16.mxu0 %v3459
    %5440 = vmatpush1.bf16.msra.mxu0 %v3458
    %5441 = vmatprep.subr.bf16.mxu0 %v3463
    %5442 = vmatpush1.bf16.msra.mxu0 %v3462
    %5443 = vmatprep.subr.bf16.mxu0 %v3467
    %5444 = vmatpush1.bf16.msra.mxu0 %v3466
    %5445 = vmatprep.subr.bf16.mxu0 %v3471
    %5446 = vmatpush1.bf16.msra.mxu0 %v3470
    %5447 = vmatprep.subr.bf16.mxu0 %v3475
    %5448 = vmatpush1.bf16.msra.mxu0 %v3474
    %5449 = vmatprep.subr.bf16.mxu0 %v3479
    %5450 = vmatpush1.bf16.msra.mxu0 %v3478
    %5451 = vmatprep.subr.bf16.mxu0 %v3483
    %5452 = vmatpush1.bf16.msra.mxu0 %v3482
    %5453 = vmatprep.subr.bf16.mxu0 %v3487
    %5454 = vmatpush1.bf16.msra.mxu0 %v3486
    %5455 = vmatprep.subr.bf16.mxu0 %v3491
    %5456 = vmatpush1.bf16.msra.mxu0 %v3490
    %5457 = vmatprep.subr.bf16.mxu0 %v3495
    %5458 = vmatpush1.bf16.msra.mxu0 %v3494
    %5459 = vmatprep.subr.bf16.mxu0 %v3499
    %5460 = vmatpush1.bf16.msra.mxu0 %v3498
    %5461 = vmatprep.subr.bf16.mxu0 %v3503
    %5462 = vmatpush1.bf16.msra.mxu0 %v3502
    %5463 = vmatprep.subr.bf16.mxu0 %v3507
    %5464 = vmatpush1.bf16.msra.mxu0 %v3506
    %5465 = vmatprep.mubr.bf16.mxu0 %v141
    %5466 = vmatmul.mubr.bf16.gmra.mrb[0].mxu0 %v140
    %v5467 = vpop.f32.mrb[0].mxu0
    %v5468 = vadd.f32 %v5425, %v5467
    %v5469 = vpop.f32.mrb[0].mxu0
    %v5470 = vadd.f32 %v5427, %v5469
    %v5471 = vpop.f32.mrb[0].mxu0
    %v5472 = vadd.f32 %v5429, %v5471
    %v5473 = vpop.f32.mrb[0].mxu0
    %v5474 = vadd.f32 %v5431, %v5473
    %5475 = vdwg.mxu0
    %5476 = vmatprep.subr.bf16.mxu0 %v3511
    %5477 = vmatpush1.bf16.msra.mxu0 %v3510
    %5478 = vmatprep.subr.bf16.mxu0 %v3515
    %5479 = vmatpush1.bf16.msra.mxu0 %v3514
    %5480 = vmatprep.subr.bf16.mxu0 %v3519
    %5481 = vmatpush1.bf16.msra.mxu0 %v3518
    %5482 = vmatprep.subr.bf16.mxu0 %v3523
    %5483 = vmatpush1.bf16.msra.mxu0 %v3522
    %5484 = vmatprep.subr.bf16.mxu0 %v3527
    %5485 = vmatpush1.bf16.msra.mxu0 %v3526
    %5486 = vmatprep.subr.bf16.mxu0 %v3531
    %5487 = vmatpush1.bf16.msra.mxu0 %v3530
    %5488 = vmatprep.subr.bf16.mxu0 %v3535
    %5489 = vmatpush1.bf16.msra.mxu0 %v3534
    %5490 = vmatprep.subr.bf16.mxu0 %v3539
    %5491 = vmatpush1.bf16.msra.mxu0 %v3538
    %5492 = vmatprep.subr.bf16.mxu0 %v3543
    %5493 = vmatpush1.bf16.msra.mxu0 %v3542
    %5494 = vmatprep.subr.bf16.mxu0 %v3547
    %5495 = vmatpush1.bf16.msra.mxu0 %v3546
    %5496 = vmatprep.subr.bf16.mxu0 %v3551
    %5497 = vmatpush1.bf16.msra.mxu0 %v3550
    %5498 = vmatprep.subr.bf16.mxu0 %v3555
    %5499 = vmatpush1.bf16.msra.mxu0 %v3554
    %5500 = vmatprep.subr.bf16.mxu0 %v3559
    %5501 = vmatpush1.bf16.msra.mxu0 %v3558
    %5502 = vmatprep.subr.bf16.mxu0 %v3563
    %5503 = vmatpush1.bf16.msra.mxu0 %v3562
    %5504 = vmatprep.subr.bf16.mxu0 %v3567
    %5505 = vmatpush1.bf16.msra.mxu0 %v3566
    %5506 = vmatprep.subr.bf16.mxu0 %v3571
    %5507 = vmatpush1.bf16.msra.mxu0 %v3570
    %5508 = vmatprep.mubr.bf16.mxu0 %v143
    %5509 = vmatmul.mubr.bf16.gmra.mrb[0].mxu0 %v142
    %v5510 = vpop.f32.mrb[0].mxu0
    %v5511 = vadd.f32 %v5468, %v5510
    %v5512 = vpop.f32.mrb[0].mxu0
    %v5513 = vadd.f32 %v5470, %v5512
    %v5514 = vpop.f32.mrb[0].mxu0
    %v5515 = vadd.f32 %v5472, %v5514
    %v5516 = vpop.f32.mrb[0].mxu0
    %v5517 = vadd.f32 %v5474, %v5516
    %5518 = vdwg.mxu0
    %5519 = vmatprep.subr.bf16.mxu0 %v3575
    %5520 = vmatpush1.bf16.msra.mxu0 %v3574
    %5521 = vmatprep.subr.bf16.mxu0 %v3579
    %5522 = vmatpush1.bf16.msra.mxu0 %v3578
    %5523 = vmatprep.subr.bf16.mxu0 %v3583
    %5524 = vmatpush1.bf16.msra.mxu0 %v3582
    %5525 = vmatprep.subr.bf16.mxu0 %v3587
    %5526 = vmatpush1.bf16.msra.mxu0 %v3586
    %5527 = vmatprep.subr.bf16.mxu0 %v3591
    %5528 = vmatpush1.bf16.msra.mxu0 %v3590
    %5529 = vmatprep.subr.bf16.mxu0 %v3595
    %5530 = vmatpush1.bf16.msra.mxu0 %v3594
    %5531 = vmatprep.subr.bf16.mxu0 %v3599
    %5532 = vmatpush1.bf16.msra.mxu0 %v3598
    %5533 = vmatprep.subr.bf16.mxu0 %v3603
    %5534 = vmatpush1.bf16.msra.mxu0 %v3602
    %5535 = vmatprep.subr.bf16.mxu0 %v3607
    %5536 = vmatpush1.bf16.msra.mxu0 %v3606
    %5537 = vmatprep.subr.bf16.mxu0 %v3611
    %5538 = vmatpush1.bf16.msra.mxu0 %v3610
    %5539 = vmatprep.subr.bf16.mxu0 %v3615
    %5540 = vmatpush1.bf16.msra.mxu0 %v3614
    %5541 = vmatprep.subr.bf16.mxu0 %v3619
    %5542 = vmatpush1.bf16.msra.mxu0 %v3618
    %5543 = vmatprep.subr.bf16.mxu0 %v3623
    %5544 = vmatpush1.bf16.msra.mxu0 %v3622
    %5545 = vmatprep.subr.bf16.mxu0 %v3627
    %5546 = vmatpush1.bf16.msra.mxu0 %v3626
    %5547 = vmatprep.subr.bf16.mxu0 %v3631
    %5548 = vmatpush1.bf16.msra.mxu0 %v3630
    %5549 = vmatprep.subr.bf16.mxu0 %v3635
    %5550 = vmatpush1.bf16.msra.mxu0 %v3634
    %5551 = vmatprep.mubr.bf16.mxu0 %v145
    %5552 = vmatmul.mubr.bf16.gmra.mrb[0].mxu0 %v144
    %v5553 = vpop.f32.mrb[0].mxu0
    %v5554 = vadd.f32 %v5511, %v5553
    %v5555 = vpop.f32.mrb[0].mxu0
    %v5556 = vadd.f32 %v5513, %v5555
    %v5557 = vpop.f32.mrb[0].mxu0
    %v5558 = vadd.f32 %v5515, %v5557
    %v5559 = vpop.f32.mrb[0].mxu0
    %v5560 = vadd.f32 %v5517, %v5559
    %5561 = vdwg.mxu0
    %5562 = vmatprep.subr.bf16.mxu0 %v3639
    %5563 = vmatpush1.bf16.msra.mxu0 %v3638
    %5564 = vmatprep.subr.bf16.mxu0 %v3643
    %5565 = vmatpush1.bf16.msra.mxu0 %v3642
    %5566 = vmatprep.subr.bf16.mxu0 %v3647
    %5567 = vmatpush1.bf16.msra.mxu0 %v3646
    %5568 = vmatprep.subr.bf16.mxu0 %v3651
    %5569 = vmatpush1.bf16.msra.mxu0 %v3650
    %5570 = vmatprep.subr.bf16.mxu0 %v3655
    %5571 = vmatpush1.bf16.msra.mxu0 %v3654
    %5572 = vmatprep.subr.bf16.mxu0 %v3659
    %5573 = vmatpush1.bf16.msra.mxu0 %v3658
    %5574 = vmatprep.subr.bf16.mxu0 %v3663
    %5575 = vmatpush1.bf16.msra.mxu0 %v3662
    %5576 = vmatprep.subr.bf16.mxu0 %v3667
    %5577 = vmatpush1.bf16.msra.mxu0 %v3666
    %5578 = vmatprep.subr.bf16.mxu0 %v3671
    %5579 = vmatpush1.bf16.msra.mxu0 %v3670
    %5580 = vmatprep.subr.bf16.mxu0 %v3675
    %5581 = vmatpush1.bf16.msra.mxu0 %v3674
    %5582 = vmatprep.subr.bf16.mxu0 %v3679
    %5583 = vmatpush1.bf16.msra.mxu0 %v3678
    %5584 = vmatprep.subr.bf16.mxu0 %v3683
    %5585 = vmatpush1.bf16.msra.mxu0 %v3682
    %5586 = vmatprep.subr.bf16.mxu0 %v3687
    %5587 = vmatpush1.bf16.msra.mxu0 %v3686
    %5588 = vmatprep.subr.bf16.mxu0 %v3691
    %5589 = vmatpush1.bf16.msra.mxu0 %v3690
    %5590 = vmatprep.subr.bf16.mxu0 %v3695
    %5591 = vmatpush1.bf16.msra.mxu0 %v3694
    %5592 = vmatprep.subr.bf16.mxu0 %v3699
    %5593 = vmatpush1.bf16.msra.mxu0 %v3698
    %5594 = vmatprep.mubr.bf16.mxu0 %v147
    %5595 = vmatmul.mubr.bf16.gmra.mrb[0].mxu0 %v146
    %v5596 = vpop.f32.mrb[0].mxu0
    %v5597 = vadd.f32 %v5554, %v5596
    %v5598 = vpop.f32.mrb[0].mxu0
    %v5599 = vadd.f32 %v5556, %v5598
    %v5600 = vpop.f32.mrb[0].mxu0
    %v5601 = vadd.f32 %v5558, %v5600
    %v5602 = vpop.f32.mrb[0].mxu0
    %v5603 = vadd.f32 %v5560, %v5602
    %5604 = vdwg.mxu0
    %5605 = vmatprep.subr.bf16.mxu0 %v3703
    %5606 = vmatpush1.bf16.msra.mxu0 %v3702
    %5607 = vmatprep.subr.bf16.mxu0 %v3707
    %5608 = vmatpush1.bf16.msra.mxu0 %v3706
    %5609 = vmatprep.subr.bf16.mxu0 %v3711
    %5610 = vmatpush1.bf16.msra.mxu0 %v3710
    %5611 = vmatprep.subr.bf16.mxu0 %v3715
    %5612 = vmatpush1.bf16.msra.mxu0 %v3714
    %5613 = vmatprep.subr.bf16.mxu0 %v3719
    %5614 = vmatpush1.bf16.msra.mxu0 %v3718
    %5615 = vmatprep.subr.bf16.mxu0 %v3723
    %5616 = vmatpush1.bf16.msra.mxu0 %v3722
    %5617 = vmatprep.subr.bf16.mxu0 %v3727
    %5618 = vmatpush1.bf16.msra.mxu0 %v3726
    %5619 = vmatprep.subr.bf16.mxu0 %v3731
    %5620 = vmatpush1.bf16.msra.mxu0 %v3730
    %5621 = vmatprep.subr.bf16.mxu0 %v3735
    %5622 = vmatpush1.bf16.msra.mxu0 %v3734
    %5623 = vmatprep.subr.bf16.mxu0 %v3739
    %5624 = vmatpush1.bf16.msra.mxu0 %v3738
    %5625 = vmatprep.subr.bf16.mxu0 %v3743
    %5626 = vmatpush1.bf16.msra.mxu0 %v3742
    %5627 = vmatprep.subr.bf16.mxu0 %v3747
    %5628 = vmatpush1.bf16.msra.mxu0 %v3746
    %5629 = vmatprep.subr.bf16.mxu0 %v3751
    %5630 = vmatpush1.bf16.msra.mxu0 %v3750
    %5631 = vmatprep.subr.bf16.mxu0 %v3755
    %5632 = vmatpush1.bf16.msra.mxu0 %v3754
    %5633 = vmatprep.subr.bf16.mxu0 %v3759
    %5634 = vmatpush1.bf16.msra.mxu0 %v3758
    %5635 = vmatprep.subr.bf16.mxu0 %v3763
    %5636 = vmatpush1.bf16.msra.mxu0 %v3762
    %5637 = vmatprep.mubr.bf16.mxu0 %v149
    %5638 = vmatmul.mubr.bf16.gmra.mrb[0].mxu0 %v148
    %v5639 = vpop.f32.mrb[0].mxu0
    %v5640 = vadd.f32 %v5597, %v5639
    %v5641 = vpop.f32.mrb[0].mxu0
    %v5642 = vadd.f32 %v5599, %v5641
    %v5643 = vpop.f32.mrb[0].mxu0
    %v5644 = vadd.f32 %v5601, %v5643
    %v5645 = vpop.f32.mrb[0].mxu0
    %v5646 = vadd.f32 %v5603, %v5645
    %5647 = vdwg.mxu0
    %5648 = vmatprep.subr.bf16.mxu0 %v3767
    %5649 = vmatpush1.bf16.msra.mxu0 %v3766
    %5650 = vmatprep.subr.bf16.mxu0 %v3771
    %5651 = vmatpush1.bf16.msra.mxu0 %v3770
    %5652 = vmatprep.subr.bf16.mxu0 %v3775
    %5653 = vmatpush1.bf16.msra.mxu0 %v3774
    %5654 = vmatprep.subr.bf16.mxu0 %v3779
    %5655 = vmatpush1.bf16.msra.mxu0 %v3778
    %5656 = vmatprep.subr.bf16.mxu0 %v3783
    %5657 = vmatpush1.bf16.msra.mxu0 %v3782
    %5658 = vmatprep.subr.bf16.mxu0 %v3787
    %5659 = vmatpush1.bf16.msra.mxu0 %v3786
    %5660 = vmatprep.subr.bf16.mxu0 %v3791
    %5661 = vmatpush1.bf16.msra.mxu0 %v3790
    %5662 = vmatprep.subr.bf16.mxu0 %v3795
    %5663 = vmatpush1.bf16.msra.mxu0 %v3794
    %5664 = vmatprep.subr.bf16.mxu0 %v3799
    %5665 = vmatpush1.bf16.msra.mxu0 %v3798
    %5666 = vmatprep.subr.bf16.mxu0 %v3803
    %5667 = vmatpush1.bf16.msra.mxu0 %v3802
    %5668 = vmatprep.subr.bf16.mxu0 %v3807
    %5669 = vmatpush1.bf16.msra.mxu0 %v3806
    %5670 = vmatprep.subr.bf16.mxu0 %v3811
    %5671 = vmatpush1.bf16.msra.mxu0 %v3810
    %5672 = vmatprep.subr.bf16.mxu0 %v3815
    %5673 = vmatpush1.bf16.msra.mxu0 %v3814
    %5674 = vmatprep.subr.bf16.mxu0 %v3819
    %5675 = vmatpush1.bf16.msra.mxu0 %v3818
    %5676 = vmatprep.subr.bf16.mxu0 %v3823
    %5677 = vmatpush1.bf16.msra.mxu0 %v3822
    %5678 = vmatprep.subr.bf16.mxu0 %v3827
    %5679 = vmatpush1.bf16.msra.mxu0 %v3826
    %5680 = vmatprep.mubr.bf16.mxu0 %v151
    %5681 = vmatmul.mubr.bf16.gmra.mrb[0].mxu0 %v150
    %v5682 = vpop.f32.mrb[0].mxu0
    %v5683 = vadd.f32 %v5640, %v5682
    %v5684 = vpop.f32.mrb[0].mxu0
    %v5685 = vadd.f32 %v5642, %v5684
    %v5686 = vpop.f32.mrb[0].mxu0
    %v5687 = vadd.f32 %v5644, %v5686
    %v5688 = vpop.f32.mrb[0].mxu0
    %v5689 = vadd.f32 %v5646, %v5688
    %5690 = vdwg.mxu0
    %5691 = vmatprep.subr.bf16.mxu0 %v3831
    %5692 = vmatpush1.bf16.msra.mxu0 %v3830
    %5693 = vmatprep.subr.bf16.mxu0 %v3835
    %5694 = vmatpush1.bf16.msra.mxu0 %v3834
    %5695 = vmatprep.subr.bf16.mxu0 %v3839
    %5696 = vmatpush1.bf16.msra.mxu0 %v3838
    %5697 = vmatprep.subr.bf16.mxu0 %v3843
    %5698 = vmatpush1.bf16.msra.mxu0 %v3842
    %5699 = vmatprep.subr.bf16.mxu0 %v3847
    %5700 = vmatpush1.bf16.msra.mxu0 %v3846
    %5701 = vmatprep.subr.bf16.mxu0 %v3851
    %5702 = vmatpush1.bf16.msra.mxu0 %v3850
    %5703 = vmatprep.subr.bf16.mxu0 %v3855
    %5704 = vmatpush1.bf16.msra.mxu0 %v3854
    %5705 = vmatprep.subr.bf16.mxu0 %v3859
    %5706 = vmatpush1.bf16.msra.mxu0 %v3858
    %5707 = vmatprep.subr.bf16.mxu0 %v3863
    %5708 = vmatpush1.bf16.msra.mxu0 %v3862
    %5709 = vmatprep.subr.bf16.mxu0 %v3867
    %5710 = vmatpush1.bf16.msra.mxu0 %v3866
    %5711 = vmatprep.subr.bf16.mxu0 %v3871
    %5712 = vmatpush1.bf16.msra.mxu0 %v3870
    %5713 = vmatprep.subr.bf16.mxu0 %v3875
    %5714 = vmatpush1.bf16.msra.mxu0 %v3874
    %5715 = vmatprep.subr.bf16.mxu0 %v3879
    %5716 = vmatpush1.bf16.msra.mxu0 %v3878
    %5717 = vmatprep.subr.bf16.mxu0 %v3883
    %5718 = vmatpush1.bf16.msra.mxu0 %v3882
    %5719 = vmatprep.subr.bf16.mxu0 %v3887
    %5720 = vmatpush1.bf16.msra.mxu0 %v3886
    %5721 = vmatprep.subr.bf16.mxu0 %v3891
    %5722 = vmatpush1.bf16.msra.mxu0 %v3890
    %5723 = vmatprep.mubr.bf16.mxu0 %v153
    %5724 = vmatmul.mubr.bf16.gmra.mrb[0].mxu0 %v152
    %v5725 = vpop.f32.mrb[0].mxu0
    %v5726 = vadd.f32 %v5683, %v5725
    %v5727 = vpop.f32.mrb[0].mxu0
    %v5728 = vadd.f32 %v5685, %v5727
    %v5729 = vpop.f32.mrb[0].mxu0
    %v5730 = vadd.f32 %v5687, %v5729
    %v5731 = vpop.f32.mrb[0].mxu0
    %v5732 = vadd.f32 %v5689, %v5731
    %5733 = vdwg.mxu0
    %5734 = vmatprep.subr.bf16.mxu0 %v3895
    %5735 = vmatpush1.bf16.msra.mxu0 %v3894
    %5736 = vmatprep.subr.bf16.mxu0 %v3899
    %5737 = vmatpush1.bf16.msra.mxu0 %v3898
    %5738 = vmatprep.subr.bf16.mxu0 %v3903
    %5739 = vmatpush1.bf16.msra.mxu0 %v3902
    %5740 = vmatprep.subr.bf16.mxu0 %v3907
    %5741 = vmatpush1.bf16.msra.mxu0 %v3906
    %5742 = vmatprep.subr.bf16.mxu0 %v3911
    %5743 = vmatpush1.bf16.msra.mxu0 %v3910
    %5744 = vmatprep.subr.bf16.mxu0 %v3915
    %5745 = vmatpush1.bf16.msra.mxu0 %v3914
    %5746 = vmatprep.subr.bf16.mxu0 %v3919
    %5747 = vmatpush1.bf16.msra.mxu0 %v3918
    %5748 = vmatprep.subr.bf16.mxu0 %v3923
    %5749 = vmatpush1.bf16.msra.mxu0 %v3922
    %5750 = vmatprep.subr.bf16.mxu0 %v3927
    %5751 = vmatpush1.bf16.msra.mxu0 %v3926
    %5752 = vmatprep.subr.bf16.mxu0 %v3931
    %5753 = vmatpush1.bf16.msra.mxu0 %v3930
    %5754 = vmatprep.subr.bf16.mxu0 %v3935
    %5755 = vmatpush1.bf16.msra.mxu0 %v3934
    %5756 = vmatprep.subr.bf16.mxu0 %v3939
    %5757 = vmatpush1.bf16.msra.mxu0 %v3938
    %5758 = vmatprep.subr.bf16.mxu0 %v3943
    %5759 = vmatpush1.bf16.msra.mxu0 %v3942
    %5760 = vmatprep.subr.bf16.mxu0 %v3947
    %5761 = vmatpush1.bf16.msra.mxu0 %v3946
    %5762 = vmatprep.subr.bf16.mxu0 %v3951
    %5763 = vmatpush1.bf16.msra.mxu0 %v3950
    %5764 = vmatprep.subr.bf16.mxu0 %v3955
    %5765 = vmatpush1.bf16.msra.mxu0 %v3954
    %5766 = vmatprep.mubr.bf16.mxu0 %v155
    %5767 = vmatmul.mubr.bf16.gmra.mrb[0].mxu0 %v154
    %v5768 = vpop.f32.mrb[0].mxu0
    %v5769 = vadd.f32 %v5726, %v5768
    %v5770 = vpop.f32.mrb[0].mxu0
    %v5771 = vadd.f32 %v5728, %v5770
    %v5772 = vpop.f32.mrb[0].mxu0
    %v5773 = vadd.f32 %v5730, %v5772
    %v5774 = vpop.f32.mrb[0].mxu0
    %v5775 = vadd.f32 %v5732, %v5774
    %5776 = vdwg.mxu0
    %5777 = vmatprep.subr.bf16.mxu0 %v3959
    %5778 = vmatpush1.bf16.msra.mxu0 %v3958
    %5779 = vmatprep.subr.bf16.mxu0 %v3963
    %5780 = vmatpush1.bf16.msra.mxu0 %v3962
    %5781 = vmatprep.subr.bf16.mxu0 %v3967
    %5782 = vmatpush1.bf16.msra.mxu0 %v3966
    %5783 = vmatprep.subr.bf16.mxu0 %v3971
    %5784 = vmatpush1.bf16.msra.mxu0 %v3970
    %5785 = vmatprep.subr.bf16.mxu0 %v3975
    %5786 = vmatpush1.bf16.msra.mxu0 %v3974
    %5787 = vmatprep.subr.bf16.mxu0 %v3979
    %5788 = vmatpush1.bf16.msra.mxu0 %v3978
    %5789 = vmatprep.subr.bf16.mxu0 %v3983
    %5790 = vmatpush1.bf16.msra.mxu0 %v3982
    %5791 = vmatprep.subr.bf16.mxu0 %v3987
    %5792 = vmatpush1.bf16.msra.mxu0 %v3986
    %5793 = vmatprep.subr.bf16.mxu0 %v3991
    %5794 = vmatpush1.bf16.msra.mxu0 %v3990
    %5795 = vmatprep.subr.bf16.mxu0 %v3995
    %5796 = vmatpush1.bf16.msra.mxu0 %v3994
    %5797 = vmatprep.subr.bf16.mxu0 %v3999
    %5798 = vmatpush1.bf16.msra.mxu0 %v3998
    %5799 = vmatprep.subr.bf16.mxu0 %v4003
    %5800 = vmatpush1.bf16.msra.mxu0 %v4002
    %5801 = vmatprep.subr.bf16.mxu0 %v4007
    %5802 = vmatpush1.bf16.msra.mxu0 %v4006
    %5803 = vmatprep.subr.bf16.mxu0 %v4011
    %5804 = vmatpush1.bf16.msra.mxu0 %v4010
    %5805 = vmatprep.subr.bf16.mxu0 %v4015
    %5806 = vmatpush1.bf16.msra.mxu0 %v4014
    %5807 = vmatprep.subr.bf16.mxu0 %v4019
    %5808 = vmatpush1.bf16.msra.mxu0 %v4018
    %5809 = vmatprep.mubr.bf16.mxu0 %v157
    %5810 = vmatmul.mubr.bf16.gmra.mrb[0].mxu0 %v156
    %v5811 = vpop.f32.mrb[0].mxu0
    %v5812 = vadd.f32 %v5769, %v5811
    %v5813 = vpop.f32.mrb[0].mxu0
    %v5814 = vadd.f32 %v5771, %v5813
    %v5815 = vpop.f32.mrb[0].mxu0
    %v5816 = vadd.f32 %v5773, %v5815
    %v5817 = vpop.f32.mrb[0].mxu0
    %v5818 = vadd.f32 %v5775, %v5817
    %5819 = vdwg.mxu0
    %v5820 = vmax.f32 %v5296, 0.0
    %v5821 = vmax.f32 %v5298, 0.0
    %v5822 = vmax.f32 %v5812, 0.0
    %v5823 = vmax.f32 %v5814, 0.0
    %v5824 = vmax.f32 %v5300, 0.0
    %v5825 = vmax.f32 %v5302, 0.0
    %v5826 = vmax.f32 %v5816, 0.0
    %v5827 = vmax.f32 %v5818, 0.0
    %v5828 = vpack.c.bf16 %v5824, %v5820
    %v5829 = vpack.c.bf16 %v5825, %v5821
    %v5830 = vpack.c.bf16 %v5826, %v5822
    %v5831 = vpack.c.bf16 %v5827, %v5823
    %v5832 = vld [vmem:[#allocation8] sm:$0xf]
    %v5833 = vld [vmem:[#allocation8 + $0x4] sm:$0xf]
    %v5834 = vld [vmem:[#allocation8 + $0x8] sm:$0xf]
    %v5835 = vld [vmem:[#allocation8 + $0xc] sm:$0xf]
    %v5836 = vld [vmem:[#allocation8 + $0x10] sm:$0xf]
    %v5837 = vld [vmem:[#allocation8 + $0x14] sm:$0xf]
    %v5838 = vld [vmem:[#allocation8 + $0x18] sm:$0xf]
    %v5839 = vld [vmem:[#allocation8 + $0x1c] sm:$0xf]
    %v5840 = vld [vmem:[#allocation8 + $0x20] sm:$0xf]
    %v5841 = vld [vmem:[#allocation8 + $0x24] sm:$0xf]
    %v5842 = vld [vmem:[#allocation8 + $0x28] sm:$0xf]
    %v5843 = vld [vmem:[#allocation8 + $0x2c] sm:$0xf]
    %v5844 = vld [vmem:[#allocation8 + $0x30] sm:$0xf]
    %v5845 = vld [vmem:[#allocation8 + $0x34] sm:$0xf]
    %v5846 = vld [vmem:[#allocation8 + $0x38] sm:$0xf]
    %v5847 = vld [vmem:[#allocation8 + $0x3c] sm:$0xf]
    %v5848 = vld [vmem:[#allocation8 + $0x40] sm:$0xf]
    %v5849 = vld [vmem:[#allocation8 + $0x44] sm:$0xf]
    %v5850 = vld [vmem:[#allocation8 + $0x48] sm:$0xf]
    %v5851 = vld [vmem:[#allocation8 + $0x4c] sm:$0xf]
    %v5852 = vld [vmem:[#allocation8 + $0x50] sm:$0xf]
    %v5853 = vld [vmem:[#allocation8 + $0x54] sm:$0xf]
    %v5854 = vld [vmem:[#allocation8 + $0x58] sm:$0xf]
    %v5855 = vld [vmem:[#allocation8 + $0x5c] sm:$0xf]
    %v5856 = vld [vmem:[#allocation8 + $0x60] sm:$0xf]
    %v5857 = vld [vmem:[#allocation8 + $0x64] sm:$0xf]
    %v5858 = vld [vmem:[#allocation8 + $0x68] sm:$0xf]
    %v5859 = vld [vmem:[#allocation8 + $0x6c] sm:$0xf]
    %v5860 = vld [vmem:[#allocation8 + $0x70] sm:$0xf]
    %v5861 = vld [vmem:[#allocation8 + $0x74] sm:$0xf]
    %v5862 = vld [vmem:[#allocation8 + $0x78] sm:$0xf]
    %v5863 = vld [vmem:[#allocation8 + $0x7c] sm:$0xf]
    %v5864 = vld [vmem:[#allocation8 + $0x80] sm:$0xf]
    %v5865 = vld [vmem:[#allocation8 + $0x84] sm:$0xf]
    %v5866 = vld [vmem:[#allocation8 + $0x88] sm:$0xf]
    %v5867 = vld [vmem:[#allocation8 + $0x8c] sm:$0xf]
    %v5868 = vld [vmem:[#allocation8 + $0x90] sm:$0xf]
    %v5869 = vld [vmem:[#allocation8 + $0x94] sm:$0xf]
    %v5870 = vld [vmem:[#allocation8 + $0x98] sm:$0xf]
    %v5871 = vld [vmem:[#allocation8 + $0x9c] sm:$0xf]
    %v5872 = vld [vmem:[#allocation8 + $0xa0] sm:$0xf]
    %v5873 = vld [vmem:[#allocation8 + $0xa4] sm:$0xf]
    %v5874 = vld [vmem:[#allocation8 + $0xa8] sm:$0xf]
    %v5875 = vld [vmem:[#allocation8 + $0xac] sm:$0xf]
    %v5876 = vld [vmem:[#allocation8 + $0xb0] sm:$0xf]
    %v5877 = vld [vmem:[#allocation8 + $0xb4] sm:$0xf]
    %v5878 = vld [vmem:[#allocation8 + $0xb8] sm:$0xf]
    %v5879 = vld [vmem:[#allocation8 + $0xbc] sm:$0xf]
    %v5880 = vld [vmem:[#allocation8 + $0xc0] sm:$0xf]
    %v5881 = vld [vmem:[#allocation8 + $0xc4] sm:$0xf]
    %v5882 = vld [vmem:[#allocation8 + $0xc8] sm:$0xf]
    %v5883 = vld [vmem:[#allocation8 + $0xcc] sm:$0xf]
    %v5884 = vld [vmem:[#allocation8 + $0xd0] sm:$0xf]
    %v5885 = vld [vmem:[#allocation8 + $0xd4] sm:$0xf]
    %v5886 = vld [vmem:[#allocation8 + $0xd8] sm:$0xf]
    %v5887 = vld [vmem:[#allocation8 + $0xdc] sm:$0xf]
    %v5888 = vld [vmem:[#allocation8 + $0xe0] sm:$0xf]
    %v5889 = vld [vmem:[#allocation8 + $0xe4] sm:$0xf]
    %v5890 = vld [vmem:[#allocation8 + $0xe8] sm:$0xf]
    %v5891 = vld [vmem:[#allocation8 + $0xec] sm:$0xf]
    %v5892 = vld [vmem:[#allocation8 + $0xf0] sm:$0xf]
    %v5893 = vld [vmem:[#allocation8 + $0xf4] sm:$0xf]
    %v5894 = vld [vmem:[#allocation8 + $0xf8] sm:$0xf]
    %v5895 = vld [vmem:[#allocation8 + $0xfc] sm:$0xf]
    %v5896 = vld [vmem:[#allocation10] sm:$0x1]
    %v5898 = vlaneseq
    %v5899 = vshrl.u32 %v5898, 7
    %v5900 = vsub.s32 0, %v5899
    %v5901 = vrot.slane %v5896, %v5900
    %v5967 = vunpack.c.l.b16 %v5832
    %v5968 = vunpack.c.l.b16 %v5833
    %v5969 = vunpack.c.l.b16 %v5834
    %v5970 = vunpack.c.l.b16 %v5835
    %v5971 = vunpack.c.l.b16 %v5836
    %v5972 = vunpack.c.l.b16 %v5837
    %v5973 = vunpack.c.l.b16 %v5838
    %v5974 = vunpack.c.l.b16 %v5839
    %v5975 = vunpack.c.l.b16 %v5840
    %v5976 = vunpack.c.l.b16 %v5841
    %v5977 = vunpack.c.l.b16 %v5842
    %v5978 = vunpack.c.l.b16 %v5843
    %v5979 = vunpack.c.l.b16 %v5844
    %v5980 = vunpack.c.l.b16 %v5845
    %v5981 = vunpack.c.l.b16 %v5846
    %v5982 = vunpack.c.l.b16 %v5847
    %v5983 = vunpack.c.l.b16 %v5848
    %v5984 = vunpack.c.l.b16 %v5849
    %v5985 = vunpack.c.l.b16 %v5850
    %v5986 = vunpack.c.l.b16 %v5851
    %v5987 = vunpack.c.l.b16 %v5852
    %v5988 = vunpack.c.l.b16 %v5853
    %v5989 = vunpack.c.l.b16 %v5854
    %v5990 = vunpack.c.l.b16 %v5855
    %v5991 = vunpack.c.l.b16 %v5856
    %v5992 = vunpack.c.l.b16 %v5857
    %v5993 = vunpack.c.l.b16 %v5858
    %v5994 = vunpack.c.l.b16 %v5859
    %v5995 = vunpack.c.l.b16 %v5860
    %v5996 = vunpack.c.l.b16 %v5861
    %v5997 = vunpack.c.l.b16 %v5862
    %v5998 = vunpack.c.l.b16 %v5863
    %v5999 = vunpack.c.l.b16 %v5864
    %v6000 = vunpack.c.l.b16 %v5865
    %v6001 = vunpack.c.l.b16 %v5866
    %v6002 = vunpack.c.l.b16 %v5867
    %v6003 = vunpack.c.l.b16 %v5868
    %v6004 = vunpack.c.l.b16 %v5869
    %v6005 = vunpack.c.l.b16 %v5870
    %v6006 = vunpack.c.l.b16 %v5871
    %v6007 = vunpack.c.l.b16 %v5872
    %v6008 = vunpack.c.l.b16 %v5873
    %v6009 = vunpack.c.l.b16 %v5874
    %v6010 = vunpack.c.l.b16 %v5875
    %v6011 = vunpack.c.l.b16 %v5876
    %v6012 = vunpack.c.l.b16 %v5877
    %v6013 = vunpack.c.l.b16 %v5878
    %v6014 = vunpack.c.l.b16 %v5879
    %v6015 = vunpack.c.l.b16 %v5880
    %v6016 = vunpack.c.l.b16 %v5881
    %v6017 = vunpack.c.l.b16 %v5882
    %v6018 = vunpack.c.l.b16 %v5883
    %v6019 = vunpack.c.l.b16 %v5884
    %v6020 = vunpack.c.l.b16 %v5885
    %v6021 = vunpack.c.l.b16 %v5886
    %v6022 = vunpack.c.l.b16 %v5887
    %v6023 = vunpack.c.l.b16 %v5888
    %v6024 = vunpack.c.l.b16 %v5889
    %v6025 = vunpack.c.l.b16 %v5890
    %v6026 = vunpack.c.l.b16 %v5891
    %v6027 = vunpack.c.l.b16 %v5892
    %v6028 = vunpack.c.l.b16 %v5893
    %v6029 = vunpack.c.l.b16 %v5894
    %v6030 = vunpack.c.l.b16 %v5895
    %v6031 = vpack.c.b16 %v5968, %v5967
    %v6032 = vpack.c.b16 %v5970, %v5969
    %v6033 = vpack.c.b16 %v5972, %v5971
    %v6034 = vpack.c.b16 %v5974, %v5973
    %v6035 = vpack.c.b16 %v5976, %v5975
    %v6036 = vpack.c.b16 %v5978, %v5977
    %v6037 = vpack.c.b16 %v5980, %v5979
    %v6038 = vpack.c.b16 %v5982, %v5981
    %v6039 = vpack.c.b16 %v5984, %v5983
    %v6040 = vpack.c.b16 %v5986, %v5985
    %v6041 = vpack.c.b16 %v5988, %v5987
    %v6042 = vpack.c.b16 %v5990, %v5989
    %v6043 = vpack.c.b16 %v5992, %v5991
    %v6044 = vpack.c.b16 %v5994, %v5993
    %v6045 = vpack.c.b16 %v5996, %v5995
    %v6046 = vpack.c.b16 %v5998, %v5997
    %v6047 = vpack.c.b16 %v6000, %v5999
    %v6048 = vpack.c.b16 %v6002, %v6001
    %v6049 = vpack.c.b16 %v6004, %v6003
    %v6050 = vpack.c.b16 %v6006, %v6005
    %v6051 = vpack.c.b16 %v6008, %v6007
    %v6052 = vpack.c.b16 %v6010, %v6009
    %v6053 = vpack.c.b16 %v6012, %v6011
    %v6054 = vpack.c.b16 %v6014, %v6013
    %v6055 = vpack.c.b16 %v6016, %v6015
    %v6056 = vpack.c.b16 %v6018, %v6017
    %v6057 = vpack.c.b16 %v6020, %v6019
    %v6058 = vpack.c.b16 %v6022, %v6021
    %v6059 = vpack.c.b16 %v6024, %v6023
    %v6060 = vpack.c.b16 %v6026, %v6025
    %v6061 = vpack.c.b16 %v6028, %v6027
    %v6062 = vpack.c.b16 %v6030, %v6029
    %6095 = vmatprep.subr.bf16.mxu0 0
    %6096 = vmatpush1.bf16.msra.mxu0 %v6031
    %6097 = vmatprep.subr.bf16.mxu0 0
    %6098 = vmatpush1.bf16.msra.mxu0 %v6032
    %6099 = vmatprep.subr.bf16.mxu0 0
    %6100 = vmatpush1.bf16.msra.mxu0 %v6033
    %6101 = vmatprep.subr.bf16.mxu0 0
    %6102 = vmatpush1.bf16.msra.mxu0 %v6034
    %6103 = vmatprep.subr.bf16.mxu0 0
    %6104 = vmatpush1.bf16.msra.mxu0 %v6035
    %6105 = vmatprep.subr.bf16.mxu0 0
    %6106 = vmatpush1.bf16.msra.mxu0 %v6036
    %6107 = vmatprep.subr.bf16.mxu0 0
    %6108 = vmatpush1.bf16.msra.mxu0 %v6037
    %6109 = vmatprep.subr.bf16.mxu0 0
    %6110 = vmatpush1.bf16.msra.mxu0 %v6038
    %6111 = vmatprep.subr.bf16.mxu0 0
    %6112 = vmatpush1.bf16.msra.mxu0 %v6039
    %6113 = vmatprep.subr.bf16.mxu0 0
    %6114 = vmatpush1.bf16.msra.mxu0 %v6040
    %6115 = vmatprep.subr.bf16.mxu0 0
    %6116 = vmatpush1.bf16.msra.mxu0 %v6041
    %6117 = vmatprep.subr.bf16.mxu0 0
    %6118 = vmatpush1.bf16.msra.mxu0 %v6042
    %6119 = vmatprep.subr.bf16.mxu0 0
    %6120 = vmatpush1.bf16.msra.mxu0 %v6043
    %6121 = vmatprep.subr.bf16.mxu0 0
    %6122 = vmatpush1.bf16.msra.mxu0 %v6044
    %6123 = vmatprep.subr.bf16.mxu0 0
    %6124 = vmatpush1.bf16.msra.mxu0 %v6045
    %6125 = vmatprep.subr.bf16.mxu0 0
    %6126 = vmatpush1.bf16.msra.mxu0 %v6046
    %6127 = vmatprep.mubr.bf16.mxu0 %v5829
    %6128 = vmatmul.mubr.bf16.gmra.mrb[0].mxu0 %v5828
    %v6129 = vpop.f32.mrb[0].mxu0
    %v6130 = vadd.f32 %v5901, %v6129
    %v6131 = vpop.f32.mrb[0].mxu0
    %v6132 = vpop.f32.mrb[0].mxu0
    %v6133 = vadd.f32 %v5901, %v6132
    %v6134 = vpop.f32.mrb[0].mxu0
    %6135 = vdwg.mxu0
    %6136 = vmatprep.subr.bf16.mxu0 0
    %6137 = vmatpush1.bf16.msra.mxu0 %v6047
    %6138 = vmatprep.subr.bf16.mxu0 0
    %6139 = vmatpush1.bf16.msra.mxu0 %v6048
    %6140 = vmatprep.subr.bf16.mxu0 0
    %6141 = vmatpush1.bf16.msra.mxu0 %v6049
    %6142 = vmatprep.subr.bf16.mxu0 0
    %6143 = vmatpush1.bf16.msra.mxu0 %v6050
    %6144 = vmatprep.subr.bf16.mxu0 0
    %6145 = vmatpush1.bf16.msra.mxu0 %v6051
    %6146 = vmatprep.subr.bf16.mxu0 0
    %6147 = vmatpush1.bf16.msra.mxu0 %v6052
    %6148 = vmatprep.subr.bf16.mxu0 0
    %6149 = vmatpush1.bf16.msra.mxu0 %v6053
    %6150 = vmatprep.subr.bf16.mxu0 0
    %6151 = vmatpush1.bf16.msra.mxu0 %v6054
    %6152 = vmatprep.subr.bf16.mxu0 0
    %6153 = vmatpush1.bf16.msra.mxu0 %v6055
    %6154 = vmatprep.subr.bf16.mxu0 0
    %6155 = vmatpush1.bf16.msra.mxu0 %v6056
    %6156 = vmatprep.subr.bf16.mxu0 0
    %6157 = vmatpush1.bf16.msra.mxu0 %v6057
    %6158 = vmatprep.subr.bf16.mxu0 0
    %6159 = vmatpush1.bf16.msra.mxu0 %v6058
    %6160 = vmatprep.subr.bf16.mxu0 0
    %6161 = vmatpush1.bf16.msra.mxu0 %v6059
    %6162 = vmatprep.subr.bf16.mxu0 0
    %6163 = vmatpush1.bf16.msra.mxu0 %v6060
    %6164 = vmatprep.subr.bf16.mxu0 0
    %6165 = vmatpush1.bf16.msra.mxu0 %v6061
    %6166 = vmatprep.subr.bf16.mxu0 0
    %6167 = vmatpush1.bf16.msra.mxu0 %v6062
    %6168 = vmatprep.mubr.bf16.mxu0 %v5831
    %6169 = vmatmul.mubr.bf16.gmra.mrb[0].mxu0 %v5830
    %v6170 = vpop.f32.mrb[0].mxu0
    %v6171 = vadd.f32 %v6130, %v6170
    %v6172 = vpop.f32.mrb[0].mxu0
    %v6173 = vpop.f32.mrb[0].mxu0
    %v6174 = vadd.f32 %v6133, %v6173
    %v6175 = vpop.f32.mrb[0].mxu0
    %6176 = vdwg.mxu0
    %6177 = vst [vmem:[#allocation11] sm:$0xff] %v6171
    %6178 = vst [vmem:[#allocation11 + $0x8] sm:$0xff] %v6174
    // Predicated region
    $region42: #{tpu_custom_call.1} parent=1 // pred_check
      _
    $region43: #{tpu_custom_call.1} parent=1 // pred_check_branch
      %6180 = sbr.rel (0) target = $region45
    $region44: #{tpu_custom_call.1} parent=1 // pred_region
      %s6182 = ssub.s32 256, 256
      %6183 = vsyncadd [#allocation4], %s6182
      %s6184 = sshll.u32 [#allocation11], 4
      %s6185 = int_to_ptr.vmem [resolvable:$true] %s6184
      %6190 = dma.vmem_to_hbm [thread:$0]  %s6185, 256, %s5, [#allocation4], 128, 128, 8
    $region45: #{tpu_custom_call.1} parent=1 // pred_fallthru
      _
    // Predicated region
    $region46: #{tpu_custom_call.1} parent=1 // pred_check
      _
    $region47: #{tpu_custom_call.1} parent=1 // pred_check_branch
      %6192 = sbr.rel (0) target = $region49
    $region48: #{tpu_custom_call.1} parent=1 // pred_region
      %6193 = dma.done [#allocation4], 256
    $region49: #{tpu_custom_call.1} parent=1 // pred_fallthru
      _
    %6194 = vsyncpa [#allocation3], 1
    %6195 = vsyncpa [#allocation6], 1
    %6196 = vsyncpa [#allocation9], 1
    %6197 = vsyncpa [#allocation4], 1

</llo_original>
